<compile_context>
chip_gen: v6e
topology: v6e:2x2x1
jax: 0.10.0
libtpu: 0.0.40
codegen_flags: <defaults>
</compile_context>

<pallas_src>
import jax
import jax.numpy as jnp
from jax import lax
from jax.experimental import pallas as pl
from jax.experimental.pallas import tpu as pltpu

LN_EPS = 1e-5                      # torch nn.LayerNorm default
_INV_SQRT2 = 0.7071067811865476    # hoisted GELU constant


def _layernorm(v, w, b):
    mu = jnp.mean(v, axis=-1, keepdims=True)
    var = jnp.mean((v - mu) ** 2, axis=-1, keepdims=True)
    return (v - mu) * lax.rsqrt(var + LN_EPS) * w + b


def _softmax_last(s):
    m = jnp.max(s, axis=-1, keepdims=True)
    e = jnp.exp(s - m)
    # EUP approximate reciprocal instead of a VALU divide.
    return e * pl.reciprocal(jnp.sum(e, axis=-1, keepdims=True), approx=True)


def _gelu_exact(v):
    # matches F.gelu(approximate='none'): 0.5 * x * (1 + erf(x / sqrt(2)))
    return 0.5 * v * (1.0 + lax.erf(v * _INV_SQRT2))


def encoder_kernel(x_ref,
                   ln1w_ref, ln1b_ref,
                   wq_ref, bq_ref, aw_ref,
                   wo_ref, bo_ref,
                   ln2w_ref, ln2b_ref,
                   w1_ref, b1_ref, w2_ref, b2_ref,
                   nw_ref, nb_ref,
                   out_ref):
    """All L Optimized_MHSA_Blocks + final LayerNorm for one batch element."""
    L, H, D, hd = wq_ref.shape
    S, _ = x_ref.shape
    f32 = jnp.float32

    x = x_ref[...]                                              # (S, D), stays resident

    for l in range(L):                                          # unrolled layer loop
        # ----- ln_1 -----
        xn = _layernorm(x, ln1w_ref[l], ln1b_ref[l])

        # ----- Optimized_MHSA (pseudo-MHSA), head axis as dot_general batch dim -----
        # in_project, directly in head-batched layout: hh[h,s,d] = xn @ WqH[h] + bqH[h]
        xb = jnp.broadcast_to(xn[None], (H, S, D))
        hh = lax.dot_general(xb, wq_ref[l],
                             (((2,), (1,)), ((0,), (0,))),
                             preferred_element_type=f32) + bq_ref[l]       # (H,S,hd)
        # scores = (hh @ Ah) @ hh^T / hd   (1/hd already folded into aw host-side)
        a = lax.dot_general(hh, aw_ref[l],
                            (((2,), (1,)), ((0,), (0,))),
                            preferred_element_type=f32)                    # (H,S,hd)
        sc = lax.dot_general(a, hh,
                             (((2,), (2,)), ((0,), (0,))),
                             preferred_element_type=f32)                   # (H,S,S)
        p = _softmax_last(sc)                                              # attn probs
        # TODO(synk): layer.attn_probs (detach().cpu().numpy() stashed in
        # Encoder.attentions) is a host-side visualization hook, not reproduced.
        ao = lax.dot_general(p, hh,
                             (((2,), (1,)), ((0,), (0,))),
                             preferred_element_type=f32)                   # (H,S,hd)
        # out_project folded per head (avoids the lane concatenate), then head-sum.
        per_head = lax.dot_general(ao, wo_ref[l],
                                   (((2,), (1,)), ((0,), (0,))),
                                   preferred_element_type=f32)             # (H,S,D)
        attn = jnp.sum(per_head, axis=0) + bo_ref[l]                       # (S,D)

        # residual 1 (attn/block dropouts are identity in eval mode)
        x = attn + x

        # ----- ln_2 + MLP (Linear -> gelu -> Linear), residual 2 -----
        y = _layernorm(x, ln2w_ref[l], ln2b_ref[l])
        y = jnp.dot(y, w1_ref[l], preferred_element_type=f32) + b1_ref[l]
        y = _gelu_exact(y)
        y = jnp.dot(y, w2_ref[l], preferred_element_type=f32) + b2_ref[l]
        x = x + y

    # Encoder final LayerNorm, single HBM store.
    out_ref[...] = _layernorm(x, nw_ref[...], nb_ref[...])


_PARAM_ORDER = ('ln1w', 'ln1b', 'wq', 'bq', 'aw', 'wo', 'bo',
                'ln2w', 'ln2b', 'w1', 'b1', 'w2', 'b2', 'norm_w', 'norm_b')


def prepare_params(layer_params, norm_w, norm_b, num_heads, head_dim):
    """One-time host-side prep: stack per-layer params along a layer axis and
    pre-reshape projections into head-batched layouts; fold 1/head_dim into aw."""
    L = len(layer_params)
    D = layer_params[0]['wq'].shape[0]
    H, hd = num_heads, head_dim
    st = lambda k: jnp.stack([jnp.asarray(p[k], jnp.float32) for p in layer_params])
    return dict(
        ln1w=st('ln1w').reshape(L, 1, D),
        ln1b=st('ln1b').reshape(L, 1, D),
        # in_project weight given as (in, out); regroup output cols head-major.
        wq=st('wq').reshape(L, D, H, hd).transpose(0, 2, 1, 3),     # (L,H,D,hd)
        bq=st('bq').reshape(L, H, 1, hd),
        # fold the 1/head_dim score scale into attn_weight (scores linear in it).
        aw=st('aw') * (1.0 / hd),                                   # (L,H,hd,hd)
        # out_project weight (in, out); row-group h corresponds to head h.
        wo=st('wo').reshape(L, H, hd, D),                           # (L,H,hd,D)
        bo=st('bo').reshape(L, 1, D),
        ln2w=st('ln2w').reshape(L, 1, D),
        ln2b=st('ln2b').reshape(L, 1, D),
        w1=st('w1'),                                                # (L,D,M)
        b1=st('b1').reshape(L, 1, -1),
        w2=st('w2'),                                                # (L,M,D)
        b2=st('b2').reshape(L, 1, D),
        norm_w=jnp.asarray(norm_w, jnp.float32).reshape(1, D),
        norm_b=jnp.asarray(norm_b, jnp.float32).reshape(1, D),
    )


def encoder_forward(x, params):
    """Encoder.forward: dropout (identity, eval) -> L blocks -> final LayerNorm,
    as one fused pallas_call gridded over batch."""
    B, S, D = x.shape
    L, H, _, hd = params['wq'].shape
    M = params['w1'].shape[-1]

    def io_spec():
        return pl.BlockSpec((pl.Squeezed(), S, D), lambda b: (b, 0, 0))

    def const_spec(arr):
        zeros = (0,) * arr.ndim
        return pl.BlockSpec(arr.shape, lambda b, _z=zeros: _z)

    ordered = [params[k] for k in _PARAM_ORDER]

    # Advisory cost estimate for XLA scheduling around the custom call.
    mm_flops = (2 * S * D * D            # in_project
                + 2 * H * S * hd * hd    # x @ A
                + 4 * H * S * S * hd     # scores + probs @ x
                + 2 * H * S * hd * D     # out_project
                + 4 * S * D * M)         # MLP
    flops = int(B * L * (mm_flops + 12 * S * D))
    transcendentals = int(B * (L * (H * S * S + S * M + 2 * S) + S))
    bytes_accessed = int(2 * x.size * x.dtype.itemsize
                         + sum(a.size * a.dtype.itemsize for a in ordered))

    return pl.pallas_call(
        encoder_kernel,
        out_shape=jax.ShapeDtypeStruct((B, S, D), jnp.float32),
        grid=(B,),
        in_specs=[io_spec()] + [const_spec(a) for a in ordered],
        out_specs=io_spec(),
        compiler_params=pltpu.CompilerParams(dimension_semantics=("parallel",)),
        cost_estimate=pl.CostEstimate(flops=flops,
                                      transcendentals=transcendentals,
                                      bytes_accessed=bytes_accessed),
    )(x, *ordered)


def encoder_reference(x, layer_params, norm_w, norm_b, num_heads, head_dim):
    """Pure-JAX mirror of the PyTorch module (eval mode) for validation."""
    def ln(v, w, b):
        mu = v.mean(-1, keepdims=True)
        var = ((v - mu) ** 2).mean(-1, keepdims=True)
        return (v - mu) / jnp.sqrt(var + LN_EPS) * w + b

    B, S, D = x.shape
    for p in layer_params:
        xn = ln(x, p['ln1w'], p['ln1b'])
        h = xn @ p['wq'] + p['bq']
        h = h.reshape(B, S, num_heads, head_dim).transpose(0, 2, 1, 3)
        aw = jnp.einsum('bhsd,hde->bhse', h, p['aw'])
        sc = jnp.einsum('bhse,bhre->bhsr', aw, h) / head_dim
        prob = jax.nn.softmax(sc, axis=-1)
        ao = jnp.einsum('bhsr,bhrd->bhsd', prob, h)
        ao = ao.transpose(0, 2, 1, 3).reshape(B, S, D)
        x2 = ao @ p['wo'] + p['bo'] + x
        y = ln(x2, p['ln2w'], p['ln2b'])
        y = y @ p['w1'] + p['b1']
        y = 0.5 * y * (1.0 + lax.erf(y * _INV_SQRT2))
        y = y @ p['w2'] + p['b2']
        x = x2 + y
    return ln(x, norm_w, norm_b)


if __name__ == "__main__":
    # Small config consistent with the module:
    # encoder_model_dim=32, num_heads=4, encoder_mlp_dim=64, encoder_layers=2,
    # model='optimized_mhsa', batch=2, seq_len=8.
    B, S, D, H, M, L = 2, 8, 32, 4, 64, 2
    hd = D // H

    key = jax.random.PRNGKey(0)
    kx, *lkeys = jax.random.split(key, 1 + L)
    x = jax.random.normal(kx, (B, S, D), dtype=jnp.float32)

    layer_params = []
    for i in range(L):
        k = jax.random.split(lkeys[i], 8)
        layer_params.append(dict(
            ln1w=jnp.ones((D,), jnp.float32), ln1b=jnp.zeros((D,), jnp.float32),
            # Optimized_MHSA.in_project, pre-transposed to (in, out)
            wq=jax.random.normal(k[0], (D, D), jnp.float32) * 0.02,
            bq=jnp.zeros((D,), jnp.float32),
            # Optimized_MHSA.attn_weight ~ Normal(0, 0.02)
            aw=jax.random.normal(k[1], (H, hd, hd), jnp.float32) * 0.02,
            # Optimized_MHSA.out_project, pre-transposed to (in, out)
            wo=jax.random.normal(k[2], (D, D), jnp.float32) * 0.02,
            bo=jnp.zeros((D,), jnp.float32),
            ln2w=jnp.ones((D,), jnp.float32), ln2b=jnp.zeros((D,), jnp.float32),
            # Mlp: xavier-ish weights, biases ~ Normal(0, 1e-6)
            w1=jax.random.normal(k[3], (D, M), jnp.float32) * (D ** -0.5),
            b1=jax.random.normal(k[4], (M,), jnp.float32) * 1e-6,
            w2=jax.random.normal(k[5], (M, D), jnp.float32) * (M ** -0.5),
            b2=jax.random.normal(k[6], (D,), jnp.float32) * 1e-6,
        ))

    norm_w = jnp.ones((D,), jnp.float32)
    norm_b = jnp.zeros((D,), jnp.float32)

    params = prepare_params(layer_params, norm_w, norm_b, H, hd)
    out = jax.block_until_ready(encoder_forward(x, params))

    assert out.shape == (B, S, D) and out.dtype == jnp.float32
    assert bool(jnp.all(jnp.isfinite(out)))

    ref = encoder_reference(x, layer_params, norm_w, norm_b, H, hd)
    max_err = float(jnp.max(jnp.abs(out - ref)))
    assert max_err < 5e-2, f"mismatch vs reference: max abs err {max_err}"

    print("KERNEL_OK")
</pallas_src>

<mosaic_0001>
module attributes {stable_mosaic.version = 11 : i64} {
  func.func @encoder_kernel(%arg0: i32, %arg1: memref<1x8x32xf32, #tpu.memory_space<vmem>>, %arg2: memref<2x1x32xf32, #tpu.memory_space<vmem>>, %arg3: memref<2x1x32xf32, #tpu.memory_space<vmem>>, %arg4: memref<2x4x32x8xf32, #tpu.memory_space<vmem>>, %arg5: memref<2x4x1x8xf32, #tpu.memory_space<vmem>>, %arg6: memref<2x4x8x8xf32, #tpu.memory_space<vmem>>, %arg7: memref<2x4x8x32xf32, #tpu.memory_space<vmem>>, %arg8: memref<2x1x32xf32, #tpu.memory_space<vmem>>, %arg9: memref<2x1x32xf32, #tpu.memory_space<vmem>>, %arg10: memref<2x1x32xf32, #tpu.memory_space<vmem>>, %arg11: memref<2x32x64xf32, #tpu.memory_space<vmem>>, %arg12: memref<2x1x64xf32, #tpu.memory_space<vmem>>, %arg13: memref<2x64x32xf32, #tpu.memory_space<vmem>>, %arg14: memref<2x1x32xf32, #tpu.memory_space<vmem>>, %arg15: memref<1x32xf32, #tpu.memory_space<vmem>>, %arg16: memref<1x32xf32, #tpu.memory_space<vmem>>, %arg17: memref<1x8x32xf32, #tpu.memory_space<vmem>>) attributes {dimension_semantics = [#tpu.dimension_semantics<parallel>], iteration_bounds = array<i64: 2>, scalar_prefetch = 0 : i64, scratch_operands = 0 : i64, tpu.core_type = #tpu.core_type<tc>, window_params = [{transform_indices = @transform_0, window_bounds = array<i64: 1, 8, 32>}, {pipeline_mode = #tpu.pipeline_mode<synchronous>, transform_indices = @transform_1, window_bounds = array<i64: 2, 1, 32>}, {pipeline_mode = #tpu.pipeline_mode<synchronous>, transform_indices = @transform_2, window_bounds = array<i64: 2, 1, 32>}, {pipeline_mode = #tpu.pipeline_mode<synchronous>, transform_indices = @transform_3, window_bounds = array<i64: 2, 4, 32, 8>}, {pipeline_mode = #tpu.pipeline_mode<synchronous>, transform_indices = @transform_4, window_bounds = array<i64: 2, 4, 1, 8>}, {pipeline_mode = #tpu.pipeline_mode<synchronous>, transform_indices = @transform_5, window_bounds = array<i64: 2, 4, 8, 8>}, {pipeline_mode = #tpu.pipeline_mode<synchronous>, transform_indices = @transform_6, window_bounds = array<i64: 2, 4, 8, 32>}, {pipeline_mode = #tpu.pipeline_mode<synchronous>, transform_indices = @transform_7, window_bounds = array<i64: 2, 1, 32>}, {pipeline_mode = #tpu.pipeline_mode<synchronous>, transform_indices = @transform_8, window_bounds = array<i64: 2, 1, 32>}, {pipeline_mode = #tpu.pipeline_mode<synchronous>, transform_indices = @transform_9, window_bounds = array<i64: 2, 1, 32>}, {pipeline_mode = #tpu.pipeline_mode<synchronous>, transform_indices = @transform_10, window_bounds = array<i64: 2, 32, 64>}, {pipeline_mode = #tpu.pipeline_mode<synchronous>, transform_indices = @transform_11, window_bounds = array<i64: 2, 1, 64>}, {pipeline_mode = #tpu.pipeline_mode<synchronous>, transform_indices = @transform_12, window_bounds = array<i64: 2, 64, 32>}, {pipeline_mode = #tpu.pipeline_mode<synchronous>, transform_indices = @transform_13, window_bounds = array<i64: 2, 1, 32>}, {pipeline_mode = #tpu.pipeline_mode<synchronous>, transform_indices = @transform_14, window_bounds = array<i64: 1, 32>}, {pipeline_mode = #tpu.pipeline_mode<synchronous>, transform_indices = @transform_15, window_bounds = array<i64: 1, 32>}, {transform_indices = @transform_16, window_bounds = array<i64: 1, 8, 32>}]} {
    %c0 = arith.constant 0 : index
    %c0_0 = arith.constant 0 : index
    %c0_1 = arith.constant 0 : index
    %0 = vector.load %arg1[%c0, %c0_0, %c0_1] : memref<1x8x32xf32, #tpu.memory_space<vmem>>, vector<1x8x32xf32>
    %1 = vector.shape_cast %0 : vector<1x8x32xf32> to vector<8x32xf32>
    %c0_2 = arith.constant 0 : index
    %c0_3 = arith.constant 0 : index
    %c0_4 = arith.constant 0 : index
    %2 = vector.load %arg2[%c0_2, %c0_3, %c0_4] : memref<2x1x32xf32, #tpu.memory_space<vmem>>, vector<1x1x32xf32>
    %3 = vector.shape_cast %2 : vector<1x1x32xf32> to vector<1x32xf32>
    %c0_5 = arith.constant 0 : index
    %c0_6 = arith.constant 0 : index
    %c0_7 = arith.constant 0 : index
    %4 = vector.load %arg3[%c0_5, %c0_6, %c0_7] : memref<2x1x32xf32, #tpu.memory_space<vmem>>, vector<1x1x32xf32>
    %5 = vector.shape_cast %4 : vector<1x1x32xf32> to vector<1x32xf32>
    %cst = arith.constant dense<0.000000e+00> : vector<8xf32>
    %6 = vector.multi_reduction <add>, %1, %cst [1] : vector<8x32xf32> to vector<8xf32>
    %7 = vector.shape_cast %6 : vector<8xf32> to vector<8x1xf32>
    %cst_8 = arith.constant 3.200000e+01 : f32
    %8 = vector.broadcast %cst_8 : f32 to vector<8x1xf32>
    %9 = arith.divf %7, %8 : vector<8x1xf32>
    %10 = vector.broadcast %9 : vector<8x1xf32> to vector<8x32xf32>
    %11 = arith.subf %1, %10 : vector<8x32xf32>
    %12 = arith.mulf %11, %11 : vector<8x32xf32>
    %cst_9 = arith.constant dense<0.000000e+00> : vector<8xf32>
    %13 = vector.multi_reduction <add>, %12, %cst_9 [1] : vector<8x32xf32> to vector<8xf32>
    %14 = vector.shape_cast %13 : vector<8xf32> to vector<8x1xf32>
    %cst_10 = arith.constant 3.200000e+01 : f32
    %15 = vector.broadcast %cst_10 : f32 to vector<8x1xf32>
    %16 = arith.divf %14, %15 : vector<8x1xf32>
    %17 = vector.broadcast %9 : vector<8x1xf32> to vector<8x32xf32>
    %18 = arith.subf %1, %17 : vector<8x32xf32>
    %cst_11 = arith.constant 9.99999974E-6 : f32
    %19 = vector.broadcast %cst_11 : f32 to vector<8x1xf32>
    %20 = arith.addf %16, %19 : vector<8x1xf32>
    %21 = math.rsqrt %20 : vector<8x1xf32>
    %22 = vector.broadcast %21 : vector<8x1xf32> to vector<8x32xf32>
    %23 = arith.mulf %18, %22 : vector<8x32xf32>
    %24 = vector.broadcast %3 : vector<1x32xf32> to vector<8x32xf32>
    %25 = arith.mulf %23, %24 : vector<8x32xf32>
    %26 = vector.broadcast %5 : vector<1x32xf32> to vector<8x32xf32>
    %27 = arith.addf %25, %26 : vector<8x32xf32>
    %28 = vector.shape_cast %27 : vector<8x32xf32> to vector<1x8x32xf32>
    %29 = vector.shape_cast %28 : vector<1x8x32xf32> to vector<1x8x32xf32>
    %30 = vector.broadcast %29 : vector<1x8x32xf32> to vector<4x8x32xf32>
    %c0_12 = arith.constant 0 : index
    %c0_13 = arith.constant 0 : index
    %c0_14 = arith.constant 0 : index
    %c0_15 = arith.constant 0 : index
    %31 = vector.load %arg4[%c0_12, %c0_13, %c0_14, %c0_15] : memref<2x4x32x8xf32, #tpu.memory_space<vmem>>, vector<1x4x32x8xf32>
    %32 = vector.shape_cast %31 : vector<1x4x32x8xf32> to vector<4x32x8xf32>
    %cst_16 = arith.constant dense<0.000000e+00> : vector<4x8x8xf32>
    %33 = tpu.matmul %30, %32, %cst_16 {dimension_numbers = #tpu.dot_dimension_numbers<[2], [1], [1], [2], [0, 0, 0, 1, 1, 2], [0], [0]>} : vector<4x8x32xf32>, vector<4x32x8xf32>, vector<4x8x8xf32> -> vector<4x8x8xf32>
    %c0_17 = arith.constant 0 : index
    %c0_18 = arith.constant 0 : index
    %c0_19 = arith.constant 0 : index
    %c0_20 = arith.constant 0 : index
    %34 = vector.load %arg5[%c0_17, %c0_18, %c0_19, %c0_20] : memref<2x4x1x8xf32, #tpu.memory_space<vmem>>, vector<1x4x1x8xf32>
    %35 = vector.shape_cast %34 : vector<1x4x1x8xf32> to vector<4x1x8xf32>
    %36 = vector.broadcast %35 : vector<4x1x8xf32> to vector<4x8x8xf32>
    %37 = arith.addf %33, %36 : vector<4x8x8xf32>
    %c0_21 = arith.constant 0 : index
    %c0_22 = arith.constant 0 : index
    %c0_23 = arith.constant 0 : index
    %c0_24 = arith.constant 0 : index
    %38 = vector.load %arg6[%c0_21, %c0_22, %c0_23, %c0_24] : memref<2x4x8x8xf32, #tpu.memory_space<vmem>>, vector<1x4x8x8xf32>
    %39 = vector.shape_cast %38 : vector<1x4x8x8xf32> to vector<4x8x8xf32>
    %cst_25 = arith.constant dense<0.000000e+00> : vector<4x8x8xf32>
    %40 = tpu.matmul %37, %39, %cst_25 {dimension_numbers = #tpu.dot_dimension_numbers<[2], [1], [1], [2], [0, 0, 0, 1, 1, 2], [0], [0]>} : vector<4x8x8xf32>, vector<4x8x8xf32>, vector<4x8x8xf32> -> vector<4x8x8xf32>
    %cst_26 = arith.constant dense<0.000000e+00> : vector<4x8x8xf32>
    %41 = tpu.matmul %40, %37, %cst_26 {dimension_numbers = #tpu.dot_dimension_numbers<[2], [2], [1], [1], [0, 0, 0, 1, 1, 1], [0], [0]>} : vector<4x8x8xf32>, vector<4x8x8xf32>, vector<4x8x8xf32> -> vector<4x8x8xf32>
    %cst_27 = arith.constant dense<0xFF800000> : vector<4x8xf32>
    %42 = vector.multi_reduction <maximumf>, %41, %cst_27 [2] : vector<4x8x8xf32> to vector<4x8xf32>
    %43 = vector.shape_cast %42 : vector<4x8xf32> to vector<4x8x1xf32>
    %44 = vector.broadcast %43 : vector<4x8x1xf32> to vector<4x8x8xf32>
    %45 = arith.subf %41, %44 : vector<4x8x8xf32>
    %46 = math.exp %45 : vector<4x8x8xf32>
    %cst_28 = arith.constant dense<0.000000e+00> : vector<4x8xf32>
    %47 = vector.multi_reduction <add>, %46, %cst_28 [2] : vector<4x8x8xf32> to vector<4x8xf32>
    %48 = vector.shape_cast %47 : vector<4x8xf32> to vector<4x8x1xf32>
    %49 = tpu.reciprocal %48 {approx = true} : vector<4x8x1xf32> -> vector<4x8x1xf32>
    %50 = vector.broadcast %49 : vector<4x8x1xf32> to vector<4x8x8xf32>
    %51 = arith.mulf %46, %50 : vector<4x8x8xf32>
    %cst_29 = arith.constant dense<0.000000e+00> : vector<4x8x8xf32>
    %52 = tpu.matmul %51, %37, %cst_29 {dimension_numbers = #tpu.dot_dimension_numbers<[2], [1], [1], [2], [0, 0, 0, 1, 1, 2], [0], [0]>} : vector<4x8x8xf32>, vector<4x8x8xf32>, vector<4x8x8xf32> -> vector<4x8x8xf32>
    %c0_30 = arith.constant 0 : index
    %c0_31 = arith.constant 0 : index
    %c0_32 = arith.constant 0 : index
    %c0_33 = arith.constant 0 : index
    %53 = vector.load %arg7[%c0_30, %c0_31, %c0_32, %c0_33] : memref<2x4x8x32xf32, #tpu.memory_space<vmem>>, vector<1x4x8x32xf32>
    %54 = vector.shape_cast %53 : vector<1x4x8x32xf32> to vector<4x8x32xf32>
    %cst_34 = arith.constant dense<0.000000e+00> : vector<4x8x32xf32>
    %55 = tpu.matmul %52, %54, %cst_34 {dimension_numbers = #tpu.dot_dimension_numbers<[2], [1], [1], [2], [0, 0, 0, 1, 1, 2], [0], [0]>} : vector<4x8x8xf32>, vector<4x8x32xf32>, vector<4x8x32xf32> -> vector<4x8x32xf32>
    %cst_35 = arith.constant dense<0.000000e+00> : vector<8x32xf32>
    %56 = vector.multi_reduction <add>, %55, %cst_35 [0] : vector<4x8x32xf32> to vector<8x32xf32>
    %c0_36 = arith.constant 0 : index
    %c0_37 = arith.constant 0 : index
    %c0_38 = arith.constant 0 : index
    %57 = vector.load %arg8[%c0_36, %c0_37, %c0_38] : memref<2x1x32xf32, #tpu.memory_space<vmem>>, vector<1x1x32xf32>
    %58 = vector.shape_cast %57 : vector<1x1x32xf32> to vector<1x32xf32>
    %59 = vector.broadcast %58 : vector<1x32xf32> to vector<8x32xf32>
    %60 = arith.addf %56, %59 : vector<8x32xf32>
    %61 = arith.addf %60, %1 : vector<8x32xf32>
    %c0_39 = arith.constant 0 : index
    %c0_40 = arith.constant 0 : index
    %c0_41 = arith.constant 0 : index
    %62 = vector.load %arg9[%c0_39, %c0_40, %c0_41] : memref<2x1x32xf32, #tpu.memory_space<vmem>>, vector<1x1x32xf32>
    %63 = vector.shape_cast %62 : vector<1x1x32xf32> to vector<1x32xf32>
    %c0_42 = arith.constant 0 : index
    %c0_43 = arith.constant 0 : index
    %c0_44 = arith.constant 0 : index
    %64 = vector.load %arg10[%c0_42, %c0_43, %c0_44] : memref<2x1x32xf32, #tpu.memory_space<vmem>>, vector<1x1x32xf32>
    %65 = vector.shape_cast %64 : vector<1x1x32xf32> to vector<1x32xf32>
    %cst_45 = arith.constant dense<0.000000e+00> : vector<8xf32>
    %66 = vector.multi_reduction <add>, %61, %cst_45 [1] : vector<8x32xf32> to vector<8xf32>
    %67 = vector.shape_cast %66 : vector<8xf32> to vector<8x1xf32>
    %cst_46 = arith.constant 3.200000e+01 : f32
    %68 = vector.broadcast %cst_46 : f32 to vector<8x1xf32>
    %69 = arith.divf %67, %68 : vector<8x1xf32>
    %70 = vector.broadcast %69 : vector<8x1xf32> to vector<8x32xf32>
    %71 = arith.subf %61, %70 : vector<8x32xf32>
    %72 = arith.mulf %71, %71 : vector<8x32xf32>
    %cst_47 = arith.constant dense<0.000000e+00> : vector<8xf32>
    %73 = vector.multi_reduction <add>, %72, %cst_47 [1] : vector<8x32xf32> to vector<8xf32>
    %74 = vector.shape_cast %73 : vector<8xf32> to vector<8x1xf32>
    %cst_48 = arith.constant 3.200000e+01 : f32
    %75 = vector.broadcast %cst_48 : f32 to vector<8x1xf32>
    %76 = arith.divf %74, %75 : vector<8x1xf32>
    %77 = vector.broadcast %69 : vector<8x1xf32> to vector<8x32xf32>
    %78 = arith.subf %61, %77 : vector<8x32xf32>
    %cst_49 = arith.constant 9.99999974E-6 : f32
    %79 = vector.broadcast %cst_49 : f32 to vector<8x1xf32>
    %80 = arith.addf %76, %79 : vector<8x1xf32>
    %81 = math.rsqrt %80 : vector<8x1xf32>
    %82 = vector.broadcast %81 : vector<8x1xf32> to vector<8x32xf32>
    %83 = arith.mulf %78, %82 : vector<8x32xf32>
    %84 = vector.broadcast %63 : vector<1x32xf32> to vector<8x32xf32>
    %85 = arith.mulf %83, %84 : vector<8x32xf32>
    %86 = vector.broadcast %65 : vector<1x32xf32> to vector<8x32xf32>
    %87 = arith.addf %85, %86 : vector<8x32xf32>
    %c0_50 = arith.constant 0 : index
    %c0_51 = arith.constant 0 : index
    %c0_52 = arith.constant 0 : index
    %88 = vector.load %arg11[%c0_50, %c0_51, %c0_52] : memref<2x32x64xf32, #tpu.memory_space<vmem>>, vector<1x32x64xf32>
    %89 = vector.shape_cast %88 : vector<1x32x64xf32> to vector<32x64xf32>
    %cst_53 = arith.constant dense<0.000000e+00> : vector<8x64xf32>
    %90 = tpu.matmul %87, %89, %cst_53 {dimension_numbers = #tpu.dot_dimension_numbers<[1], [0], [0], [1], [0, 0, 1, 1], [], []>} : vector<8x32xf32>, vector<32x64xf32>, vector<8x64xf32> -> vector<8x64xf32>
    %c0_54 = arith.constant 0 : index
    %c0_55 = arith.constant 0 : index
    %c0_56 = arith.constant 0 : index
    %91 = vector.load %arg12[%c0_54, %c0_55, %c0_56] : memref<2x1x64xf32, #tpu.memory_space<vmem>>, vector<1x1x64xf32>
    %92 = vector.shape_cast %91 : vector<1x1x64xf32> to vector<1x64xf32>
    %93 = vector.broadcast %92 : vector<1x64xf32> to vector<8x64xf32>
    %94 = arith.addf %90, %93 : vector<8x64xf32>
    %cst_57 = arith.constant 5.000000e-01 : f32
    %95 = vector.broadcast %cst_57 : f32 to vector<8x64xf32>
    %96 = arith.mulf %95, %94 : vector<8x64xf32>
    %cst_58 = arith.constant 0.707106769 : f32
    %97 = vector.broadcast %cst_58 : f32 to vector<8x64xf32>
    %98 = arith.mulf %94, %97 : vector<8x64xf32>
    %99 = math.erf %98 : vector<8x64xf32>
    %cst_59 = arith.constant 1.000000e+00 : f32
    %100 = vector.broadcast %cst_59 : f32 to vector<8x64xf32>
    %101 = arith.addf %100, %99 : vector<8x64xf32>
    %102 = arith.mulf %96, %101 : vector<8x64xf32>
    %c0_60 = arith.constant 0 : index
    %c0_61 = arith.constant 0 : index
    %c0_62 = arith.constant 0 : index
    %103 = vector.load %arg13[%c0_60, %c0_61, %c0_62] : memref<2x64x32xf32, #tpu.memory_space<vmem>>, vector<1x64x32xf32>
    %104 = vector.shape_cast %103 : vector<1x64x32xf32> to vector<64x32xf32>
    %cst_63 = arith.constant dense<0.000000e+00> : vector<8x32xf32>
    %105 = tpu.matmul %102, %104, %cst_63 {dimension_numbers = #tpu.dot_dimension_numbers<[1], [0], [0], [1], [0, 0, 1, 1], [], []>} : vector<8x64xf32>, vector<64x32xf32>, vector<8x32xf32> -> vector<8x32xf32>
    %c0_64 = arith.constant 0 : index
    %c0_65 = arith.constant 0 : index
    %c0_66 = arith.constant 0 : index
    %106 = vector.load %arg14[%c0_64, %c0_65, %c0_66] : memref<2x1x32xf32, #tpu.memory_space<vmem>>, vector<1x1x32xf32>
    %107 = vector.shape_cast %106 : vector<1x1x32xf32> to vector<1x32xf32>
    %108 = vector.broadcast %107 : vector<1x32xf32> to vector<8x32xf32>
    %109 = arith.addf %105, %108 : vector<8x32xf32>
    %110 = arith.addf %61, %109 : vector<8x32xf32>
    %c1 = arith.constant 1 : index
    %c0_67 = arith.constant 0 : index
    %c0_68 = arith.constant 0 : index
    %111 = vector.load %arg2[%c1, %c0_67, %c0_68] : memref<2x1x32xf32, #tpu.memory_space<vmem>>, vector<1x1x32xf32>
    %112 = vector.shape_cast %111 : vector<1x1x32xf32> to vector<1x32xf32>
    %c1_69 = arith.constant 1 : index
    %c0_70 = arith.constant 0 : index
    %c0_71 = arith.constant 0 : index
    %113 = vector.load %arg3[%c1_69, %c0_70, %c0_71] : memref<2x1x32xf32, #tpu.memory_space<vmem>>, vector<1x1x32xf32>
    %114 = vector.shape_cast %113 : vector<1x1x32xf32> to vector<1x32xf32>
    %cst_72 = arith.constant dense<0.000000e+00> : vector<8xf32>
    %115 = vector.multi_reduction <add>, %110, %cst_72 [1] : vector<8x32xf32> to vector<8xf32>
    %116 = vector.shape_cast %115 : vector<8xf32> to vector<8x1xf32>
    %cst_73 = arith.constant 3.200000e+01 : f32
    %117 = vector.broadcast %cst_73 : f32 to vector<8x1xf32>
    %118 = arith.divf %116, %117 : vector<8x1xf32>
    %119 = vector.broadcast %118 : vector<8x1xf32> to vector<8x32xf32>
    %120 = arith.subf %110, %119 : vector<8x32xf32>
    %121 = arith.mulf %120, %120 : vector<8x32xf32>
    %cst_74 = arith.constant dense<0.000000e+00> : vector<8xf32>
    %122 = vector.multi_reduction <add>, %121, %cst_74 [1] : vector<8x32xf32> to vector<8xf32>
    %123 = vector.shape_cast %122 : vector<8xf32> to vector<8x1xf32>
    %cst_75 = arith.constant 3.200000e+01 : f32
    %124 = vector.broadcast %cst_75 : f32 to vector<8x1xf32>
    %125 = arith.divf %123, %124 : vector<8x1xf32>
    %126 = vector.broadcast %118 : vector<8x1xf32> to vector<8x32xf32>
    %127 = arith.subf %110, %126 : vector<8x32xf32>
    %cst_76 = arith.constant 9.99999974E-6 : f32
    %128 = vector.broadcast %cst_76 : f32 to vector<8x1xf32>
    %129 = arith.addf %125, %128 : vector<8x1xf32>
    %130 = math.rsqrt %129 : vector<8x1xf32>
    %131 = vector.broadcast %130 : vector<8x1xf32> to vector<8x32xf32>
    %132 = arith.mulf %127, %131 : vector<8x32xf32>
    %133 = vector.broadcast %112 : vector<1x32xf32> to vector<8x32xf32>
    %134 = arith.mulf %132, %133 : vector<8x32xf32>
    %135 = vector.broadcast %114 : vector<1x32xf32> to vector<8x32xf32>
    %136 = arith.addf %134, %135 : vector<8x32xf32>
    %137 = vector.shape_cast %136 : vector<8x32xf32> to vector<1x8x32xf32>
    %138 = vector.shape_cast %137 : vector<1x8x32xf32> to vector<1x8x32xf32>
    %139 = vector.broadcast %138 : vector<1x8x32xf32> to vector<4x8x32xf32>
    %c1_77 = arith.constant 1 : index
    %c0_78 = arith.constant 0 : index
    %c0_79 = arith.constant 0 : index
    %c0_80 = arith.constant 0 : index
    %140 = vector.load %arg4[%c1_77, %c0_78, %c0_79, %c0_80] : memref<2x4x32x8xf32, #tpu.memory_space<vmem>>, vector<1x4x32x8xf32>
    %141 = vector.shape_cast %140 : vector<1x4x32x8xf32> to vector<4x32x8xf32>
    %cst_81 = arith.constant dense<0.000000e+00> : vector<4x8x8xf32>
    %142 = tpu.matmul %139, %141, %cst_81 {dimension_numbers = #tpu.dot_dimension_numbers<[2], [1], [1], [2], [0, 0, 0, 1, 1, 2], [0], [0]>} : vector<4x8x32xf32>, vector<4x32x8xf32>, vector<4x8x8xf32> -> vector<4x8x8xf32>
    %c1_82 = arith.constant 1 : index
    %c0_83 = arith.constant 0 : index
    %c0_84 = arith.constant 0 : index
    %c0_85 = arith.constant 0 : index
    %143 = vector.load %arg5[%c1_82, %c0_83, %c0_84, %c0_85] : memref<2x4x1x8xf32, #tpu.memory_space<vmem>>, vector<1x4x1x8xf32>
    %144 = vector.shape_cast %143 : vector<1x4x1x8xf32> to vector<4x1x8xf32>
    %145 = vector.broadcast %144 : vector<4x1x8xf32> to vector<4x8x8xf32>
    %146 = arith.addf %142, %145 : vector<4x8x8xf32>
    %c1_86 = arith.constant 1 : index
    %c0_87 = arith.constant 0 : index
    %c0_88 = arith.constant 0 : index
    %c0_89 = arith.constant 0 : index
    %147 = vector.load %arg6[%c1_86, %c0_87, %c0_88, %c0_89] : memref<2x4x8x8xf32, #tpu.memory_space<vmem>>, vector<1x4x8x8xf32>
    %148 = vector.shape_cast %147 : vector<1x4x8x8xf32> to vector<4x8x8xf32>
    %cst_90 = arith.constant dense<0.000000e+00> : vector<4x8x8xf32>
    %149 = tpu.matmul %146, %148, %cst_90 {dimension_numbers = #tpu.dot_dimension_numbers<[2], [1], [1], [2], [0, 0, 0, 1, 1, 2], [0], [0]>} : vector<4x8x8xf32>, vector<4x8x8xf32>, vector<4x8x8xf32> -> vector<4x8x8xf32>
    %cst_91 = arith.constant dense<0.000000e+00> : vector<4x8x8xf32>
    %150 = tpu.matmul %149, %146, %cst_91 {dimension_numbers = #tpu.dot_dimension_numbers<[2], [2], [1], [1], [0, 0, 0, 1, 1, 1], [0], [0]>} : vector<4x8x8xf32>, vector<4x8x8xf32>, vector<4x8x8xf32> -> vector<4x8x8xf32>
    %cst_92 = arith.constant dense<0xFF800000> : vector<4x8xf32>
    %151 = vector.multi_reduction <maximumf>, %150, %cst_92 [2] : vector<4x8x8xf32> to vector<4x8xf32>
    %152 = vector.shape_cast %151 : vector<4x8xf32> to vector<4x8x1xf32>
    %153 = vector.broadcast %152 : vector<4x8x1xf32> to vector<4x8x8xf32>
    %154 = arith.subf %150, %153 : vector<4x8x8xf32>
    %155 = math.exp %154 : vector<4x8x8xf32>
    %cst_93 = arith.constant dense<0.000000e+00> : vector<4x8xf32>
    %156 = vector.multi_reduction <add>, %155, %cst_93 [2] : vector<4x8x8xf32> to vector<4x8xf32>
    %157 = vector.shape_cast %156 : vector<4x8xf32> to vector<4x8x1xf32>
    %158 = tpu.reciprocal %157 {approx = true} : vector<4x8x1xf32> -> vector<4x8x1xf32>
    %159 = vector.broadcast %158 : vector<4x8x1xf32> to vector<4x8x8xf32>
    %160 = arith.mulf %155, %159 : vector<4x8x8xf32>
    %cst_94 = arith.constant dense<0.000000e+00> : vector<4x8x8xf32>
    %161 = tpu.matmul %160, %146, %cst_94 {dimension_numbers = #tpu.dot_dimension_numbers<[2], [1], [1], [2], [0, 0, 0, 1, 1, 2], [0], [0]>} : vector<4x8x8xf32>, vector<4x8x8xf32>, vector<4x8x8xf32> -> vector<4x8x8xf32>
    %c1_95 = arith.constant 1 : index
    %c0_96 = arith.constant 0 : index
    %c0_97 = arith.constant 0 : index
    %c0_98 = arith.constant 0 : index
    %162 = vector.load %arg7[%c1_95, %c0_96, %c0_97, %c0_98] : memref<2x4x8x32xf32, #tpu.memory_space<vmem>>, vector<1x4x8x32xf32>
    %163 = vector.shape_cast %162 : vector<1x4x8x32xf32> to vector<4x8x32xf32>
    %cst_99 = arith.constant dense<0.000000e+00> : vector<4x8x32xf32>
    %164 = tpu.matmul %161, %163, %cst_99 {dimension_numbers = #tpu.dot_dimension_numbers<[2], [1], [1], [2], [0, 0, 0, 1, 1, 2], [0], [0]>} : vector<4x8x8xf32>, vector<4x8x32xf32>, vector<4x8x32xf32> -> vector<4x8x32xf32>
    %cst_100 = arith.constant dense<0.000000e+00> : vector<8x32xf32>
    %165 = vector.multi_reduction <add>, %164, %cst_100 [0] : vector<4x8x32xf32> to vector<8x32xf32>
    %c1_101 = arith.constant 1 : index
    %c0_102 = arith.constant 0 : index
    %c0_103 = arith.constant 0 : index
    %166 = vector.load %arg8[%c1_101, %c0_102, %c0_103] : memref<2x1x32xf32, #tpu.memory_space<vmem>>, vector<1x1x32xf32>
    %167 = vector.shape_cast %166 : vector<1x1x32xf32> to vector<1x32xf32>
    %168 = vector.broadcast %167 : vector<1x32xf32> to vector<8x32xf32>
    %169 = arith.addf %165, %168 : vector<8x32xf32>
    %170 = arith.addf %169, %110 : vector<8x32xf32>
    %c1_104 = arith.constant 1 : index
    %c0_105 = arith.constant 0 : index
    %c0_106 = arith.constant 0 : index
    %171 = vector.load %arg9[%c1_104, %c0_105, %c0_106] : memref<2x1x32xf32, #tpu.memory_space<vmem>>, vector<1x1x32xf32>
    %172 = vector.shape_cast %171 : vector<1x1x32xf32> to vector<1x32xf32>
    %c1_107 = arith.constant 1 : index
    %c0_108 = arith.constant 0 : index
    %c0_109 = arith.constant 0 : index
    %173 = vector.load %arg10[%c1_107, %c0_108, %c0_109] : memref<2x1x32xf32, #tpu.memory_space<vmem>>, vector<1x1x32xf32>
    %174 = vector.shape_cast %173 : vector<1x1x32xf32> to vector<1x32xf32>
    %cst_110 = arith.constant dense<0.000000e+00> : vector<8xf32>
    %175 = vector.multi_reduction <add>, %170, %cst_110 [1] : vector<8x32xf32> to vector<8xf32>
    %176 = vector.shape_cast %175 : vector<8xf32> to vector<8x1xf32>
    %cst_111 = arith.constant 3.200000e+01 : f32
    %177 = vector.broadcast %cst_111 : f32 to vector<8x1xf32>
    %178 = arith.divf %176, %177 : vector<8x1xf32>
    %179 = vector.broadcast %178 : vector<8x1xf32> to vector<8x32xf32>
    %180 = arith.subf %170, %179 : vector<8x32xf32>
    %181 = arith.mulf %180, %180 : vector<8x32xf32>
    %cst_112 = arith.constant dense<0.000000e+00> : vector<8xf32>
    %182 = vector.multi_reduction <add>, %181, %cst_112 [1] : vector<8x32xf32> to vector<8xf32>
    %183 = vector.shape_cast %182 : vector<8xf32> to vector<8x1xf32>
    %cst_113 = arith.constant 3.200000e+01 : f32
    %184 = vector.broadcast %cst_113 : f32 to vector<8x1xf32>
    %185 = arith.divf %183, %184 : vector<8x1xf32>
    %186 = vector.broadcast %178 : vector<8x1xf32> to vector<8x32xf32>
    %187 = arith.subf %170, %186 : vector<8x32xf32>
    %cst_114 = arith.constant 9.99999974E-6 : f32
    %188 = vector.broadcast %cst_114 : f32 to vector<8x1xf32>
    %189 = arith.addf %185, %188 : vector<8x1xf32>
    %190 = math.rsqrt %189 : vector<8x1xf32>
    %191 = vector.broadcast %190 : vector<8x1xf32> to vector<8x32xf32>
    %192 = arith.mulf %187, %191 : vector<8x32xf32>
    %193 = vector.broadcast %172 : vector<1x32xf32> to vector<8x32xf32>
    %194 = arith.mulf %192, %193 : vector<8x32xf32>
    %195 = vector.broadcast %174 : vector<1x32xf32> to vector<8x32xf32>
    %196 = arith.addf %194, %195 : vector<8x32xf32>
    %c1_115 = arith.constant 1 : index
    %c0_116 = arith.constant 0 : index
    %c0_117 = arith.constant 0 : index
    %197 = vector.load %arg11[%c1_115, %c0_116, %c0_117] : memref<2x32x64xf32, #tpu.memory_space<vmem>>, vector<1x32x64xf32>
    %198 = vector.shape_cast %197 : vector<1x32x64xf32> to vector<32x64xf32>
    %cst_118 = arith.constant dense<0.000000e+00> : vector<8x64xf32>
    %199 = tpu.matmul %196, %198, %cst_118 {dimension_numbers = #tpu.dot_dimension_numbers<[1], [0], [0], [1], [0, 0, 1, 1], [], []>} : vector<8x32xf32>, vector<32x64xf32>, vector<8x64xf32> -> vector<8x64xf32>
    %c1_119 = arith.constant 1 : index
    %c0_120 = arith.constant 0 : index
    %c0_121 = arith.constant 0 : index
    %200 = vector.load %arg12[%c1_119, %c0_120, %c0_121] : memref<2x1x64xf32, #tpu.memory_space<vmem>>, vector<1x1x64xf32>
    %201 = vector.shape_cast %200 : vector<1x1x64xf32> to vector<1x64xf32>
    %202 = vector.broadcast %201 : vector<1x64xf32> to vector<8x64xf32>
    %203 = arith.addf %199, %202 : vector<8x64xf32>
    %cst_122 = arith.constant 5.000000e-01 : f32
    %204 = vector.broadcast %cst_122 : f32 to vector<8x64xf32>
    %205 = arith.mulf %204, %203 : vector<8x64xf32>
    %cst_123 = arith.constant 0.707106769 : f32
    %206 = vector.broadcast %cst_123 : f32 to vector<8x64xf32>
    %207 = arith.mulf %203, %206 : vector<8x64xf32>
    %208 = math.erf %207 : vector<8x64xf32>
    %cst_124 = arith.constant 1.000000e+00 : f32
    %209 = vector.broadcast %cst_124 : f32 to vector<8x64xf32>
    %210 = arith.addf %209, %208 : vector<8x64xf32>
    %211 = arith.mulf %205, %210 : vector<8x64xf32>
    %c1_125 = arith.constant 1 : index
    %c0_126 = arith.constant 0 : index
    %c0_127 = arith.constant 0 : index
    %212 = vector.load %arg13[%c1_125, %c0_126, %c0_127] : memref<2x64x32xf32, #tpu.memory_space<vmem>>, vector<1x64x32xf32>
    %213 = vector.shape_cast %212 : vector<1x64x32xf32> to vector<64x32xf32>
    %cst_128 = arith.constant dense<0.000000e+00> : vector<8x32xf32>
    %214 = tpu.matmul %211, %213, %cst_128 {dimension_numbers = #tpu.dot_dimension_numbers<[1], [0], [0], [1], [0, 0, 1, 1], [], []>} : vector<8x64xf32>, vector<64x32xf32>, vector<8x32xf32> -> vector<8x32xf32>
    %c1_129 = arith.constant 1 : index
    %c0_130 = arith.constant 0 : index
    %c0_131 = arith.constant 0 : index
    %215 = vector.load %arg14[%c1_129, %c0_130, %c0_131] : memref<2x1x32xf32, #tpu.memory_space<vmem>>, vector<1x1x32xf32>
    %216 = vector.shape_cast %215 : vector<1x1x32xf32> to vector<1x32xf32>
    %217 = vector.broadcast %216 : vector<1x32xf32> to vector<8x32xf32>
    %218 = arith.addf %214, %217 : vector<8x32xf32>
    %219 = arith.addf %170, %218 : vector<8x32xf32>
    %c0_132 = arith.constant 0 : index
    %c0_133 = arith.constant 0 : index
    %220 = vector.load %arg15[%c0_132, %c0_133] : memref<1x32xf32, #tpu.memory_space<vmem>>, vector<1x32xf32>
    %c0_134 = arith.constant 0 : index
    %c0_135 = arith.constant 0 : index
    %221 = vector.load %arg16[%c0_134, %c0_135] : memref<1x32xf32, #tpu.memory_space<vmem>>, vector<1x32xf32>
    %cst_136 = arith.constant dense<0.000000e+00> : vector<8xf32>
    %222 = vector.multi_reduction <add>, %219, %cst_136 [1] : vector<8x32xf32> to vector<8xf32>
    %223 = vector.shape_cast %222 : vector<8xf32> to vector<8x1xf32>
    %cst_137 = arith.constant 3.200000e+01 : f32
    %224 = vector.broadcast %cst_137 : f32 to vector<8x1xf32>
    %225 = arith.divf %223, %224 : vector<8x1xf32>
    %226 = vector.broadcast %225 : vector<8x1xf32> to vector<8x32xf32>
    %227 = arith.subf %219, %226 : vector<8x32xf32>
    %228 = arith.mulf %227, %227 : vector<8x32xf32>
    %cst_138 = arith.constant dense<0.000000e+00> : vector<8xf32>
    %229 = vector.multi_reduction <add>, %228, %cst_138 [1] : vector<8x32xf32> to vector<8xf32>
    %230 = vector.shape_cast %229 : vector<8xf32> to vector<8x1xf32>
    %cst_139 = arith.constant 3.200000e+01 : f32
    %231 = vector.broadcast %cst_139 : f32 to vector<8x1xf32>
    %232 = arith.divf %230, %231 : vector<8x1xf32>
    %233 = vector.broadcast %225 : vector<8x1xf32> to vector<8x32xf32>
    %234 = arith.subf %219, %233 : vector<8x32xf32>
    %cst_140 = arith.constant 9.99999974E-6 : f32
    %235 = vector.broadcast %cst_140 : f32 to vector<8x1xf32>
    %236 = arith.addf %232, %235 : vector<8x1xf32>
    %237 = math.rsqrt %236 : vector<8x1xf32>
    %238 = vector.broadcast %237 : vector<8x1xf32> to vector<8x32xf32>
    %239 = arith.mulf %234, %238 : vector<8x32xf32>
    %240 = vector.broadcast %220 : vector<1x32xf32> to vector<8x32xf32>
    %241 = arith.mulf %239, %240 : vector<8x32xf32>
    %242 = vector.broadcast %221 : vector<1x32xf32> to vector<8x32xf32>
    %243 = arith.addf %241, %242 : vector<8x32xf32>
    %c0_141 = arith.constant 0 : index
    %c0_142 = arith.constant 0 : index
    %c0_143 = arith.constant 0 : index
    %244 = vector.load %arg17[%c0_141, %c0_142, %c0_143] : memref<1x8x32xf32, #tpu.memory_space<vmem>>, vector<1x8x32xf32>
    %245 = vector.shape_cast %244 : vector<1x8x32xf32> to vector<8x32xf32>
    %246 = vector.shape_cast %243 : vector<8x32xf32> to vector<1x8x32xf32>
    tpu.vector_store %arg17[%c0_141, %c0_142, %c0_143], %246 {strides = array<i32>} : memref<1x8x32xf32, #tpu.memory_space<vmem>>, vector<1x8x32xf32>,
    return
  }
  func.func @transform_0(%arg0: i32) -> (i32, i32, i32) {
    %c0_i32 = arith.constant 0 : i32
    %c0_i32_0 = arith.constant 0 : i32
    %c0_i32_1 = arith.constant 0 : i32
    return %arg0, %c0_i32, %c0_i32_0 : i32, i32, i32
  }
  func.func @transform_1(%arg0: i32) -> (i32, i32, i32) {
    %c0_i32 = arith.constant 0 : i32
    %c0_i32_0 = arith.constant 0 : i32
    %c0_i32_1 = arith.constant 0 : i32
    %c0_i32_2 = arith.constant 0 : i32
    return %c0_i32, %c0_i32_0, %c0_i32_1 : i32, i32, i32
  }
  func.func @transform_2(%arg0: i32) -> (i32, i32, i32) {
    %c0_i32 = arith.constant 0 : i32
    %c0_i32_0 = arith.constant 0 : i32
    %c0_i32_1 = arith.constant 0 : i32
    %c0_i32_2 = arith.constant 0 : i32
    return %c0_i32, %c0_i32_0, %c0_i32_1 : i32, i32, i32
  }
  func.func @transform_3(%arg0: i32) -> (i32, i32, i32, i32) {
    %c0_i32 = arith.constant 0 : i32
    %c0_i32_0 = arith.constant 0 : i32
    %c0_i32_1 = arith.constant 0 : i32
    %c0_i32_2 = arith.constant 0 : i32
    %c0_i32_3 = arith.constant 0 : i32
    return %c0_i32, %c0_i32_0, %c0_i32_1, %c0_i32_2 : i32, i32, i32, i32
  }
  func.func @transform_4(%arg0: i32) -> (i32, i32, i32, i32) {
    %c0_i32 = arith.constant 0 : i32
    %c0_i32_0 = arith.constant 0 : i32
    %c0_i32_1 = arith.constant 0 : i32
    %c0_i32_2 = arith.constant 0 : i32
    %c0_i32_3 = arith.constant 0 : i32
    return %c0_i32, %c0_i32_0, %c0_i32_1, %c0_i32_2 : i32, i32, i32, i32
  }
  func.func @transform_5(%arg0: i32) -> (i32, i32, i32, i32) {
    %c0_i32 = arith.constant 0 : i32
    %c0_i32_0 = arith.constant 0 : i32
    %c0_i32_1 = arith.constant 0 : i32
    %c0_i32_2 = arith.constant 0 : i32
    %c0_i32_3 = arith.constant 0 : i32
    return %c0_i32, %c0_i32_0, %c0_i32_1, %c0_i32_2 : i32, i32, i32, i32
  }
  func.func @transform_6(%arg0: i32) -> (i32, i32, i32, i32) {
    %c0_i32 = arith.constant 0 : i32
    %c0_i32_0 = arith.constant 0 : i32
    %c0_i32_1 = arith.constant 0 : i32
    %c0_i32_2 = arith.constant 0 : i32
    %c0_i32_3 = arith.constant 0 : i32
    return %c0_i32, %c0_i32_0, %c0_i32_1, %c0_i32_2 : i32, i32, i32, i32
  }
  func.func @transform_7(%arg0: i32) -> (i32, i32, i32) {
    %c0_i32 = arith.constant 0 : i32
    %c0_i32_0 = arith.constant 0 : i32
    %c0_i32_1 = arith.constant 0 : i32
    %c0_i32_2 = arith.constant 0 : i32
    return %c0_i32, %c0_i32_0, %c0_i32_1 : i32, i32, i32
  }
  func.func @transform_8(%arg0: i32) -> (i32, i32, i32) {
    %c0_i32 = arith.constant 0 : i32
    %c0_i32_0 = arith.constant 0 : i32
    %c0_i32_1 = arith.constant 0 : i32
    %c0_i32_2 = arith.constant 0 : i32
    return %c0_i32, %c0_i32_0, %c0_i32_1 : i32, i32, i32
  }
  func.func @transform_9(%arg0: i32) -> (i32, i32, i32) {
    %c0_i32 = arith.constant 0 : i32
    %c0_i32_0 = arith.constant 0 : i32
    %c0_i32_1 = arith.constant 0 : i32
    %c0_i32_2 = arith.constant 0 : i32
    return %c0_i32, %c0_i32_0, %c0_i32_1 : i32, i32, i32
  }
  func.func @transform_10(%arg0: i32) -> (i32, i32, i32) {
    %c0_i32 = arith.constant 0 : i32
    %c0_i32_0 = arith.constant 0 : i32
    %c0_i32_1 = arith.constant 0 : i32
    %c0_i32_2 = arith.constant 0 : i32
    return %c0_i32, %c0_i32_0, %c0_i32_1 : i32, i32, i32
  }
  func.func @transform_11(%arg0: i32) -> (i32, i32, i32) {
    %c0_i32 = arith.constant 0 : i32
    %c0_i32_0 = arith.constant 0 : i32
    %c0_i32_1 = arith.constant 0 : i32
    %c0_i32_2 = arith.constant 0 : i32
    return %c0_i32, %c0_i32_0, %c0_i32_1 : i32, i32, i32
  }
  func.func @transform_12(%arg0: i32) -> (i32, i32, i32) {
    %c0_i32 = arith.constant 0 : i32
    %c0_i32_0 = arith.constant 0 : i32
    %c0_i32_1 = arith.constant 0 : i32
    %c0_i32_2 = arith.constant 0 : i32
    return %c0_i32, %c0_i32_0, %c0_i32_1 : i32, i32, i32
  }
  func.func @transform_13(%arg0: i32) -> (i32, i32, i32) {
    %c0_i32 = arith.constant 0 : i32
    %c0_i32_0 = arith.constant 0 : i32
    %c0_i32_1 = arith.constant 0 : i32
    %c0_i32_2 = arith.constant 0 : i32
    return %c0_i32, %c0_i32_0, %c0_i32_1 : i32, i32, i32
  }
  func.func @transform_14(%arg0: i32) -> (i32, i32) {
    %c0_i32 = arith.constant 0 : i32
    %c0_i32_0 = arith.constant 0 : i32
    %c0_i32_1 = arith.constant 0 : i32
    return %c0_i32, %c0_i32_0 : i32, i32
  }
  func.func @transform_15(%arg0: i32) -> (i32, i32) {
    %c0_i32 = arith.constant 0 : i32
    %c0_i32_0 = arith.constant 0 : i32
    %c0_i32_1 = arith.constant 0 : i32
    return %c0_i32, %c0_i32_0 : i32, i32
  }
  func.func @transform_16(%arg0: i32) -> (i32, i32, i32) {
    %c0_i32 = arith.constant 0 : i32
    %c0_i32_0 = arith.constant 0 : i32
    %c0_i32_1 = arith.constant 0 : i32
    return %arg0, %c0_i32, %c0_i32_0 : i32, i32, i32
  }
}

</mosaic_0001>

<llo_original>
// kernel: tpu_custom_call.1
$region0: #{tpu_custom_call.1}
  #allocation0 [shape = 'u32[]', space=smem, size = 0x4, offset = 0x4, fixed_abs, tag = 'smem constant byte address 0x4 - core index']
  #allocation1 [shape = 'u32[144,128]{1,0:T(1,128)}', space=vmem, size = 0x12000, scoped, tag = 'internal scratch']
  %s0 = inlined_call_operand.vmem [shape: f32[2,8,32], index: 0, kind: input, shape index: {}]
  %s1 = inlined_call_operand.vmem [shape: f32[2,1,32], index: 1, kind: input, shape index: {}]
  %s2 = inlined_call_operand.vmem [shape: f32[2,1,32], index: 2, kind: input, shape index: {}]
  %s3 = inlined_call_operand.vmem [shape: f32[2,4,32,8], index: 3, kind: input, shape index: {}]
  %s4 = inlined_call_operand.vmem [shape: f32[2,4,1,8], index: 4, kind: input, shape index: {}]
  %s5 = inlined_call_operand.vmem [shape: f32[2,4,8,8], index: 5, kind: input, shape index: {}]
  %s6 = inlined_call_operand.vmem [shape: f32[2,4,8,32], index: 6, kind: input, shape index: {}]
  %s7 = inlined_call_operand.vmem [shape: f32[2,1,32], index: 7, kind: input, shape index: {}]
  %s8 = inlined_call_operand.vmem [shape: f32[2,1,32], index: 8, kind: input, shape index: {}]
  %s9 = inlined_call_operand.vmem [shape: f32[2,1,32], index: 9, kind: input, shape index: {}]
  %s10 = inlined_call_operand.vmem [shape: f32[2,32,64], index: 10, kind: input, shape index: {}]
  %s11 = inlined_call_operand.vmem [shape: f32[2,1,64], index: 11, kind: input, shape index: {}]
  %s12 = inlined_call_operand.vmem [shape: f32[2,64,32], index: 12, kind: input, shape index: {}]
  %s13 = inlined_call_operand.vmem [shape: f32[2,1,32], index: 13, kind: input, shape index: {}]
  %s14 = inlined_call_operand.vmem [shape: f32[1,32], index: 14, kind: input, shape index: {}]
  %s15 = inlined_call_operand.vmem [shape: f32[1,32], index: 15, kind: input, shape index: {}]
  %s16 = inlined_call_operand.hbm [shape: f32[2,8,32], index: 16, kind: output, shape index: {}]
  %s17 = sld [smem:[#allocation0]]
  $region97: #{tpu_custom_call.1} parent=0
    _
  %s19 = ssub.s32 1, %s17
  %s20 = scalar_select 0, %s19, %s17
  $region1: #{tpu_custom_call.1} parent=0
    #allocation2 [shape = 'u8[8192]{0}', space=vmem, size = 0x2000, scoped, tag = 'output window, operand 0']
    #allocation3 [shape = 's32[2]{0}', space=sflag, size = 0x8, scoped, tag = 'scoped memory for tpu_custom_call.1']
    %21 = vsyncpa [#allocation3], 0
    %s22 = scalar_lea.sflag [#allocation3], 1
    %23 = vsyncpa %s22, 0
    loop: start=0, step=1, limit=4
    $region2: #{tpu_custom_call.1} parent=1 // loop_pre_header
      _
    $region3: #{tpu_custom_call.1} parent=1 // loop_header
      %s25 = sphi 0, %s29
      %p26 = scmp.ge.s32.totalorder %s25, 4
      %s35 = sphi 0, %s37
      %s38 = sphi 0, %s35
      %s39 = sphi 0, %s38
      %s55 = sphi 0, %s39
      %s59 = sphi 0, %s59
      %s61 = sphi 0, %s59
      %s62 = sphi 0, %s61
      %s76 = sphi 0, %s62
      %s80 = sphi 0, %s80
      %s82 = sphi 0, %s80
      %s83 = sphi 0, %s82
      %s97 = sphi 0, %s83
      %s101 = sphi 0, %s101
      %s103 = sphi 0, %s101
      %s104 = sphi 0, %s103
      %s118 = sphi 0, %s104
      %s122 = sphi 0, %s122
      %s124 = sphi 0, %s122
      %s125 = sphi 0, %s124
      %s139 = sphi 0, %s125
      %s143 = sphi 0, %s143
      %s145 = sphi 0, %s143
      %s146 = sphi 0, %s145
      %s160 = sphi 0, %s146
      %s164 = sphi 0, %s164
      %s166 = sphi 0, %s164
      %s167 = sphi 0, %s166
      %s181 = sphi 0, %s167
      %s185 = sphi 0, %s185
      %s187 = sphi 0, %s185
      %s188 = sphi 0, %s187
      %s202 = sphi 0, %s188
      %s206 = sphi 0, %s206
      %s208 = sphi 0, %s206
      %s209 = sphi 0, %s208
      %s223 = sphi 0, %s209
      %s227 = sphi 0, %s227
      %s229 = sphi 0, %s227
      %s230 = sphi 0, %s229
      %s244 = sphi 0, %s230
      %s248 = sphi 0, %s248
      %s250 = sphi 0, %s248
      %s251 = sphi 0, %s250
      %s265 = sphi 0, %s251
      %s269 = sphi 0, %s269
      %s271 = sphi 0, %s269
      %s272 = sphi 0, %s271
      %s286 = sphi 0, %s272
      %s290 = sphi 0, %s290
      %s292 = sphi 0, %s290
      %s293 = sphi 0, %s292
      %s307 = sphi 0, %s293
      %s311 = sphi 0, %s311
      %s313 = sphi 0, %s311
      %s314 = sphi 0, %s313
      %s328 = sphi 0, %s314
      %s332 = sphi 0, %s332
      %s334 = sphi 0, %s332
      %s335 = sphi 0, %s334
      %s349 = sphi 0, %s335
      %s353 = sphi 0, %s353
      %s355 = sphi 0, %s353
      %s356 = sphi 0, %s355
      %s370 = sphi 0, %s356
      %s376 = sphi 0, %s378
      %s379 = sphi 0, %s376
      %s380 = sphi 0, %s379
      %s396 = sphi 0, %s380
    $region4: #{tpu_custom_call.1} parent=1 // loop_header_branch
      %28 = sbr.rel (%p26) target = $region8
    $region5: #{tpu_custom_call.1} parent=1 // loop_body
      %s30 = ssub.s32 %s25, 1
      %s31 = ssub.s32 %s25, 2
      %s32 = sadd.s32 %s25, 1
      %s33 = ssub.s32 %s25, %s32
      %p34 = scmp.eq.s32.totalorder %s33, 0
      %s36 = sadd.s32 %s35, 1
      %s37 = scalar_select %p34, %s35, %s36
      %p40 = pneg %p34
      %p41 = scmp.eq.s32.totalorder %s25, 1
      %p42 = por %p40, %p41
      %p43 = scmp.ne.s32.totalorder %s35, %s38
      %p44 = scmp.eq.s32.totalorder %s25, 0
      %p45 = por %p43, %p44
      %p46 = scmp.ne.s32.totalorder %s35, %s38
      %p47 = scmp.eq.s32.totalorder %s30, 1
      %p48 = por %p46, %p47
      %p49 = scmp.ne.s32.totalorder %s38, %s39
      %p50 = scmp.eq.s32.totalorder %s30, 0
      %p51 = por %p49, %p50
      %p52 = scmp.ne.s32.totalorder %s38, %s39
      %p53 = scmp.eq.s32.totalorder %s31, 1
      %p54 = por %p52, %p53
      %p56 = scmp.ne.s32.totalorder %s39, %s55
      %p57 = scmp.eq.s32.totalorder %s31, 0
      %p58 = por %p56, %p57
      %s60 = sadd.s32 %s59, 1
      %p63 = scmp.eq.s32.totalorder %s25, 1
      %p64 = scmp.ne.s32.totalorder %s59, %s61
      %p65 = scmp.eq.s32.totalorder %s25, 0
      %p66 = por %p64, %p65
      %p67 = scmp.ne.s32.totalorder %s59, %s61
      %p68 = scmp.eq.s32.totalorder %s30, 1
      %p69 = por %p67, %p68
      %p70 = scmp.ne.s32.totalorder %s61, %s62
      %p71 = scmp.eq.s32.totalorder %s30, 0
      %p72 = por %p70, %p71
      %p73 = scmp.ne.s32.totalorder %s61, %s62
      %p74 = scmp.eq.s32.totalorder %s31, 1
      %p75 = por %p73, %p74
      %p77 = scmp.ne.s32.totalorder %s62, %s76
      %p78 = scmp.eq.s32.totalorder %s31, 0
      %p79 = por %p77, %p78
      %s81 = sadd.s32 %s80, 1
      %p84 = scmp.eq.s32.totalorder %s25, 1
      %p85 = scmp.ne.s32.totalorder %s80, %s82
      %p86 = scmp.eq.s32.totalorder %s25, 0
      %p87 = por %p85, %p86
      %p88 = scmp.ne.s32.totalorder %s80, %s82
      %p89 = scmp.eq.s32.totalorder %s30, 1
      %p90 = por %p88, %p89
      %p91 = scmp.ne.s32.totalorder %s82, %s83
      %p92 = scmp.eq.s32.totalorder %s30, 0
      %p93 = por %p91, %p92
      %p94 = scmp.ne.s32.totalorder %s82, %s83
      %p95 = scmp.eq.s32.totalorder %s31, 1
      %p96 = por %p94, %p95
      %p98 = scmp.ne.s32.totalorder %s83, %s97
      %p99 = scmp.eq.s32.totalorder %s31, 0
      %p100 = por %p98, %p99
      %s102 = sadd.s32 %s101, 1
      %p105 = scmp.eq.s32.totalorder %s25, 1
      %p106 = scmp.ne.s32.totalorder %s101, %s103
      %p107 = scmp.eq.s32.totalorder %s25, 0
      %p108 = por %p106, %p107
      %p109 = scmp.ne.s32.totalorder %s101, %s103
      %p110 = scmp.eq.s32.totalorder %s30, 1
      %p111 = por %p109, %p110
      %p112 = scmp.ne.s32.totalorder %s103, %s104
      %p113 = scmp.eq.s32.totalorder %s30, 0
      %p114 = por %p112, %p113
      %p115 = scmp.ne.s32.totalorder %s103, %s104
      %p116 = scmp.eq.s32.totalorder %s31, 1
      %p117 = por %p115, %p116
      %p119 = scmp.ne.s32.totalorder %s104, %s118
      %p120 = scmp.eq.s32.totalorder %s31, 0
      %p121 = por %p119, %p120
      %s123 = sadd.s32 %s122, 1
      %p126 = scmp.eq.s32.totalorder %s25, 1
      %p127 = scmp.ne.s32.totalorder %s122, %s124
      %p128 = scmp.eq.s32.totalorder %s25, 0
      %p129 = por %p127, %p128
      %p130 = scmp.ne.s32.totalorder %s122, %s124
      %p131 = scmp.eq.s32.totalorder %s30, 1
      %p132 = por %p130, %p131
      %p133 = scmp.ne.s32.totalorder %s124, %s125
      %p134 = scmp.eq.s32.totalorder %s30, 0
      %p135 = por %p133, %p134
      %p136 = scmp.ne.s32.totalorder %s124, %s125
      %p137 = scmp.eq.s32.totalorder %s31, 1
      %p138 = por %p136, %p137
      %p140 = scmp.ne.s32.totalorder %s125, %s139
      %p141 = scmp.eq.s32.totalorder %s31, 0
      %p142 = por %p140, %p141
      %s144 = sadd.s32 %s143, 1
      %p147 = scmp.eq.s32.totalorder %s25, 1
      %p148 = scmp.ne.s32.totalorder %s143, %s145
      %p149 = scmp.eq.s32.totalorder %s25, 0
      %p150 = por %p148, %p149
      %p151 = scmp.ne.s32.totalorder %s143, %s145
      %p152 = scmp.eq.s32.totalorder %s30, 1
      %p153 = por %p151, %p152
      %p154 = scmp.ne.s32.totalorder %s145, %s146
      %p155 = scmp.eq.s32.totalorder %s30, 0
      %p156 = por %p154, %p155
      %p157 = scmp.ne.s32.totalorder %s145, %s146
      %p158 = scmp.eq.s32.totalorder %s31, 1
      %p159 = por %p157, %p158
      %p161 = scmp.ne.s32.totalorder %s146, %s160
      %p162 = scmp.eq.s32.totalorder %s31, 0
      %p163 = por %p161, %p162
      %s165 = sadd.s32 %s164, 1
      %p168 = scmp.eq.s32.totalorder %s25, 1
      %p169 = scmp.ne.s32.totalorder %s164, %s166
      %p170 = scmp.eq.s32.totalorder %s25, 0
      %p171 = por %p169, %p170
      %p172 = scmp.ne.s32.totalorder %s164, %s166
      %p173 = scmp.eq.s32.totalorder %s30, 1
      %p174 = por %p172, %p173
      %p175 = scmp.ne.s32.totalorder %s166, %s167
      %p176 = scmp.eq.s32.totalorder %s30, 0
      %p177 = por %p175, %p176
      %p178 = scmp.ne.s32.totalorder %s166, %s167
      %p179 = scmp.eq.s32.totalorder %s31, 1
      %p180 = por %p178, %p179
      %p182 = scmp.ne.s32.totalorder %s167, %s181
      %p183 = scmp.eq.s32.totalorder %s31, 0
      %p184 = por %p182, %p183
      %s186 = sadd.s32 %s185, 1
      %p189 = scmp.eq.s32.totalorder %s25, 1
      %p190 = scmp.ne.s32.totalorder %s185, %s187
      %p191 = scmp.eq.s32.totalorder %s25, 0
      %p192 = por %p190, %p191
      %p193 = scmp.ne.s32.totalorder %s185, %s187
      %p194 = scmp.eq.s32.totalorder %s30, 1
      %p195 = por %p193, %p194
      %p196 = scmp.ne.s32.totalorder %s187, %s188
      %p197 = scmp.eq.s32.totalorder %s30, 0
      %p198 = por %p196, %p197
      %p199 = scmp.ne.s32.totalorder %s187, %s188
      %p200 = scmp.eq.s32.totalorder %s31, 1
      %p201 = por %p199, %p200
      %p203 = scmp.ne.s32.totalorder %s188, %s202
      %p204 = scmp.eq.s32.totalorder %s31, 0
      %p205 = por %p203, %p204
      %s207 = sadd.s32 %s206, 1
      %p210 = scmp.eq.s32.totalorder %s25, 1
      %p211 = scmp.ne.s32.totalorder %s206, %s208
      %p212 = scmp.eq.s32.totalorder %s25, 0
      %p213 = por %p211, %p212
      %p214 = scmp.ne.s32.totalorder %s206, %s208
      %p215 = scmp.eq.s32.totalorder %s30, 1
      %p216 = por %p214, %p215
      %p217 = scmp.ne.s32.totalorder %s208, %s209
      %p218 = scmp.eq.s32.totalorder %s30, 0
      %p219 = por %p217, %p218
      %p220 = scmp.ne.s32.totalorder %s208, %s209
      %p221 = scmp.eq.s32.totalorder %s31, 1
      %p222 = por %p220, %p221
      %p224 = scmp.ne.s32.totalorder %s209, %s223
      %p225 = scmp.eq.s32.totalorder %s31, 0
      %p226 = por %p224, %p225
      %s228 = sadd.s32 %s227, 1
      %p231 = scmp.eq.s32.totalorder %s25, 1
      %p232 = scmp.ne.s32.totalorder %s227, %s229
      %p233 = scmp.eq.s32.totalorder %s25, 0
      %p234 = por %p232, %p233
      %p235 = scmp.ne.s32.totalorder %s227, %s229
      %p236 = scmp.eq.s32.totalorder %s30, 1
      %p237 = por %p235, %p236
      %p238 = scmp.ne.s32.totalorder %s229, %s230
      %p239 = scmp.eq.s32.totalorder %s30, 0
      %p240 = por %p238, %p239
      %p241 = scmp.ne.s32.totalorder %s229, %s230
      %p242 = scmp.eq.s32.totalorder %s31, 1
      %p243 = por %p241, %p242
      %p245 = scmp.ne.s32.totalorder %s230, %s244
      %p246 = scmp.eq.s32.totalorder %s31, 0
      %p247 = por %p245, %p246
      %s249 = sadd.s32 %s248, 1
      %p252 = scmp.eq.s32.totalorder %s25, 1
      %p253 = scmp.ne.s32.totalorder %s248, %s250
      %p254 = scmp.eq.s32.totalorder %s25, 0
      %p255 = por %p253, %p254
      %p256 = scmp.ne.s32.totalorder %s248, %s250
      %p257 = scmp.eq.s32.totalorder %s30, 1
      %p258 = por %p256, %p257
      %p259 = scmp.ne.s32.totalorder %s250, %s251
      %p260 = scmp.eq.s32.totalorder %s30, 0
      %p261 = por %p259, %p260
      %p262 = scmp.ne.s32.totalorder %s250, %s251
      %p263 = scmp.eq.s32.totalorder %s31, 1
      %p264 = por %p262, %p263
      %p266 = scmp.ne.s32.totalorder %s251, %s265
      %p267 = scmp.eq.s32.totalorder %s31, 0
      %p268 = por %p266, %p267
      %s270 = sadd.s32 %s269, 1
      %p273 = scmp.eq.s32.totalorder %s25, 1
      %p274 = scmp.ne.s32.totalorder %s269, %s271
      %p275 = scmp.eq.s32.totalorder %s25, 0
      %p276 = por %p274, %p275
      %p277 = scmp.ne.s32.totalorder %s269, %s271
      %p278 = scmp.eq.s32.totalorder %s30, 1
      %p279 = por %p277, %p278
      %p280 = scmp.ne.s32.totalorder %s271, %s272
      %p281 = scmp.eq.s32.totalorder %s30, 0
      %p282 = por %p280, %p281
      %p283 = scmp.ne.s32.totalorder %s271, %s272
      %p284 = scmp.eq.s32.totalorder %s31, 1
      %p285 = por %p283, %p284
      %p287 = scmp.ne.s32.totalorder %s272, %s286
      %p288 = scmp.eq.s32.totalorder %s31, 0
      %p289 = por %p287, %p288
      %s291 = sadd.s32 %s290, 1
      %p294 = scmp.eq.s32.totalorder %s25, 1
      %p295 = scmp.ne.s32.totalorder %s290, %s292
      %p296 = scmp.eq.s32.totalorder %s25, 0
      %p297 = por %p295, %p296
      %p298 = scmp.ne.s32.totalorder %s290, %s292
      %p299 = scmp.eq.s32.totalorder %s30, 1
      %p300 = por %p298, %p299
      %p301 = scmp.ne.s32.totalorder %s292, %s293
      %p302 = scmp.eq.s32.totalorder %s30, 0
      %p303 = por %p301, %p302
      %p304 = scmp.ne.s32.totalorder %s292, %s293
      %p305 = scmp.eq.s32.totalorder %s31, 1
      %p306 = por %p304, %p305
      %p308 = scmp.ne.s32.totalorder %s293, %s307
      %p309 = scmp.eq.s32.totalorder %s31, 0
      %p310 = por %p308, %p309
      %s312 = sadd.s32 %s311, 1
      %p315 = scmp.eq.s32.totalorder %s25, 1
      %p316 = scmp.ne.s32.totalorder %s311, %s313
      %p317 = scmp.eq.s32.totalorder %s25, 0
      %p318 = por %p316, %p317
      %p319 = scmp.ne.s32.totalorder %s311, %s313
      %p320 = scmp.eq.s32.totalorder %s30, 1
      %p321 = por %p319, %p320
      %p322 = scmp.ne.s32.totalorder %s313, %s314
      %p323 = scmp.eq.s32.totalorder %s30, 0
      %p324 = por %p322, %p323
      %p325 = scmp.ne.s32.totalorder %s313, %s314
      %p326 = scmp.eq.s32.totalorder %s31, 1
      %p327 = por %p325, %p326
      %p329 = scmp.ne.s32.totalorder %s314, %s328
      %p330 = scmp.eq.s32.totalorder %s31, 0
      %p331 = por %p329, %p330
      %s333 = sadd.s32 %s332, 1
      %p336 = scmp.eq.s32.totalorder %s25, 1
      %p337 = scmp.ne.s32.totalorder %s332, %s334
      %p338 = scmp.eq.s32.totalorder %s25, 0
      %p339 = por %p337, %p338
      %p340 = scmp.ne.s32.totalorder %s332, %s334
      %p341 = scmp.eq.s32.totalorder %s30, 1
      %p342 = por %p340, %p341
      %p343 = scmp.ne.s32.totalorder %s334, %s335
      %p344 = scmp.eq.s32.totalorder %s30, 0
      %p345 = por %p343, %p344
      %p346 = scmp.ne.s32.totalorder %s334, %s335
      %p347 = scmp.eq.s32.totalorder %s31, 1
      %p348 = por %p346, %p347
      %p350 = scmp.ne.s32.totalorder %s335, %s349
      %p351 = scmp.eq.s32.totalorder %s31, 0
      %p352 = por %p350, %p351
      %s354 = sadd.s32 %s353, 1
      %p357 = scmp.eq.s32.totalorder %s25, 1
      %p358 = scmp.ne.s32.totalorder %s353, %s355
      %p359 = scmp.eq.s32.totalorder %s25, 0
      %p360 = por %p358, %p359
      %p361 = scmp.ne.s32.totalorder %s353, %s355
      %p362 = scmp.eq.s32.totalorder %s30, 1
      %p363 = por %p361, %p362
      %p364 = scmp.ne.s32.totalorder %s355, %s356
      %p365 = scmp.eq.s32.totalorder %s30, 0
      %p366 = por %p364, %p365
      %p367 = scmp.ne.s32.totalorder %s355, %s356
      %p368 = scmp.eq.s32.totalorder %s31, 1
      %p369 = por %p367, %p368
      %p371 = scmp.ne.s32.totalorder %s356, %s370
      %p372 = scmp.eq.s32.totalorder %s31, 0
      %p373 = por %p371, %p372
      %s374 = ssub.s32 %s25, %s32
      %p375 = scmp.eq.s32.totalorder %s374, 0
      %s377 = sadd.s32 %s376, 1
      %s378 = scalar_select %p375, %s376, %s377
      %p381 = pneg %p375
      %p382 = scmp.eq.s32.totalorder %s25, 1
      %p383 = por %p381, %p382
      %p384 = scmp.ne.s32.totalorder %s376, %s379
      %p385 = scmp.eq.s32.totalorder %s25, 0
      %p386 = por %p384, %p385
      %p387 = scmp.ne.s32.totalorder %s376, %s379
      %p388 = scmp.eq.s32.totalorder %s30, 1
      %p389 = por %p387, %p388
      %p390 = scmp.ne.s32.totalorder %s379, %s380
      %p391 = scmp.eq.s32.totalorder %s30, 0
      %p392 = por %p390, %p391
      %p393 = scmp.ne.s32.totalorder %s379, %s380
      %p394 = scmp.eq.s32.totalorder %s31, 1
      %p395 = por %p393, %p394
      %p397 = scmp.ne.s32.totalorder %s380, %s396
      %p398 = scmp.eq.s32.totalorder %s31, 0
      %p399 = por %p397, %p398
      %p400 = scmp.le.s32.totalorder 1, %s25
      %p401 = scmp.lt.s32.totalorder %s25, 3
      %p402 = pnand %p400, %p401
      %p403 = pneg %p402
      // Predicated region
      $region9: #{tpu_custom_call.1} parent=5 // pred_check
        _
      $region10: #{tpu_custom_call.1} parent=5 // pred_check_branch
        %405 = sbr.rel (%p402) target = $region12
      $region11: #{tpu_custom_call.1} parent=5 // pred_region
        %s406 = ssub.s32 %s25, 1
        // Predicated region
        $region13: #{tpu_custom_call.1} parent=11 // pred_check
          %p407 = pneg %p72
        $region14: #{tpu_custom_call.1} parent=11 // pred_check_branch
          %409 = sbr.rel (%p407) target = $region16
        $region15: #{tpu_custom_call.1} parent=11 // pred_region
          _
        $region16: #{tpu_custom_call.1} parent=11 // pred_fallthru
          _
        // Predicated region
        $region17: #{tpu_custom_call.1} parent=11 // pred_check
          %p410 = pneg %p93
        $region18: #{tpu_custom_call.1} parent=11 // pred_check_branch
          %412 = sbr.rel (%p410) target = $region20
        $region19: #{tpu_custom_call.1} parent=11 // pred_region
          _
        $region20: #{tpu_custom_call.1} parent=11 // pred_fallthru
          _
        // Predicated region
        $region21: #{tpu_custom_call.1} parent=11 // pred_check
          %p413 = pneg %p114
        $region22: #{tpu_custom_call.1} parent=11 // pred_check_branch
          %415 = sbr.rel (%p413) target = $region24
        $region23: #{tpu_custom_call.1} parent=11 // pred_region
          _
        $region24: #{tpu_custom_call.1} parent=11 // pred_fallthru
          _
        // Predicated region
        $region25: #{tpu_custom_call.1} parent=11 // pred_check
          %p416 = pneg %p135
        $region26: #{tpu_custom_call.1} parent=11 // pred_check_branch
          %418 = sbr.rel (%p416) target = $region28
        $region27: #{tpu_custom_call.1} parent=11 // pred_region
          _
        $region28: #{tpu_custom_call.1} parent=11 // pred_fallthru
          _
        // Predicated region
        $region29: #{tpu_custom_call.1} parent=11 // pred_check
          %p419 = pneg %p156
        $region30: #{tpu_custom_call.1} parent=11 // pred_check_branch
          %421 = sbr.rel (%p419) target = $region32
        $region31: #{tpu_custom_call.1} parent=11 // pred_region
          _
        $region32: #{tpu_custom_call.1} parent=11 // pred_fallthru
          _
        // Predicated region
        $region33: #{tpu_custom_call.1} parent=11 // pred_check
          %p422 = pneg %p177
        $region34: #{tpu_custom_call.1} parent=11 // pred_check_branch
          %424 = sbr.rel (%p422) target = $region36
        $region35: #{tpu_custom_call.1} parent=11 // pred_region
          _
        $region36: #{tpu_custom_call.1} parent=11 // pred_fallthru
          _
        // Predicated region
        $region37: #{tpu_custom_call.1} parent=11 // pred_check
          %p425 = pneg %p198
        $region38: #{tpu_custom_call.1} parent=11 // pred_check_branch
          %427 = sbr.rel (%p425) target = $region40
        $region39: #{tpu_custom_call.1} parent=11 // pred_region
          _
        $region40: #{tpu_custom_call.1} parent=11 // pred_fallthru
          _
        // Predicated region
        $region41: #{tpu_custom_call.1} parent=11 // pred_check
          %p428 = pneg %p219
        $region42: #{tpu_custom_call.1} parent=11 // pred_check_branch
          %430 = sbr.rel (%p428) target = $region44
        $region43: #{tpu_custom_call.1} parent=11 // pred_region
          _
        $region44: #{tpu_custom_call.1} parent=11 // pred_fallthru
          _
        // Predicated region
        $region45: #{tpu_custom_call.1} parent=11 // pred_check
          %p431 = pneg %p240
        $region46: #{tpu_custom_call.1} parent=11 // pred_check_branch
          %433 = sbr.rel (%p431) target = $region48
        $region47: #{tpu_custom_call.1} parent=11 // pred_region
          _
        $region48: #{tpu_custom_call.1} parent=11 // pred_fallthru
          _
        // Predicated region
        $region49: #{tpu_custom_call.1} parent=11 // pred_check
          %p434 = pneg %p261
        $region50: #{tpu_custom_call.1} parent=11 // pred_check_branch
          %436 = sbr.rel (%p434) target = $region52
        $region51: #{tpu_custom_call.1} parent=11 // pred_region
          _
        $region52: #{tpu_custom_call.1} parent=11 // pred_fallthru
          _
        // Predicated region
        $region53: #{tpu_custom_call.1} parent=11 // pred_check
          %p437 = pneg %p282
        $region54: #{tpu_custom_call.1} parent=11 // pred_check_branch
          %439 = sbr.rel (%p437) target = $region56
        $region55: #{tpu_custom_call.1} parent=11 // pred_region
          _
        $region56: #{tpu_custom_call.1} parent=11 // pred_fallthru
          _
        // Predicated region
        $region57: #{tpu_custom_call.1} parent=11 // pred_check
          %p440 = pneg %p303
        $region58: #{tpu_custom_call.1} parent=11 // pred_check_branch
          %442 = sbr.rel (%p440) target = $region60
        $region59: #{tpu_custom_call.1} parent=11 // pred_region
          _
        $region60: #{tpu_custom_call.1} parent=11 // pred_fallthru
          _
        // Predicated region
        $region61: #{tpu_custom_call.1} parent=11 // pred_check
          %p443 = pneg %p324
        $region62: #{tpu_custom_call.1} parent=11 // pred_check_branch
          %445 = sbr.rel (%p443) target = $region64
        $region63: #{tpu_custom_call.1} parent=11 // pred_region
          _
        $region64: #{tpu_custom_call.1} parent=11 // pred_fallthru
          _
        // Predicated region
        $region65: #{tpu_custom_call.1} parent=11 // pred_check
          %p446 = pneg %p345
        $region66: #{tpu_custom_call.1} parent=11 // pred_check_branch
          %448 = sbr.rel (%p446) target = $region68
        $region67: #{tpu_custom_call.1} parent=11 // pred_region
          _
        $region68: #{tpu_custom_call.1} parent=11 // pred_fallthru
          _
        // Predicated region
        $region69: #{tpu_custom_call.1} parent=11 // pred_check
          %p449 = pneg %p366
        $region70: #{tpu_custom_call.1} parent=11 // pred_check_branch
          %451 = sbr.rel (%p449) target = $region72
        $region71: #{tpu_custom_call.1} parent=11 // pred_region
          _
        $region72: #{tpu_custom_call.1} parent=11 // pred_fallthru
          _
      $region12: #{tpu_custom_call.1} parent=5 // pred_fallthru
        _
      %p452 = scmp.lt.s32.totalorder %s25, 2
      // Predicated region
      $region73: #{tpu_custom_call.1} parent=5 // pred_check
        %p453 = pneg %p452
      $region74: #{tpu_custom_call.1} parent=5 // pred_check_branch
        %455 = sbr.rel (%p453) target = $region76
      $region75: #{tpu_custom_call.1} parent=5 // pred_region
        // Predicated region
        $region77: #{tpu_custom_call.1} parent=75 // pred_check
          %p456 = pneg %p45
        $region78: #{tpu_custom_call.1} parent=75 // pred_check_branch
          %458 = sbr.rel (%p456) target = $region80
        $region79: #{tpu_custom_call.1} parent=75 // pred_region
          %p459 = scmp.lt.s32.totalorder %s25, 1
          %s460 = scalar_select %p459, %s25, 1
          %s461 = smul.addr %s460, 8
          %s462 = scalar_lea.vmem %s0, %s461
        $region80: #{tpu_custom_call.1} parent=75 // pred_fallthru
          _
      $region76: #{tpu_custom_call.1} parent=5 // pred_fallthru
        _
      %p463 = scmp.le.s32.totalorder 1, %s25
      %p464 = scmp.lt.s32.totalorder %s25, 3
      %p465 = pnand %p463, %p464
      %p466 = pneg %p465
      // Predicated region
      $region81: #{tpu_custom_call.1} parent=5 // pred_check
        _
      $region82: #{tpu_custom_call.1} parent=5 // pred_check_branch
        %468 = sbr.rel (%p465) target = $region84
      $region83: #{tpu_custom_call.1} parent=5 // pred_region
        %s469 = ssub.s32 %s25, 1
        %p470 = scmp.lt.s32.totalorder %s30, 1
        %s471 = scalar_select %p470, %s30, 1
        %s472 = smul.addr %s471, 8
        %s473 = scalar_lea.vmem %s0, %s472
        %p474 = pneg %p51
        %p475 = pneg %p48
        %p476 = pneg %p72
        %p477 = pneg %p69
        %p478 = pneg %p93
        %p479 = pneg %p90
        %p480 = pneg %p114
        %p481 = pneg %p111
        %p482 = pneg %p135
        %p483 = pneg %p132
        %p484 = pneg %p156
        %p485 = pneg %p153
        %p486 = pneg %p177
        %p487 = pneg %p174
        %p488 = pneg %p198
        %p489 = pneg %p195
        %p490 = pneg %p219
        %p491 = pneg %p216
        %p492 = pneg %p240
        %p493 = pneg %p237
        %p494 = pneg %p261
        %p495 = pneg %p258
        %p496 = pneg %p282
        %p497 = pneg %p279
        %p498 = pneg %p303
        %p499 = pneg %p300
        %p500 = pneg %p324
        %p501 = pneg %p321
        %p502 = pneg %p345
        %p503 = pneg %p342
        %p504 = pneg %p366
        %p505 = pneg %p363
        %p506 = pneg %p392
        %p507 = pneg %p389
        %s508 = sand.u32 %s379, 1
        %s509 = scalar_lea.sflag [#allocation3], %s508
        %s510 = sand.u32 %s379, 1
        %s511 = smul.addr %s510, 8
        %s512 = scalar_lea.vmem [#allocation2], %s511
        %p513 = scmp.lt.s32.totalorder %s30, 1
        %s514 = scalar_select %p513, %s30, 1
        %s515 = smul.addr %s514, 8
        %s516 = scalar_lea.vmem %s0, %s515
        %v517 = vld [vmem:[%s516] sm:$0xff]
        %v518 = vld [vmem:[%s1] sm:$0x1]
        %v519 = vld [vmem:[%s2] sm:$0x1]
        %vm520 = vcmask 261120
        %v521 = vsel %vm520, %v517, 0.0
        %522 = vadd.xlane.f32.xlu0 %v521
        %v523 = vpop.xlane.xlu0 %522
        %v524 = vrcp.pop 32.0
        %v525 = vmul.f32 %v523, %v524
        %v526 = vsub.f32 %v517, %v525
        %v527 = vmul.f32 %v526, %v526
        %v528 = vsel %vm520, %v527, 0.0
        %529 = vadd.xlane.f32.xlu0 %v528
        %v530 = vpop.xlane.xlu0 %529
        %v531 = vmul.f32 %v530, %v524
        %v532 = vadd.f32 %v531, 1e-05
        %v533 = vrsqrt.pop %v532
        %v534 = vmul.f32 %v526, %v533
        %v536 = vlaneseq
        %v537 = vshrl.u32 %v536, 7
        %v538 = vsub.s32 0, %v537
        %v539 = vrot.slane %v518, %v538
        %v541 = vmul.f32 %v534, %v539
        %v543 = vlaneseq
        %v544 = vshrl.u32 %v543, 7
        %v545 = vsub.s32 0, %v544
        %v546 = vrot.slane %v519, %v545
        %v548 = vadd.f32 %v541, %v546
        %v549 = vld [vmem:[%s3] sm:$0xff]
        %v550 = vld [vmem:[%s3 + $0x8] sm:$0xff]
        %v551 = vld [vmem:[%s3 + $0x10] sm:$0xff]
        %v552 = vld [vmem:[%s3 + $0x18] sm:$0xff]
        %v553 = vld [vmem:[%s3 + $0x20] sm:$0xff]
        %v554 = vld [vmem:[%s3 + $0x28] sm:$0xff]
        %v555 = vld [vmem:[%s3 + $0x30] sm:$0xff]
        %v556 = vld [vmem:[%s3 + $0x38] sm:$0xff]
        %v557 = vld [vmem:[%s3 + $0x40] sm:$0xff]
        %v558 = vld [vmem:[%s3 + $0x48] sm:$0xff]
        %v559 = vld [vmem:[%s3 + $0x50] sm:$0xff]
        %v560 = vld [vmem:[%s3 + $0x58] sm:$0xff]
        %v561 = vld [vmem:[%s3 + $0x60] sm:$0xff]
        %v562 = vld [vmem:[%s3 + $0x68] sm:$0xff]
        %v563 = vld [vmem:[%s3 + $0x70] sm:$0xff]
        %v564 = vld [vmem:[%s3 + $0x78] sm:$0xff]
        %v565 = vld [vmem:[%s4] sm:$0x1]
        %v566 = vld [vmem:[%s4 + $0x1] sm:$0x1]
        %v567 = vld [vmem:[%s4 + $0x2] sm:$0x1]
        %v568 = vld [vmem:[%s4 + $0x3] sm:$0x1]
        %v573 = vlaneseq
        %v574 = vshrl.u32 %v573, 7
        %v575 = vsub.s32 0, %v574
        %v576 = vrot.slane %v565, %v575
        %v577 = vlaneseq
        %v578 = vshrl.u32 %v577, 7
        %v579 = vsub.s32 0, %v578
        %v580 = vrot.slane %v566, %v579
        %v581 = vlaneseq
        %v582 = vshrl.u32 %v581, 7
        %v583 = vsub.s32 0, %v582
        %v584 = vrot.slane %v567, %v583
        %v585 = vlaneseq
        %v586 = vshrl.u32 %v585, 7
        %v587 = vsub.s32 0, %v586
        %v588 = vrot.slane %v568, %v587
        %v594 = vsel %vm520, %v548, 0
        %596 = vmatprep.subr.mxu0 0.0
        %597 = vmatpush1.msra.mxu0 0.0
        %598 = vmatprep.subr.mxu0 0.0
        %599 = vmatpush1.msra.mxu0 0.0
        %600 = vmatprep.subr.mxu0 0.0
        %601 = vmatpush1.msra.mxu0 0.0
        %602 = vmatprep.subr.mxu0 0.0
        %603 = vmatpush1.msra.mxu0 0.0
        %604 = vmatprep.subr.mxu0 0.0
        %605 = vmatpush1.msra.mxu0 0.0
        %606 = vmatprep.subr.mxu0 0.0
        %607 = vmatpush1.msra.mxu0 0.0
        %608 = vmatprep.subr.mxu0 0.0
        %609 = vmatpush1.msra.mxu0 0.0
        %610 = vmatprep.subr.mxu0 0.0
        %611 = vmatpush1.msra.mxu0 0.0
        %612 = vmatprep.subr.mxu0 0.0
        %613 = vmatpush1.msra.mxu0 0.0
        %614 = vmatprep.subr.mxu0 0.0
        %615 = vmatpush1.msra.mxu0 0.0
        %616 = vmatprep.subr.mxu0 0.0
        %617 = vmatpush1.msra.mxu0 0.0
        %618 = vmatprep.subr.mxu0 0.0
        %619 = vmatpush1.msra.mxu0 0.0
        %620 = vmatprep.subr.mxu0 0.0
        %621 = vmatpush1.msra.mxu0 %v552
        %622 = vmatprep.subr.mxu0 0.0
        %623 = vmatpush1.msra.mxu0 %v551
        %624 = vmatprep.subr.mxu0 0.0
        %625 = vmatpush1.msra.mxu0 %v550
        %626 = vmatprep.subr.mxu0 0.0
        %627 = vmatpush1.msra.mxu0 %v549
        %628 = vmatprep.subr.mxu0 0.0
        %629 = vmatpush2.msra.mxu0 0.0
        %630 = vmatprep.subr.mxu0 0.0
        %631 = vmatpush2.msra.mxu0 0.0
        %632 = vmatprep.subr.mxu0 0.0
        %633 = vmatpush2.msra.mxu0 0.0
        %634 = vmatprep.subr.mxu0 0.0
        %635 = vmatpush2.msra.mxu0 0.0
        %636 = vmatprep.subr.mxu0 0.0
        %637 = vmatpush2.msra.mxu0 0.0
        %638 = vmatprep.subr.mxu0 0.0
        %639 = vmatpush2.msra.mxu0 0.0
        %640 = vmatprep.subr.mxu0 0.0
        %641 = vmatpush2.msra.mxu0 0.0
        %642 = vmatprep.subr.mxu0 0.0
        %643 = vmatpush2.msra.mxu0 0.0
        %644 = vmatprep.subr.mxu0 0.0
        %645 = vmatpush2.msra.mxu0 0.0
        %646 = vmatprep.subr.mxu0 0.0
        %647 = vmatpush2.msra.mxu0 0.0
        %648 = vmatprep.subr.mxu0 0.0
        %649 = vmatpush2.msra.mxu0 0.0
        %650 = vmatprep.subr.mxu0 0.0
        %651 = vmatpush2.msra.mxu0 0.0
        %652 = vmatprep.subr.mxu0 0.0
        %653 = vmatpush2.msra.mxu0 0.0
        %654 = vmatprep.subr.mxu0 0.0
        %655 = vmatpush2.msra.mxu0 0.0
        %656 = vmatprep.subr.mxu0 0.0
        %657 = vmatpush2.msra.mxu0 0.0
        %658 = vmatprep.subr.mxu0 0.0
        %659 = vmatpush2.msra.mxu0 0.0
        %660 = vmatprep.mubr.f32.mxu0 0.0
        %661 = vmatmul.mubr.f32.gmra.mxu0 %v594
        %v662 = vpop.f32.mrf.mxu0
        %v663 = vadd.f32 %v576, %v662
        %v664 = vpop.f32.mrf.mxu0
        %665 = vdwg.mxu0
        %666 = vmatprep.subr.mxu0 0.0
        %667 = vmatpush1.msra.mxu0 0.0
        %668 = vmatprep.subr.mxu0 0.0
        %669 = vmatpush1.msra.mxu0 0.0
        %670 = vmatprep.subr.mxu0 0.0
        %671 = vmatpush1.msra.mxu0 0.0
        %672 = vmatprep.subr.mxu0 0.0
        %673 = vmatpush1.msra.mxu0 0.0
        %674 = vmatprep.subr.mxu0 0.0
        %675 = vmatpush1.msra.mxu0 0.0
        %676 = vmatprep.subr.mxu0 0.0
        %677 = vmatpush1.msra.mxu0 0.0
        %678 = vmatprep.subr.mxu0 0.0
        %679 = vmatpush1.msra.mxu0 0.0
        %680 = vmatprep.subr.mxu0 0.0
        %681 = vmatpush1.msra.mxu0 0.0
        %682 = vmatprep.subr.mxu0 0.0
        %683 = vmatpush1.msra.mxu0 0.0
        %684 = vmatprep.subr.mxu0 0.0
        %685 = vmatpush1.msra.mxu0 0.0
        %686 = vmatprep.subr.mxu0 0.0
        %687 = vmatpush1.msra.mxu0 0.0
        %688 = vmatprep.subr.mxu0 0.0
        %689 = vmatpush1.msra.mxu0 0.0
        %690 = vmatprep.subr.mxu0 0.0
        %691 = vmatpush1.msra.mxu0 %v556
        %692 = vmatprep.subr.mxu0 0.0
        %693 = vmatpush1.msra.mxu0 %v555
        %694 = vmatprep.subr.mxu0 0.0
        %695 = vmatpush1.msra.mxu0 %v554
        %696 = vmatprep.subr.mxu0 0.0
        %697 = vmatpush1.msra.mxu0 %v553
        %698 = vmatprep.subr.mxu0 0.0
        %699 = vmatpush2.msra.mxu0 0.0
        %700 = vmatprep.subr.mxu0 0.0
        %701 = vmatpush2.msra.mxu0 0.0
        %702 = vmatprep.subr.mxu0 0.0
        %703 = vmatpush2.msra.mxu0 0.0
        %704 = vmatprep.subr.mxu0 0.0
        %705 = vmatpush2.msra.mxu0 0.0
        %706 = vmatprep.subr.mxu0 0.0
        %707 = vmatpush2.msra.mxu0 0.0
        %708 = vmatprep.subr.mxu0 0.0
        %709 = vmatpush2.msra.mxu0 0.0
        %710 = vmatprep.subr.mxu0 0.0
        %711 = vmatpush2.msra.mxu0 0.0
        %712 = vmatprep.subr.mxu0 0.0
        %713 = vmatpush2.msra.mxu0 0.0
        %714 = vmatprep.subr.mxu0 0.0
        %715 = vmatpush2.msra.mxu0 0.0
        %716 = vmatprep.subr.mxu0 0.0
        %717 = vmatpush2.msra.mxu0 0.0
        %718 = vmatprep.subr.mxu0 0.0
        %719 = vmatpush2.msra.mxu0 0.0
        %720 = vmatprep.subr.mxu0 0.0
        %721 = vmatpush2.msra.mxu0 0.0
        %722 = vmatprep.subr.mxu0 0.0
        %723 = vmatpush2.msra.mxu0 0.0
        %724 = vmatprep.subr.mxu0 0.0
        %725 = vmatpush2.msra.mxu0 0.0
        %726 = vmatprep.subr.mxu0 0.0
        %727 = vmatpush2.msra.mxu0 0.0
        %728 = vmatprep.subr.mxu0 0.0
        %729 = vmatpush2.msra.mxu0 0.0
        %730 = vmatprep.mubr.f32.mxu0 0.0
        %731 = vmatmul.mubr.f32.gmra.mxu0 %v594
        %v732 = vpop.f32.mrf.mxu0
        %v733 = vadd.f32 %v580, %v732
        %v734 = vpop.f32.mrf.mxu0
        %735 = vdwg.mxu0
        %736 = vmatprep.subr.mxu0 0.0
        %737 = vmatpush1.msra.mxu0 0.0
        %738 = vmatprep.subr.mxu0 0.0
        %739 = vmatpush1.msra.mxu0 0.0
        %740 = vmatprep.subr.mxu0 0.0
        %741 = vmatpush1.msra.mxu0 0.0
        %742 = vmatprep.subr.mxu0 0.0
        %743 = vmatpush1.msra.mxu0 0.0
        %744 = vmatprep.subr.mxu0 0.0
        %745 = vmatpush1.msra.mxu0 0.0
        %746 = vmatprep.subr.mxu0 0.0
        %747 = vmatpush1.msra.mxu0 0.0
        %748 = vmatprep.subr.mxu0 0.0
        %749 = vmatpush1.msra.mxu0 0.0
        %750 = vmatprep.subr.mxu0 0.0
        %751 = vmatpush1.msra.mxu0 0.0
        %752 = vmatprep.subr.mxu0 0.0
        %753 = vmatpush1.msra.mxu0 0.0
        %754 = vmatprep.subr.mxu0 0.0
        %755 = vmatpush1.msra.mxu0 0.0
        %756 = vmatprep.subr.mxu0 0.0
        %757 = vmatpush1.msra.mxu0 0.0
        %758 = vmatprep.subr.mxu0 0.0
        %759 = vmatpush1.msra.mxu0 0.0
        %760 = vmatprep.subr.mxu0 0.0
        %761 = vmatpush1.msra.mxu0 %v560
        %762 = vmatprep.subr.mxu0 0.0
        %763 = vmatpush1.msra.mxu0 %v559
        %764 = vmatprep.subr.mxu0 0.0
        %765 = vmatpush1.msra.mxu0 %v558
        %766 = vmatprep.subr.mxu0 0.0
        %767 = vmatpush1.msra.mxu0 %v557
        %768 = vmatprep.subr.mxu0 0.0
        %769 = vmatpush2.msra.mxu0 0.0
        %770 = vmatprep.subr.mxu0 0.0
        %771 = vmatpush2.msra.mxu0 0.0
        %772 = vmatprep.subr.mxu0 0.0
        %773 = vmatpush2.msra.mxu0 0.0
        %774 = vmatprep.subr.mxu0 0.0
        %775 = vmatpush2.msra.mxu0 0.0
        %776 = vmatprep.subr.mxu0 0.0
        %777 = vmatpush2.msra.mxu0 0.0
        %778 = vmatprep.subr.mxu0 0.0
        %779 = vmatpush2.msra.mxu0 0.0
        %780 = vmatprep.subr.mxu0 0.0
        %781 = vmatpush2.msra.mxu0 0.0
        %782 = vmatprep.subr.mxu0 0.0
        %783 = vmatpush2.msra.mxu0 0.0
        %784 = vmatprep.subr.mxu0 0.0
        %785 = vmatpush2.msra.mxu0 0.0
        %786 = vmatprep.subr.mxu0 0.0
        %787 = vmatpush2.msra.mxu0 0.0
        %788 = vmatprep.subr.mxu0 0.0
        %789 = vmatpush2.msra.mxu0 0.0
        %790 = vmatprep.subr.mxu0 0.0
        %791 = vmatpush2.msra.mxu0 0.0
        %792 = vmatprep.subr.mxu0 0.0
        %793 = vmatpush2.msra.mxu0 0.0
        %794 = vmatprep.subr.mxu0 0.0
        %795 = vmatpush2.msra.mxu0 0.0
        %796 = vmatprep.subr.mxu0 0.0
        %797 = vmatpush2.msra.mxu0 0.0
        %798 = vmatprep.subr.mxu0 0.0
        %799 = vmatpush2.msra.mxu0 0.0
        %800 = vmatprep.mubr.f32.mxu0 0.0
        %801 = vmatmul.mubr.f32.gmra.mxu0 %v594
        %v802 = vpop.f32.mrf.mxu0
        %v803 = vadd.f32 %v584, %v802
        %v804 = vpop.f32.mrf.mxu0
        %805 = vdwg.mxu0
        %806 = vmatprep.subr.mxu0 0.0
        %807 = vmatpush1.msra.mxu0 0.0
        %808 = vmatprep.subr.mxu0 0.0
        %809 = vmatpush1.msra.mxu0 0.0
        %810 = vmatprep.subr.mxu0 0.0
        %811 = vmatpush1.msra.mxu0 0.0
        %812 = vmatprep.subr.mxu0 0.0
        %813 = vmatpush1.msra.mxu0 0.0
        %814 = vmatprep.subr.mxu0 0.0
        %815 = vmatpush1.msra.mxu0 0.0
        %816 = vmatprep.subr.mxu0 0.0
        %817 = vmatpush1.msra.mxu0 0.0
        %818 = vmatprep.subr.mxu0 0.0
        %819 = vmatpush1.msra.mxu0 0.0
        %820 = vmatprep.subr.mxu0 0.0
        %821 = vmatpush1.msra.mxu0 0.0
        %822 = vmatprep.subr.mxu0 0.0
        %823 = vmatpush1.msra.mxu0 0.0
        %824 = vmatprep.subr.mxu0 0.0
        %825 = vmatpush1.msra.mxu0 0.0
        %826 = vmatprep.subr.mxu0 0.0
        %827 = vmatpush1.msra.mxu0 0.0
        %828 = vmatprep.subr.mxu0 0.0
        %829 = vmatpush1.msra.mxu0 0.0
        %830 = vmatprep.subr.mxu0 0.0
        %831 = vmatpush1.msra.mxu0 %v564
        %832 = vmatprep.subr.mxu0 0.0
        %833 = vmatpush1.msra.mxu0 %v563
        %834 = vmatprep.subr.mxu0 0.0
        %835 = vmatpush1.msra.mxu0 %v562
        %836 = vmatprep.subr.mxu0 0.0
        %837 = vmatpush1.msra.mxu0 %v561
        %838 = vmatprep.subr.mxu0 0.0
        %839 = vmatpush2.msra.mxu0 0.0
        %840 = vmatprep.subr.mxu0 0.0
        %841 = vmatpush2.msra.mxu0 0.0
        %842 = vmatprep.subr.mxu0 0.0
        %843 = vmatpush2.msra.mxu0 0.0
        %844 = vmatprep.subr.mxu0 0.0
        %845 = vmatpush2.msra.mxu0 0.0
        %846 = vmatprep.subr.mxu0 0.0
        %847 = vmatpush2.msra.mxu0 0.0
        %848 = vmatprep.subr.mxu0 0.0
        %849 = vmatpush2.msra.mxu0 0.0
        %850 = vmatprep.subr.mxu0 0.0
        %851 = vmatpush2.msra.mxu0 0.0
        %852 = vmatprep.subr.mxu0 0.0
        %853 = vmatpush2.msra.mxu0 0.0
        %854 = vmatprep.subr.mxu0 0.0
        %855 = vmatpush2.msra.mxu0 0.0
        %856 = vmatprep.subr.mxu0 0.0
        %857 = vmatpush2.msra.mxu0 0.0
        %858 = vmatprep.subr.mxu0 0.0
        %859 = vmatpush2.msra.mxu0 0.0
        %860 = vmatprep.subr.mxu0 0.0
        %861 = vmatpush2.msra.mxu0 0.0
        %862 = vmatprep.subr.mxu0 0.0
        %863 = vmatpush2.msra.mxu0 0.0
        %864 = vmatprep.subr.mxu0 0.0
        %865 = vmatpush2.msra.mxu0 0.0
        %866 = vmatprep.subr.mxu0 0.0
        %867 = vmatpush2.msra.mxu0 0.0
        %868 = vmatprep.subr.mxu0 0.0
        %869 = vmatpush2.msra.mxu0 0.0
        %870 = vmatprep.mubr.f32.mxu0 0.0
        %871 = vmatmul.mubr.f32.gmra.mxu0 %v594
        %v872 = vpop.f32.mrf.mxu0
        %v873 = vadd.f32 %v588, %v872
        %v874 = vpop.f32.mrf.mxu0
        %875 = vdwg.mxu0
        %v876 = vld [vmem:[%s5] sm:$0xff]
        %v877 = vld [vmem:[%s5 + $0x8] sm:$0xff]
        %v878 = vld [vmem:[%s5 + $0x10] sm:$0xff]
        %v879 = vld [vmem:[%s5 + $0x18] sm:$0xff]
        %vm880 = vcmask 64512
        %v882 = vsel %vm880, %v663, 0
        %884 = vmatprep.subr.mxu0 0.0
        %885 = vmatpush1.msra.mxu0 0.0
        %886 = vmatprep.subr.mxu0 0.0
        %887 = vmatpush1.msra.mxu0 0.0
        %888 = vmatprep.subr.mxu0 0.0
        %889 = vmatpush1.msra.mxu0 0.0
        %890 = vmatprep.subr.mxu0 0.0
        %891 = vmatpush1.msra.mxu0 0.0
        %892 = vmatprep.subr.mxu0 0.0
        %893 = vmatpush1.msra.mxu0 0.0
        %894 = vmatprep.subr.mxu0 0.0
        %895 = vmatpush1.msra.mxu0 0.0
        %896 = vmatprep.subr.mxu0 0.0
        %897 = vmatpush1.msra.mxu0 0.0
        %898 = vmatprep.subr.mxu0 0.0
        %899 = vmatpush1.msra.mxu0 0.0
        %900 = vmatprep.subr.mxu0 0.0
        %901 = vmatpush1.msra.mxu0 0.0
        %902 = vmatprep.subr.mxu0 0.0
        %903 = vmatpush1.msra.mxu0 0.0
        %904 = vmatprep.subr.mxu0 0.0
        %905 = vmatpush1.msra.mxu0 0.0
        %906 = vmatprep.subr.mxu0 0.0
        %907 = vmatpush1.msra.mxu0 0.0
        %908 = vmatprep.subr.mxu0 0.0
        %909 = vmatpush1.msra.mxu0 0.0
        %910 = vmatprep.subr.mxu0 0.0
        %911 = vmatpush1.msra.mxu0 0.0
        %912 = vmatprep.subr.mxu0 0.0
        %913 = vmatpush1.msra.mxu0 0.0
        %914 = vmatprep.subr.mxu0 0.0
        %915 = vmatpush1.msra.mxu0 %v876
        %916 = vmatprep.subr.mxu0 0.0
        %917 = vmatpush2.msra.mxu0 0.0
        %918 = vmatprep.subr.mxu0 0.0
        %919 = vmatpush2.msra.mxu0 0.0
        %920 = vmatprep.subr.mxu0 0.0
        %921 = vmatpush2.msra.mxu0 0.0
        %922 = vmatprep.subr.mxu0 0.0
        %923 = vmatpush2.msra.mxu0 0.0
        %924 = vmatprep.subr.mxu0 0.0
        %925 = vmatpush2.msra.mxu0 0.0
        %926 = vmatprep.subr.mxu0 0.0
        %927 = vmatpush2.msra.mxu0 0.0
        %928 = vmatprep.subr.mxu0 0.0
        %929 = vmatpush2.msra.mxu0 0.0
        %930 = vmatprep.subr.mxu0 0.0
        %931 = vmatpush2.msra.mxu0 0.0
        %932 = vmatprep.subr.mxu0 0.0
        %933 = vmatpush2.msra.mxu0 0.0
        %934 = vmatprep.subr.mxu0 0.0
        %935 = vmatpush2.msra.mxu0 0.0
        %936 = vmatprep.subr.mxu0 0.0
        %937 = vmatpush2.msra.mxu0 0.0
        %938 = vmatprep.subr.mxu0 0.0
        %939 = vmatpush2.msra.mxu0 0.0
        %940 = vmatprep.subr.mxu0 0.0
        %941 = vmatpush2.msra.mxu0 0.0
        %942 = vmatprep.subr.mxu0 0.0
        %943 = vmatpush2.msra.mxu0 0.0
        %944 = vmatprep.subr.mxu0 0.0
        %945 = vmatpush2.msra.mxu0 0.0
        %946 = vmatprep.subr.mxu0 0.0
        %947 = vmatpush2.msra.mxu0 0.0
        %948 = vmatprep.mubr.f32.mxu0 0.0
        %949 = vmatmul.mubr.f32.gmra.mxu0 %v882
        %v950 = vpop.f32.mrf.mxu0
        %v951 = vadd.f32 0.0, %v950
        %v952 = vpop.f32.mrf.mxu0
        %953 = vdwg.mxu0
        %v955 = vsel %vm880, %v733, 0
        %957 = vmatprep.subr.mxu0 0.0
        %958 = vmatpush1.msra.mxu0 0.0
        %959 = vmatprep.subr.mxu0 0.0
        %960 = vmatpush1.msra.mxu0 0.0
        %961 = vmatprep.subr.mxu0 0.0
        %962 = vmatpush1.msra.mxu0 0.0
        %963 = vmatprep.subr.mxu0 0.0
        %964 = vmatpush1.msra.mxu0 0.0
        %965 = vmatprep.subr.mxu0 0.0
        %966 = vmatpush1.msra.mxu0 0.0
        %967 = vmatprep.subr.mxu0 0.0
        %968 = vmatpush1.msra.mxu0 0.0
        %969 = vmatprep.subr.mxu0 0.0
        %970 = vmatpush1.msra.mxu0 0.0
        %971 = vmatprep.subr.mxu0 0.0
        %972 = vmatpush1.msra.mxu0 0.0
        %973 = vmatprep.subr.mxu0 0.0
        %974 = vmatpush1.msra.mxu0 0.0
        %975 = vmatprep.subr.mxu0 0.0
        %976 = vmatpush1.msra.mxu0 0.0
        %977 = vmatprep.subr.mxu0 0.0
        %978 = vmatpush1.msra.mxu0 0.0
        %979 = vmatprep.subr.mxu0 0.0
        %980 = vmatpush1.msra.mxu0 0.0
        %981 = vmatprep.subr.mxu0 0.0
        %982 = vmatpush1.msra.mxu0 0.0
        %983 = vmatprep.subr.mxu0 0.0
        %984 = vmatpush1.msra.mxu0 0.0
        %985 = vmatprep.subr.mxu0 0.0
        %986 = vmatpush1.msra.mxu0 0.0
        %987 = vmatprep.subr.mxu0 0.0
        %988 = vmatpush1.msra.mxu0 %v877
        %989 = vmatprep.subr.mxu0 0.0
        %990 = vmatpush2.msra.mxu0 0.0
        %991 = vmatprep.subr.mxu0 0.0
        %992 = vmatpush2.msra.mxu0 0.0
        %993 = vmatprep.subr.mxu0 0.0
        %994 = vmatpush2.msra.mxu0 0.0
        %995 = vmatprep.subr.mxu0 0.0
        %996 = vmatpush2.msra.mxu0 0.0
        %997 = vmatprep.subr.mxu0 0.0
        %998 = vmatpush2.msra.mxu0 0.0
        %999 = vmatprep.subr.mxu0 0.0
        %1000 = vmatpush2.msra.mxu0 0.0
        %1001 = vmatprep.subr.mxu0 0.0
        %1002 = vmatpush2.msra.mxu0 0.0
        %1003 = vmatprep.subr.mxu0 0.0
        %1004 = vmatpush2.msra.mxu0 0.0
        %1005 = vmatprep.subr.mxu0 0.0
        %1006 = vmatpush2.msra.mxu0 0.0
        %1007 = vmatprep.subr.mxu0 0.0
        %1008 = vmatpush2.msra.mxu0 0.0
        %1009 = vmatprep.subr.mxu0 0.0
        %1010 = vmatpush2.msra.mxu0 0.0
        %1011 = vmatprep.subr.mxu0 0.0
        %1012 = vmatpush2.msra.mxu0 0.0
        %1013 = vmatprep.subr.mxu0 0.0
        %1014 = vmatpush2.msra.mxu0 0.0
        %1015 = vmatprep.subr.mxu0 0.0
        %1016 = vmatpush2.msra.mxu0 0.0
        %1017 = vmatprep.subr.mxu0 0.0
        %1018 = vmatpush2.msra.mxu0 0.0
        %1019 = vmatprep.subr.mxu0 0.0
        %1020 = vmatpush2.msra.mxu0 0.0
        %1021 = vmatprep.mubr.f32.mxu0 0.0
        %1022 = vmatmul.mubr.f32.gmra.mxu0 %v955
        %v1023 = vpop.f32.mrf.mxu0
        %v1024 = vadd.f32 0.0, %v1023
        %v1025 = vpop.f32.mrf.mxu0
        %1026 = vdwg.mxu0
        %v1028 = vsel %vm880, %v803, 0
        %1030 = vmatprep.subr.mxu0 0.0
        %1031 = vmatpush1.msra.mxu0 0.0
        %1032 = vmatprep.subr.mxu0 0.0
        %1033 = vmatpush1.msra.mxu0 0.0
        %1034 = vmatprep.subr.mxu0 0.0
        %1035 = vmatpush1.msra.mxu0 0.0
        %1036 = vmatprep.subr.mxu0 0.0
        %1037 = vmatpush1.msra.mxu0 0.0
        %1038 = vmatprep.subr.mxu0 0.0
        %1039 = vmatpush1.msra.mxu0 0.0
        %1040 = vmatprep.subr.mxu0 0.0
        %1041 = vmatpush1.msra.mxu0 0.0
        %1042 = vmatprep.subr.mxu0 0.0
        %1043 = vmatpush1.msra.mxu0 0.0
        %1044 = vmatprep.subr.mxu0 0.0
        %1045 = vmatpush1.msra.mxu0 0.0
        %1046 = vmatprep.subr.mxu0 0.0
        %1047 = vmatpush1.msra.mxu0 0.0
        %1048 = vmatprep.subr.mxu0 0.0
        %1049 = vmatpush1.msra.mxu0 0.0
        %1050 = vmatprep.subr.mxu0 0.0
        %1051 = vmatpush1.msra.mxu0 0.0
        %1052 = vmatprep.subr.mxu0 0.0
        %1053 = vmatpush1.msra.mxu0 0.0
        %1054 = vmatprep.subr.mxu0 0.0
        %1055 = vmatpush1.msra.mxu0 0.0
        %1056 = vmatprep.subr.mxu0 0.0
        %1057 = vmatpush1.msra.mxu0 0.0
        %1058 = vmatprep.subr.mxu0 0.0
        %1059 = vmatpush1.msra.mxu0 0.0
        %1060 = vmatprep.subr.mxu0 0.0
        %1061 = vmatpush1.msra.mxu0 %v878
        %1062 = vmatprep.subr.mxu0 0.0
        %1063 = vmatpush2.msra.mxu0 0.0
        %1064 = vmatprep.subr.mxu0 0.0
        %1065 = vmatpush2.msra.mxu0 0.0
        %1066 = vmatprep.subr.mxu0 0.0
        %1067 = vmatpush2.msra.mxu0 0.0
        %1068 = vmatprep.subr.mxu0 0.0
        %1069 = vmatpush2.msra.mxu0 0.0
        %1070 = vmatprep.subr.mxu0 0.0
        %1071 = vmatpush2.msra.mxu0 0.0
        %1072 = vmatprep.subr.mxu0 0.0
        %1073 = vmatpush2.msra.mxu0 0.0
        %1074 = vmatprep.subr.mxu0 0.0
        %1075 = vmatpush2.msra.mxu0 0.0
        %1076 = vmatprep.subr.mxu0 0.0
        %1077 = vmatpush2.msra.mxu0 0.0
        %1078 = vmatprep.subr.mxu0 0.0
        %1079 = vmatpush2.msra.mxu0 0.0
        %1080 = vmatprep.subr.mxu0 0.0
        %1081 = vmatpush2.msra.mxu0 0.0
        %1082 = vmatprep.subr.mxu0 0.0
        %1083 = vmatpush2.msra.mxu0 0.0
        %1084 = vmatprep.subr.mxu0 0.0
        %1085 = vmatpush2.msra.mxu0 0.0
        %1086 = vmatprep.subr.mxu0 0.0
        %1087 = vmatpush2.msra.mxu0 0.0
        %1088 = vmatprep.subr.mxu0 0.0
        %1089 = vmatpush2.msra.mxu0 0.0
        %1090 = vmatprep.subr.mxu0 0.0
        %1091 = vmatpush2.msra.mxu0 0.0
        %1092 = vmatprep.subr.mxu0 0.0
        %1093 = vmatpush2.msra.mxu0 0.0
        %1094 = vmatprep.mubr.f32.mxu0 0.0
        %1095 = vmatmul.mubr.f32.gmra.mxu0 %v1028
        %v1096 = vpop.f32.mrf.mxu0
        %v1097 = vadd.f32 0.0, %v1096
        %v1098 = vpop.f32.mrf.mxu0
        %1099 = vdwg.mxu0
        %v1101 = vsel %vm880, %v873, 0
        %1103 = vmatprep.subr.mxu0 0.0
        %1104 = vmatpush1.msra.mxu0 0.0
        %1105 = vmatprep.subr.mxu0 0.0
        %1106 = vmatpush1.msra.mxu0 0.0
        %1107 = vmatprep.subr.mxu0 0.0
        %1108 = vmatpush1.msra.mxu0 0.0
        %1109 = vmatprep.subr.mxu0 0.0
        %1110 = vmatpush1.msra.mxu0 0.0
        %1111 = vmatprep.subr.mxu0 0.0
        %1112 = vmatpush1.msra.mxu0 0.0
        %1113 = vmatprep.subr.mxu0 0.0
        %1114 = vmatpush1.msra.mxu0 0.0
        %1115 = vmatprep.subr.mxu0 0.0
        %1116 = vmatpush1.msra.mxu0 0.0
        %1117 = vmatprep.subr.mxu0 0.0
        %1118 = vmatpush1.msra.mxu0 0.0
        %1119 = vmatprep.subr.mxu0 0.0
        %1120 = vmatpush1.msra.mxu0 0.0
        %1121 = vmatprep.subr.mxu0 0.0
        %1122 = vmatpush1.msra.mxu0 0.0
        %1123 = vmatprep.subr.mxu0 0.0
        %1124 = vmatpush1.msra.mxu0 0.0
        %1125 = vmatprep.subr.mxu0 0.0
        %1126 = vmatpush1.msra.mxu0 0.0
        %1127 = vmatprep.subr.mxu0 0.0
        %1128 = vmatpush1.msra.mxu0 0.0
        %1129 = vmatprep.subr.mxu0 0.0
        %1130 = vmatpush1.msra.mxu0 0.0
        %1131 = vmatprep.subr.mxu0 0.0
        %1132 = vmatpush1.msra.mxu0 0.0
        %1133 = vmatprep.subr.mxu0 0.0
        %1134 = vmatpush1.msra.mxu0 %v879
        %1135 = vmatprep.subr.mxu0 0.0
        %1136 = vmatpush2.msra.mxu0 0.0
        %1137 = vmatprep.subr.mxu0 0.0
        %1138 = vmatpush2.msra.mxu0 0.0
        %1139 = vmatprep.subr.mxu0 0.0
        %1140 = vmatpush2.msra.mxu0 0.0
        %1141 = vmatprep.subr.mxu0 0.0
        %1142 = vmatpush2.msra.mxu0 0.0
        %1143 = vmatprep.subr.mxu0 0.0
        %1144 = vmatpush2.msra.mxu0 0.0
        %1145 = vmatprep.subr.mxu0 0.0
        %1146 = vmatpush2.msra.mxu0 0.0
        %1147 = vmatprep.subr.mxu0 0.0
        %1148 = vmatpush2.msra.mxu0 0.0
        %1149 = vmatprep.subr.mxu0 0.0
        %1150 = vmatpush2.msra.mxu0 0.0
        %1151 = vmatprep.subr.mxu0 0.0
        %1152 = vmatpush2.msra.mxu0 0.0
        %1153 = vmatprep.subr.mxu0 0.0
        %1154 = vmatpush2.msra.mxu0 0.0
        %1155 = vmatprep.subr.mxu0 0.0
        %1156 = vmatpush2.msra.mxu0 0.0
        %1157 = vmatprep.subr.mxu0 0.0
        %1158 = vmatpush2.msra.mxu0 0.0
        %1159 = vmatprep.subr.mxu0 0.0
        %1160 = vmatpush2.msra.mxu0 0.0
        %1161 = vmatprep.subr.mxu0 0.0
        %1162 = vmatpush2.msra.mxu0 0.0
        %1163 = vmatprep.subr.mxu0 0.0
        %1164 = vmatpush2.msra.mxu0 0.0
        %1165 = vmatprep.subr.mxu0 0.0
        %1166 = vmatpush2.msra.mxu0 0.0
        %1167 = vmatprep.mubr.f32.mxu0 0.0
        %1168 = vmatmul.mubr.f32.gmra.mxu0 %v1101
        %v1169 = vpop.f32.mrf.mxu0
        %v1170 = vadd.f32 0.0, %v1169
        %v1171 = vpop.f32.mrf.mxu0
        %1172 = vdwg.mxu0
        %v1174 = vsel %vm880, %v951, 0
        %1176 = vmatprep.subr.mxu0 0.0
        %1177 = vmatpush1.xpose.msra.mxu0 0.0
        %1178 = vmatprep.subr.mxu0 0.0
        %1179 = vmatpush1.xpose.msra.mxu0 0.0
        %1180 = vmatprep.subr.mxu0 0.0
        %1181 = vmatpush1.xpose.msra.mxu0 0.0
        %1182 = vmatprep.subr.mxu0 0.0
        %1183 = vmatpush1.xpose.msra.mxu0 0.0
        %1184 = vmatprep.subr.mxu0 0.0
        %1185 = vmatpush1.xpose.msra.mxu0 0.0
        %1186 = vmatprep.subr.mxu0 0.0
        %1187 = vmatpush1.xpose.msra.mxu0 0.0
        %1188 = vmatprep.subr.mxu0 0.0
        %1189 = vmatpush1.xpose.msra.mxu0 0.0
        %1190 = vmatprep.subr.mxu0 0.0
        %1191 = vmatpush1.xpose.msra.mxu0 0.0
        %1192 = vmatprep.subr.mxu0 0.0
        %1193 = vmatpush1.xpose.msra.mxu0 0.0
        %1194 = vmatprep.subr.mxu0 0.0
        %1195 = vmatpush1.xpose.msra.mxu0 0.0
        %1196 = vmatprep.subr.mxu0 0.0
        %1197 = vmatpush1.xpose.msra.mxu0 0.0
        %1198 = vmatprep.subr.mxu0 0.0
        %1199 = vmatpush1.xpose.msra.mxu0 0.0
        %1200 = vmatprep.subr.mxu0 0.0
        %1201 = vmatpush1.xpose.msra.mxu0 0.0
        %1202 = vmatprep.subr.mxu0 0.0
        %1203 = vmatpush1.xpose.msra.mxu0 0.0
        %1204 = vmatprep.subr.mxu0 0.0
        %1205 = vmatpush1.xpose.msra.mxu0 0.0
        %1206 = vmatprep.subr.mxu0 0.0
        %1207 = vmatpush1.xpose.msra.mxu0 %v882
        %1208 = vmatprep.subr.mxu0 0.0
        %1209 = vmatpush2.xpose.msra.mxu0 0.0
        %1210 = vmatprep.subr.mxu0 0.0
        %1211 = vmatpush2.xpose.msra.mxu0 0.0
        %1212 = vmatprep.subr.mxu0 0.0
        %1213 = vmatpush2.xpose.msra.mxu0 0.0
        %1214 = vmatprep.subr.mxu0 0.0
        %1215 = vmatpush2.xpose.msra.mxu0 0.0
        %1216 = vmatprep.subr.mxu0 0.0
        %1217 = vmatpush2.xpose.msra.mxu0 0.0
        %1218 = vmatprep.subr.mxu0 0.0
        %1219 = vmatpush2.xpose.msra.mxu0 0.0
        %1220 = vmatprep.subr.mxu0 0.0
        %1221 = vmatpush2.xpose.msra.mxu0 0.0
        %1222 = vmatprep.subr.mxu0 0.0
        %1223 = vmatpush2.xpose.msra.mxu0 0.0
        %1224 = vmatprep.subr.mxu0 0.0
        %1225 = vmatpush2.xpose.msra.mxu0 0.0
        %1226 = vmatprep.subr.mxu0 0.0
        %1227 = vmatpush2.xpose.msra.mxu0 0.0
        %1228 = vmatprep.subr.mxu0 0.0
        %1229 = vmatpush2.xpose.msra.mxu0 0.0
        %1230 = vmatprep.subr.mxu0 0.0
        %1231 = vmatpush2.xpose.msra.mxu0 0.0
        %1232 = vmatprep.subr.mxu0 0.0
        %1233 = vmatpush2.xpose.msra.mxu0 0.0
        %1234 = vmatprep.subr.mxu0 0.0
        %1235 = vmatpush2.xpose.msra.mxu0 0.0
        %1236 = vmatprep.subr.mxu0 0.0
        %1237 = vmatpush2.xpose.msra.mxu0 0.0
        %1238 = vmatprep.subr.mxu0 0.0
        %1239 = vmatpush2.xpose.msra.mxu0 0.0
        %1240 = vmatprep.mubr.f32.mxu0 0.0
        %1241 = vmatmul.mubr.f32.gmra.mxu0 %v1174
        %v1242 = vpop.f32.mrf.mxu0
        %v1243 = vadd.f32 0.0, %v1242
        %v1244 = vpop.f32.mrf.mxu0
        %1245 = vdwg.mxu0
        %v1247 = vsel %vm880, %v1024, 0
        %1249 = vmatprep.subr.mxu0 0.0
        %1250 = vmatpush1.xpose.msra.mxu0 0.0
        %1251 = vmatprep.subr.mxu0 0.0
        %1252 = vmatpush1.xpose.msra.mxu0 0.0
        %1253 = vmatprep.subr.mxu0 0.0
        %1254 = vmatpush1.xpose.msra.mxu0 0.0
        %1255 = vmatprep.subr.mxu0 0.0
        %1256 = vmatpush1.xpose.msra.mxu0 0.0
        %1257 = vmatprep.subr.mxu0 0.0
        %1258 = vmatpush1.xpose.msra.mxu0 0.0
        %1259 = vmatprep.subr.mxu0 0.0
        %1260 = vmatpush1.xpose.msra.mxu0 0.0
        %1261 = vmatprep.subr.mxu0 0.0
        %1262 = vmatpush1.xpose.msra.mxu0 0.0
        %1263 = vmatprep.subr.mxu0 0.0
        %1264 = vmatpush1.xpose.msra.mxu0 0.0
        %1265 = vmatprep.subr.mxu0 0.0
        %1266 = vmatpush1.xpose.msra.mxu0 0.0
        %1267 = vmatprep.subr.mxu0 0.0
        %1268 = vmatpush1.xpose.msra.mxu0 0.0
        %1269 = vmatprep.subr.mxu0 0.0
        %1270 = vmatpush1.xpose.msra.mxu0 0.0
        %1271 = vmatprep.subr.mxu0 0.0
        %1272 = vmatpush1.xpose.msra.mxu0 0.0
        %1273 = vmatprep.subr.mxu0 0.0
        %1274 = vmatpush1.xpose.msra.mxu0 0.0
        %1275 = vmatprep.subr.mxu0 0.0
        %1276 = vmatpush1.xpose.msra.mxu0 0.0
        %1277 = vmatprep.subr.mxu0 0.0
        %1278 = vmatpush1.xpose.msra.mxu0 0.0
        %1279 = vmatprep.subr.mxu0 0.0
        %1280 = vmatpush1.xpose.msra.mxu0 %v955
        %1281 = vmatprep.subr.mxu0 0.0
        %1282 = vmatpush2.xpose.msra.mxu0 0.0
        %1283 = vmatprep.subr.mxu0 0.0
        %1284 = vmatpush2.xpose.msra.mxu0 0.0
        %1285 = vmatprep.subr.mxu0 0.0
        %1286 = vmatpush2.xpose.msra.mxu0 0.0
        %1287 = vmatprep.subr.mxu0 0.0
        %1288 = vmatpush2.xpose.msra.mxu0 0.0
        %1289 = vmatprep.subr.mxu0 0.0
        %1290 = vmatpush2.xpose.msra.mxu0 0.0
        %1291 = vmatprep.subr.mxu0 0.0
        %1292 = vmatpush2.xpose.msra.mxu0 0.0
        %1293 = vmatprep.subr.mxu0 0.0
        %1294 = vmatpush2.xpose.msra.mxu0 0.0
        %1295 = vmatprep.subr.mxu0 0.0
        %1296 = vmatpush2.xpose.msra.mxu0 0.0
        %1297 = vmatprep.subr.mxu0 0.0
        %1298 = vmatpush2.xpose.msra.mxu0 0.0
        %1299 = vmatprep.subr.mxu0 0.0
        %1300 = vmatpush2.xpose.msra.mxu0 0.0
        %1301 = vmatprep.subr.mxu0 0.0
        %1302 = vmatpush2.xpose.msra.mxu0 0.0
        %1303 = vmatprep.subr.mxu0 0.0
        %1304 = vmatpush2.xpose.msra.mxu0 0.0
        %1305 = vmatprep.subr.mxu0 0.0
        %1306 = vmatpush2.xpose.msra.mxu0 0.0
        %1307 = vmatprep.subr.mxu0 0.0
        %1308 = vmatpush2.xpose.msra.mxu0 0.0
        %1309 = vmatprep.subr.mxu0 0.0
        %1310 = vmatpush2.xpose.msra.mxu0 0.0
        %1311 = vmatprep.subr.mxu0 0.0
        %1312 = vmatpush2.xpose.msra.mxu0 0.0
        %1313 = vmatprep.mubr.f32.mxu0 0.0
        %1314 = vmatmul.mubr.f32.gmra.mxu0 %v1247
        %v1315 = vpop.f32.mrf.mxu0
        %v1316 = vadd.f32 0.0, %v1315
        %v1317 = vpop.f32.mrf.mxu0
        %1318 = vdwg.mxu0
        %v1320 = vsel %vm880, %v1097, 0
        %1322 = vmatprep.subr.mxu0 0.0
        %1323 = vmatpush1.xpose.msra.mxu0 0.0
        %1324 = vmatprep.subr.mxu0 0.0
        %1325 = vmatpush1.xpose.msra.mxu0 0.0
        %1326 = vmatprep.subr.mxu0 0.0
        %1327 = vmatpush1.xpose.msra.mxu0 0.0
        %1328 = vmatprep.subr.mxu0 0.0
        %1329 = vmatpush1.xpose.msra.mxu0 0.0
        %1330 = vmatprep.subr.mxu0 0.0
        %1331 = vmatpush1.xpose.msra.mxu0 0.0
        %1332 = vmatprep.subr.mxu0 0.0
        %1333 = vmatpush1.xpose.msra.mxu0 0.0
        %1334 = vmatprep.subr.mxu0 0.0
        %1335 = vmatpush1.xpose.msra.mxu0 0.0
        %1336 = vmatprep.subr.mxu0 0.0
        %1337 = vmatpush1.xpose.msra.mxu0 0.0
        %1338 = vmatprep.subr.mxu0 0.0
        %1339 = vmatpush1.xpose.msra.mxu0 0.0
        %1340 = vmatprep.subr.mxu0 0.0
        %1341 = vmatpush1.xpose.msra.mxu0 0.0
        %1342 = vmatprep.subr.mxu0 0.0
        %1343 = vmatpush1.xpose.msra.mxu0 0.0
        %1344 = vmatprep.subr.mxu0 0.0
        %1345 = vmatpush1.xpose.msra.mxu0 0.0
        %1346 = vmatprep.subr.mxu0 0.0
        %1347 = vmatpush1.xpose.msra.mxu0 0.0
        %1348 = vmatprep.subr.mxu0 0.0
        %1349 = vmatpush1.xpose.msra.mxu0 0.0
        %1350 = vmatprep.subr.mxu0 0.0
        %1351 = vmatpush1.xpose.msra.mxu0 0.0
        %1352 = vmatprep.subr.mxu0 0.0
        %1353 = vmatpush1.xpose.msra.mxu0 %v1028
        %1354 = vmatprep.subr.mxu0 0.0
        %1355 = vmatpush2.xpose.msra.mxu0 0.0
        %1356 = vmatprep.subr.mxu0 0.0
        %1357 = vmatpush2.xpose.msra.mxu0 0.0
        %1358 = vmatprep.subr.mxu0 0.0
        %1359 = vmatpush2.xpose.msra.mxu0 0.0
        %1360 = vmatprep.subr.mxu0 0.0
        %1361 = vmatpush2.xpose.msra.mxu0 0.0
        %1362 = vmatprep.subr.mxu0 0.0
        %1363 = vmatpush2.xpose.msra.mxu0 0.0
        %1364 = vmatprep.subr.mxu0 0.0
        %1365 = vmatpush2.xpose.msra.mxu0 0.0
        %1366 = vmatprep.subr.mxu0 0.0
        %1367 = vmatpush2.xpose.msra.mxu0 0.0
        %1368 = vmatprep.subr.mxu0 0.0
        %1369 = vmatpush2.xpose.msra.mxu0 0.0
        %1370 = vmatprep.subr.mxu0 0.0
        %1371 = vmatpush2.xpose.msra.mxu0 0.0
        %1372 = vmatprep.subr.mxu0 0.0
        %1373 = vmatpush2.xpose.msra.mxu0 0.0
        %1374 = vmatprep.subr.mxu0 0.0
        %1375 = vmatpush2.xpose.msra.mxu0 0.0
        %1376 = vmatprep.subr.mxu0 0.0
        %1377 = vmatpush2.xpose.msra.mxu0 0.0
        %1378 = vmatprep.subr.mxu0 0.0
        %1379 = vmatpush2.xpose.msra.mxu0 0.0
        %1380 = vmatprep.subr.mxu0 0.0
        %1381 = vmatpush2.xpose.msra.mxu0 0.0
        %1382 = vmatprep.subr.mxu0 0.0
        %1383 = vmatpush2.xpose.msra.mxu0 0.0
        %1384 = vmatprep.subr.mxu0 0.0
        %1385 = vmatpush2.xpose.msra.mxu0 0.0
        %1386 = vmatprep.mubr.f32.mxu0 0.0
        %1387 = vmatmul.mubr.f32.gmra.mxu0 %v1320
        %v1388 = vpop.f32.mrf.mxu0
        %v1389 = vadd.f32 0.0, %v1388
        %v1390 = vpop.f32.mrf.mxu0
        %1391 = vdwg.mxu0
        %v1393 = vsel %vm880, %v1170, 0
        %1395 = vmatprep.subr.mxu0 0.0
        %1396 = vmatpush1.xpose.msra.mxu0 0.0
        %1397 = vmatprep.subr.mxu0 0.0
        %1398 = vmatpush1.xpose.msra.mxu0 0.0
        %1399 = vmatprep.subr.mxu0 0.0
        %1400 = vmatpush1.xpose.msra.mxu0 0.0
        %1401 = vmatprep.subr.mxu0 0.0
        %1402 = vmatpush1.xpose.msra.mxu0 0.0
        %1403 = vmatprep.subr.mxu0 0.0
        %1404 = vmatpush1.xpose.msra.mxu0 0.0
        %1405 = vmatprep.subr.mxu0 0.0
        %1406 = vmatpush1.xpose.msra.mxu0 0.0
        %1407 = vmatprep.subr.mxu0 0.0
        %1408 = vmatpush1.xpose.msra.mxu0 0.0
        %1409 = vmatprep.subr.mxu0 0.0
        %1410 = vmatpush1.xpose.msra.mxu0 0.0
        %1411 = vmatprep.subr.mxu0 0.0
        %1412 = vmatpush1.xpose.msra.mxu0 0.0
        %1413 = vmatprep.subr.mxu0 0.0
        %1414 = vmatpush1.xpose.msra.mxu0 0.0
        %1415 = vmatprep.subr.mxu0 0.0
        %1416 = vmatpush1.xpose.msra.mxu0 0.0
        %1417 = vmatprep.subr.mxu0 0.0
        %1418 = vmatpush1.xpose.msra.mxu0 0.0
        %1419 = vmatprep.subr.mxu0 0.0
        %1420 = vmatpush1.xpose.msra.mxu0 0.0
        %1421 = vmatprep.subr.mxu0 0.0
        %1422 = vmatpush1.xpose.msra.mxu0 0.0
        %1423 = vmatprep.subr.mxu0 0.0
        %1424 = vmatpush1.xpose.msra.mxu0 0.0
        %1425 = vmatprep.subr.mxu0 0.0
        %1426 = vmatpush1.xpose.msra.mxu0 %v1101
        %1427 = vmatprep.subr.mxu0 0.0
        %1428 = vmatpush2.xpose.msra.mxu0 0.0
        %1429 = vmatprep.subr.mxu0 0.0
        %1430 = vmatpush2.xpose.msra.mxu0 0.0
        %1431 = vmatprep.subr.mxu0 0.0
        %1432 = vmatpush2.xpose.msra.mxu0 0.0
        %1433 = vmatprep.subr.mxu0 0.0
        %1434 = vmatpush2.xpose.msra.mxu0 0.0
        %1435 = vmatprep.subr.mxu0 0.0
        %1436 = vmatpush2.xpose.msra.mxu0 0.0
        %1437 = vmatprep.subr.mxu0 0.0
        %1438 = vmatpush2.xpose.msra.mxu0 0.0
        %1439 = vmatprep.subr.mxu0 0.0
        %1440 = vmatpush2.xpose.msra.mxu0 0.0
        %1441 = vmatprep.subr.mxu0 0.0
        %1442 = vmatpush2.xpose.msra.mxu0 0.0
        %1443 = vmatprep.subr.mxu0 0.0
        %1444 = vmatpush2.xpose.msra.mxu0 0.0
        %1445 = vmatprep.subr.mxu0 0.0
        %1446 = vmatpush2.xpose.msra.mxu0 0.0
        %1447 = vmatprep.subr.mxu0 0.0
        %1448 = vmatpush2.xpose.msra.mxu0 0.0
        %1449 = vmatprep.subr.mxu0 0.0
        %1450 = vmatpush2.xpose.msra.mxu0 0.0
        %1451 = vmatprep.subr.mxu0 0.0
        %1452 = vmatpush2.xpose.msra.mxu0 0.0
        %1453 = vmatprep.subr.mxu0 0.0
        %1454 = vmatpush2.xpose.msra.mxu0 0.0
        %1455 = vmatprep.subr.mxu0 0.0
        %1456 = vmatpush2.xpose.msra.mxu0 0.0
        %1457 = vmatprep.subr.mxu0 0.0
        %1458 = vmatpush2.xpose.msra.mxu0 0.0
        %1459 = vmatprep.mubr.f32.mxu0 0.0
        %1460 = vmatmul.mubr.f32.gmra.mxu0 %v1393
        %v1461 = vpop.f32.mrf.mxu0
        %v1462 = vadd.f32 0.0, %v1461
        %v1463 = vpop.f32.mrf.mxu0
        %1464 = vdwg.mxu0
        %v1465 = vsel %vm880, %v1243, -inf
        %1466 = vmax.xlane.f32.xlu0 %v1465
        %v1467 = vpop.xlane.xlu0 %1466
        %v1468 = vsel %vm880, %v1316, -inf
        %1469 = vmax.xlane.f32.xlu0 %v1468
        %v1470 = vpop.xlane.xlu0 %1469
        %v1471 = vsel %vm880, %v1389, -inf
        %1472 = vmax.xlane.f32.xlu0 %v1471
        %v1473 = vpop.xlane.xlu0 %1472
        %v1474 = vsel %vm880, %v1462, -inf
        %1475 = vmax.xlane.f32.xlu0 %v1474
        %v1476 = vpop.xlane.xlu0 %1475
        %v1477 = vsub.f32 %v1243, %v1467
        %v1478 = vsub.f32 %v1316, %v1470
        %v1479 = vsub.f32 %v1389, %v1473
        %v1480 = vsub.f32 %v1462, %v1476
        %v1481 = vmul.f32 %v1477, 1.442695
        %v1482 = vpow.pop %v1481
        %v1483 = vmul.f32 %v1478, 1.442695
        %v1484 = vpow.pop %v1483
        %v1485 = vmul.f32 %v1479, 1.442695
        %v1486 = vpow.pop %v1485
        %v1487 = vmul.f32 %v1480, 1.442695
        %v1488 = vpow.pop %v1487
        %v1489 = vsel %vm880, %v1482, 0.0
        %1490 = vadd.xlane.f32.xlu0 %v1489
        %v1491 = vpop.xlane.xlu0 %1490
        %v1492 = vsel %vm880, %v1484, 0.0
        %1493 = vadd.xlane.f32.xlu0 %v1492
        %v1494 = vpop.xlane.xlu0 %1493
        %v1495 = vsel %vm880, %v1486, 0.0
        %1496 = vadd.xlane.f32.xlu0 %v1495
        %v1497 = vpop.xlane.xlu0 %1496
        %v1498 = vsel %vm880, %v1488, 0.0
        %1499 = vadd.xlane.f32.xlu0 %v1498
        %v1500 = vpop.xlane.xlu0 %1499
        %v1501 = vrcp.pop %v1491
        %v1502 = vrcp.pop %v1494
        %v1503 = vrcp.pop %v1497
        %v1504 = vrcp.pop %v1500
        %v1505 = vmul.f32 %v1482, %v1501
        %v1506 = vmul.f32 %v1484, %v1502
        %v1507 = vmul.f32 %v1486, %v1503
        %v1508 = vmul.f32 %v1488, %v1504
        %v1510 = vsel %vm880, %v1505, 0
        %1512 = vmatprep.subr.mxu0 0.0
        %1513 = vmatpush1.msra.mxu0 0.0
        %1514 = vmatprep.subr.mxu0 0.0
        %1515 = vmatpush1.msra.mxu0 0.0
        %1516 = vmatprep.subr.mxu0 0.0
        %1517 = vmatpush1.msra.mxu0 0.0
        %1518 = vmatprep.subr.mxu0 0.0
        %1519 = vmatpush1.msra.mxu0 0.0
        %1520 = vmatprep.subr.mxu0 0.0
        %1521 = vmatpush1.msra.mxu0 0.0
        %1522 = vmatprep.subr.mxu0 0.0
        %1523 = vmatpush1.msra.mxu0 0.0
        %1524 = vmatprep.subr.mxu0 0.0
        %1525 = vmatpush1.msra.mxu0 0.0
        %1526 = vmatprep.subr.mxu0 0.0
        %1527 = vmatpush1.msra.mxu0 0.0
        %1528 = vmatprep.subr.mxu0 0.0
        %1529 = vmatpush1.msra.mxu0 0.0
        %1530 = vmatprep.subr.mxu0 0.0
        %1531 = vmatpush1.msra.mxu0 0.0
        %1532 = vmatprep.subr.mxu0 0.0
        %1533 = vmatpush1.msra.mxu0 0.0
        %1534 = vmatprep.subr.mxu0 0.0
        %1535 = vmatpush1.msra.mxu0 0.0
        %1536 = vmatprep.subr.mxu0 0.0
        %1537 = vmatpush1.msra.mxu0 0.0
        %1538 = vmatprep.subr.mxu0 0.0
        %1539 = vmatpush1.msra.mxu0 0.0
        %1540 = vmatprep.subr.mxu0 0.0
        %1541 = vmatpush1.msra.mxu0 0.0
        %1542 = vmatprep.subr.mxu0 0.0
        %1543 = vmatpush1.msra.mxu0 %v663
        %1544 = vmatprep.subr.mxu0 0.0
        %1545 = vmatpush2.msra.mxu0 0.0
        %1546 = vmatprep.subr.mxu0 0.0
        %1547 = vmatpush2.msra.mxu0 0.0
        %1548 = vmatprep.subr.mxu0 0.0
        %1549 = vmatpush2.msra.mxu0 0.0
        %1550 = vmatprep.subr.mxu0 0.0
        %1551 = vmatpush2.msra.mxu0 0.0
        %1552 = vmatprep.subr.mxu0 0.0
        %1553 = vmatpush2.msra.mxu0 0.0
        %1554 = vmatprep.subr.mxu0 0.0
        %1555 = vmatpush2.msra.mxu0 0.0
        %1556 = vmatprep.subr.mxu0 0.0
        %1557 = vmatpush2.msra.mxu0 0.0
        %1558 = vmatprep.subr.mxu0 0.0
        %1559 = vmatpush2.msra.mxu0 0.0
        %1560 = vmatprep.subr.mxu0 0.0
        %1561 = vmatpush2.msra.mxu0 0.0
        %1562 = vmatprep.subr.mxu0 0.0
        %1563 = vmatpush2.msra.mxu0 0.0
        %1564 = vmatprep.subr.mxu0 0.0
        %1565 = vmatpush2.msra.mxu0 0.0
        %1566 = vmatprep.subr.mxu0 0.0
        %1567 = vmatpush2.msra.mxu0 0.0
        %1568 = vmatprep.subr.mxu0 0.0
        %1569 = vmatpush2.msra.mxu0 0.0
        %1570 = vmatprep.subr.mxu0 0.0
        %1571 = vmatpush2.msra.mxu0 0.0
        %1572 = vmatprep.subr.mxu0 0.0
        %1573 = vmatpush2.msra.mxu0 0.0
        %1574 = vmatprep.subr.mxu0 0.0
        %1575 = vmatpush2.msra.mxu0 0.0
        %1576 = vmatprep.mubr.f32.mxu0 0.0
        %1577 = vmatmul.mubr.f32.gmra.mxu0 %v1510
        %v1578 = vpop.f32.mrf.mxu0
        %v1579 = vadd.f32 0.0, %v1578
        %v1580 = vpop.f32.mrf.mxu0
        %1581 = vdwg.mxu0
        %v1583 = vsel %vm880, %v1506, 0
        %1585 = vmatprep.subr.mxu0 0.0
        %1586 = vmatpush1.msra.mxu0 0.0
        %1587 = vmatprep.subr.mxu0 0.0
        %1588 = vmatpush1.msra.mxu0 0.0
        %1589 = vmatprep.subr.mxu0 0.0
        %1590 = vmatpush1.msra.mxu0 0.0
        %1591 = vmatprep.subr.mxu0 0.0
        %1592 = vmatpush1.msra.mxu0 0.0
        %1593 = vmatprep.subr.mxu0 0.0
        %1594 = vmatpush1.msra.mxu0 0.0
        %1595 = vmatprep.subr.mxu0 0.0
        %1596 = vmatpush1.msra.mxu0 0.0
        %1597 = vmatprep.subr.mxu0 0.0
        %1598 = vmatpush1.msra.mxu0 0.0
        %1599 = vmatprep.subr.mxu0 0.0
        %1600 = vmatpush1.msra.mxu0 0.0
        %1601 = vmatprep.subr.mxu0 0.0
        %1602 = vmatpush1.msra.mxu0 0.0
        %1603 = vmatprep.subr.mxu0 0.0
        %1604 = vmatpush1.msra.mxu0 0.0
        %1605 = vmatprep.subr.mxu0 0.0
        %1606 = vmatpush1.msra.mxu0 0.0
        %1607 = vmatprep.subr.mxu0 0.0
        %1608 = vmatpush1.msra.mxu0 0.0
        %1609 = vmatprep.subr.mxu0 0.0
        %1610 = vmatpush1.msra.mxu0 0.0
        %1611 = vmatprep.subr.mxu0 0.0
        %1612 = vmatpush1.msra.mxu0 0.0
        %1613 = vmatprep.subr.mxu0 0.0
        %1614 = vmatpush1.msra.mxu0 0.0
        %1615 = vmatprep.subr.mxu0 0.0
        %1616 = vmatpush1.msra.mxu0 %v733
        %1617 = vmatprep.subr.mxu0 0.0
        %1618 = vmatpush2.msra.mxu0 0.0
        %1619 = vmatprep.subr.mxu0 0.0
        %1620 = vmatpush2.msra.mxu0 0.0
        %1621 = vmatprep.subr.mxu0 0.0
        %1622 = vmatpush2.msra.mxu0 0.0
        %1623 = vmatprep.subr.mxu0 0.0
        %1624 = vmatpush2.msra.mxu0 0.0
        %1625 = vmatprep.subr.mxu0 0.0
        %1626 = vmatpush2.msra.mxu0 0.0
        %1627 = vmatprep.subr.mxu0 0.0
        %1628 = vmatpush2.msra.mxu0 0.0
        %1629 = vmatprep.subr.mxu0 0.0
        %1630 = vmatpush2.msra.mxu0 0.0
        %1631 = vmatprep.subr.mxu0 0.0
        %1632 = vmatpush2.msra.mxu0 0.0
        %1633 = vmatprep.subr.mxu0 0.0
        %1634 = vmatpush2.msra.mxu0 0.0
        %1635 = vmatprep.subr.mxu0 0.0
        %1636 = vmatpush2.msra.mxu0 0.0
        %1637 = vmatprep.subr.mxu0 0.0
        %1638 = vmatpush2.msra.mxu0 0.0
        %1639 = vmatprep.subr.mxu0 0.0
        %1640 = vmatpush2.msra.mxu0 0.0
        %1641 = vmatprep.subr.mxu0 0.0
        %1642 = vmatpush2.msra.mxu0 0.0
        %1643 = vmatprep.subr.mxu0 0.0
        %1644 = vmatpush2.msra.mxu0 0.0
        %1645 = vmatprep.subr.mxu0 0.0
        %1646 = vmatpush2.msra.mxu0 0.0
        %1647 = vmatprep.subr.mxu0 0.0
        %1648 = vmatpush2.msra.mxu0 0.0
        %1649 = vmatprep.mubr.f32.mxu0 0.0
        %1650 = vmatmul.mubr.f32.gmra.mxu0 %v1583
        %v1651 = vpop.f32.mrf.mxu0
        %v1652 = vadd.f32 0.0, %v1651
        %v1653 = vpop.f32.mrf.mxu0
        %1654 = vdwg.mxu0
        %v1656 = vsel %vm880, %v1507, 0
        %1658 = vmatprep.subr.mxu0 0.0
        %1659 = vmatpush1.msra.mxu0 0.0
        %1660 = vmatprep.subr.mxu0 0.0
        %1661 = vmatpush1.msra.mxu0 0.0
        %1662 = vmatprep.subr.mxu0 0.0
        %1663 = vmatpush1.msra.mxu0 0.0
        %1664 = vmatprep.subr.mxu0 0.0
        %1665 = vmatpush1.msra.mxu0 0.0
        %1666 = vmatprep.subr.mxu0 0.0
        %1667 = vmatpush1.msra.mxu0 0.0
        %1668 = vmatprep.subr.mxu0 0.0
        %1669 = vmatpush1.msra.mxu0 0.0
        %1670 = vmatprep.subr.mxu0 0.0
        %1671 = vmatpush1.msra.mxu0 0.0
        %1672 = vmatprep.subr.mxu0 0.0
        %1673 = vmatpush1.msra.mxu0 0.0
        %1674 = vmatprep.subr.mxu0 0.0
        %1675 = vmatpush1.msra.mxu0 0.0
        %1676 = vmatprep.subr.mxu0 0.0
        %1677 = vmatpush1.msra.mxu0 0.0
        %1678 = vmatprep.subr.mxu0 0.0
        %1679 = vmatpush1.msra.mxu0 0.0
        %1680 = vmatprep.subr.mxu0 0.0
        %1681 = vmatpush1.msra.mxu0 0.0
        %1682 = vmatprep.subr.mxu0 0.0
        %1683 = vmatpush1.msra.mxu0 0.0
        %1684 = vmatprep.subr.mxu0 0.0
        %1685 = vmatpush1.msra.mxu0 0.0
        %1686 = vmatprep.subr.mxu0 0.0
        %1687 = vmatpush1.msra.mxu0 0.0
        %1688 = vmatprep.subr.mxu0 0.0
        %1689 = vmatpush1.msra.mxu0 %v803
        %1690 = vmatprep.subr.mxu0 0.0
        %1691 = vmatpush2.msra.mxu0 0.0
        %1692 = vmatprep.subr.mxu0 0.0
        %1693 = vmatpush2.msra.mxu0 0.0
        %1694 = vmatprep.subr.mxu0 0.0
        %1695 = vmatpush2.msra.mxu0 0.0
        %1696 = vmatprep.subr.mxu0 0.0
        %1697 = vmatpush2.msra.mxu0 0.0
        %1698 = vmatprep.subr.mxu0 0.0
        %1699 = vmatpush2.msra.mxu0 0.0
        %1700 = vmatprep.subr.mxu0 0.0
        %1701 = vmatpush2.msra.mxu0 0.0
        %1702 = vmatprep.subr.mxu0 0.0
        %1703 = vmatpush2.msra.mxu0 0.0
        %1704 = vmatprep.subr.mxu0 0.0
        %1705 = vmatpush2.msra.mxu0 0.0
        %1706 = vmatprep.subr.mxu0 0.0
        %1707 = vmatpush2.msra.mxu0 0.0
        %1708 = vmatprep.subr.mxu0 0.0
        %1709 = vmatpush2.msra.mxu0 0.0
        %1710 = vmatprep.subr.mxu0 0.0
        %1711 = vmatpush2.msra.mxu0 0.0
        %1712 = vmatprep.subr.mxu0 0.0
        %1713 = vmatpush2.msra.mxu0 0.0
        %1714 = vmatprep.subr.mxu0 0.0
        %1715 = vmatpush2.msra.mxu0 0.0
        %1716 = vmatprep.subr.mxu0 0.0
        %1717 = vmatpush2.msra.mxu0 0.0
        %1718 = vmatprep.subr.mxu0 0.0
        %1719 = vmatpush2.msra.mxu0 0.0
        %1720 = vmatprep.subr.mxu0 0.0
        %1721 = vmatpush2.msra.mxu0 0.0
        %1722 = vmatprep.mubr.f32.mxu0 0.0
        %1723 = vmatmul.mubr.f32.gmra.mxu0 %v1656
        %v1724 = vpop.f32.mrf.mxu0
        %v1725 = vadd.f32 0.0, %v1724
        %v1726 = vpop.f32.mrf.mxu0
        %1727 = vdwg.mxu0
        %v1729 = vsel %vm880, %v1508, 0
        %1731 = vmatprep.subr.mxu0 0.0
        %1732 = vmatpush1.msra.mxu0 0.0
        %1733 = vmatprep.subr.mxu0 0.0
        %1734 = vmatpush1.msra.mxu0 0.0
        %1735 = vmatprep.subr.mxu0 0.0
        %1736 = vmatpush1.msra.mxu0 0.0
        %1737 = vmatprep.subr.mxu0 0.0
        %1738 = vmatpush1.msra.mxu0 0.0
        %1739 = vmatprep.subr.mxu0 0.0
        %1740 = vmatpush1.msra.mxu0 0.0
        %1741 = vmatprep.subr.mxu0 0.0
        %1742 = vmatpush1.msra.mxu0 0.0
        %1743 = vmatprep.subr.mxu0 0.0
        %1744 = vmatpush1.msra.mxu0 0.0
        %1745 = vmatprep.subr.mxu0 0.0
        %1746 = vmatpush1.msra.mxu0 0.0
        %1747 = vmatprep.subr.mxu0 0.0
        %1748 = vmatpush1.msra.mxu0 0.0
        %1749 = vmatprep.subr.mxu0 0.0
        %1750 = vmatpush1.msra.mxu0 0.0
        %1751 = vmatprep.subr.mxu0 0.0
        %1752 = vmatpush1.msra.mxu0 0.0
        %1753 = vmatprep.subr.mxu0 0.0
        %1754 = vmatpush1.msra.mxu0 0.0
        %1755 = vmatprep.subr.mxu0 0.0
        %1756 = vmatpush1.msra.mxu0 0.0
        %1757 = vmatprep.subr.mxu0 0.0
        %1758 = vmatpush1.msra.mxu0 0.0
        %1759 = vmatprep.subr.mxu0 0.0
        %1760 = vmatpush1.msra.mxu0 0.0
        %1761 = vmatprep.subr.mxu0 0.0
        %1762 = vmatpush1.msra.mxu0 %v873
        %1763 = vmatprep.subr.mxu0 0.0
        %1764 = vmatpush2.msra.mxu0 0.0
        %1765 = vmatprep.subr.mxu0 0.0
        %1766 = vmatpush2.msra.mxu0 0.0
        %1767 = vmatprep.subr.mxu0 0.0
        %1768 = vmatpush2.msra.mxu0 0.0
        %1769 = vmatprep.subr.mxu0 0.0
        %1770 = vmatpush2.msra.mxu0 0.0
        %1771 = vmatprep.subr.mxu0 0.0
        %1772 = vmatpush2.msra.mxu0 0.0
        %1773 = vmatprep.subr.mxu0 0.0
        %1774 = vmatpush2.msra.mxu0 0.0
        %1775 = vmatprep.subr.mxu0 0.0
        %1776 = vmatpush2.msra.mxu0 0.0
        %1777 = vmatprep.subr.mxu0 0.0
        %1778 = vmatpush2.msra.mxu0 0.0
        %1779 = vmatprep.subr.mxu0 0.0
        %1780 = vmatpush2.msra.mxu0 0.0
        %1781 = vmatprep.subr.mxu0 0.0
        %1782 = vmatpush2.msra.mxu0 0.0
        %1783 = vmatprep.subr.mxu0 0.0
        %1784 = vmatpush2.msra.mxu0 0.0
        %1785 = vmatprep.subr.mxu0 0.0
        %1786 = vmatpush2.msra.mxu0 0.0
        %1787 = vmatprep.subr.mxu0 0.0
        %1788 = vmatpush2.msra.mxu0 0.0
        %1789 = vmatprep.subr.mxu0 0.0
        %1790 = vmatpush2.msra.mxu0 0.0
        %1791 = vmatprep.subr.mxu0 0.0
        %1792 = vmatpush2.msra.mxu0 0.0
        %1793 = vmatprep.subr.mxu0 0.0
        %1794 = vmatpush2.msra.mxu0 0.0
        %1795 = vmatprep.mubr.f32.mxu0 0.0
        %1796 = vmatmul.mubr.f32.gmra.mxu0 %v1729
        %v1797 = vpop.f32.mrf.mxu0
        %v1798 = vadd.f32 0.0, %v1797
        %v1799 = vpop.f32.mrf.mxu0
        %1800 = vdwg.mxu0
        %v1801 = vld [vmem:[%s6] sm:$0xff]
        %v1802 = vld [vmem:[%s6 + $0x8] sm:$0xff]
        %v1803 = vld [vmem:[%s6 + $0x10] sm:$0xff]
        %v1804 = vld [vmem:[%s6 + $0x18] sm:$0xff]
        %v1806 = vsel %vm880, %v1579, 0
        %1808 = vmatprep.subr.mxu0 0.0
        %1809 = vmatpush1.msra.mxu0 0.0
        %1810 = vmatprep.subr.mxu0 0.0
        %1811 = vmatpush1.msra.mxu0 0.0
        %1812 = vmatprep.subr.mxu0 0.0
        %1813 = vmatpush1.msra.mxu0 0.0
        %1814 = vmatprep.subr.mxu0 0.0
        %1815 = vmatpush1.msra.mxu0 0.0
        %1816 = vmatprep.subr.mxu0 0.0
        %1817 = vmatpush1.msra.mxu0 0.0
        %1818 = vmatprep.subr.mxu0 0.0
        %1819 = vmatpush1.msra.mxu0 0.0
        %1820 = vmatprep.subr.mxu0 0.0
        %1821 = vmatpush1.msra.mxu0 0.0
        %1822 = vmatprep.subr.mxu0 0.0
        %1823 = vmatpush1.msra.mxu0 0.0
        %1824 = vmatprep.subr.mxu0 0.0
        %1825 = vmatpush1.msra.mxu0 0.0
        %1826 = vmatprep.subr.mxu0 0.0
        %1827 = vmatpush1.msra.mxu0 0.0
        %1828 = vmatprep.subr.mxu0 0.0
        %1829 = vmatpush1.msra.mxu0 0.0
        %1830 = vmatprep.subr.mxu0 0.0
        %1831 = vmatpush1.msra.mxu0 0.0
        %1832 = vmatprep.subr.mxu0 0.0
        %1833 = vmatpush1.msra.mxu0 0.0
        %1834 = vmatprep.subr.mxu0 0.0
        %1835 = vmatpush1.msra.mxu0 0.0
        %1836 = vmatprep.subr.mxu0 0.0
        %1837 = vmatpush1.msra.mxu0 0.0
        %1838 = vmatprep.subr.mxu0 0.0
        %1839 = vmatpush1.msra.mxu0 %v1801
        %1840 = vmatprep.subr.mxu0 0.0
        %1841 = vmatpush2.msra.mxu0 0.0
        %1842 = vmatprep.subr.mxu0 0.0
        %1843 = vmatpush2.msra.mxu0 0.0
        %1844 = vmatprep.subr.mxu0 0.0
        %1845 = vmatpush2.msra.mxu0 0.0
        %1846 = vmatprep.subr.mxu0 0.0
        %1847 = vmatpush2.msra.mxu0 0.0
        %1848 = vmatprep.subr.mxu0 0.0
        %1849 = vmatpush2.msra.mxu0 0.0
        %1850 = vmatprep.subr.mxu0 0.0
        %1851 = vmatpush2.msra.mxu0 0.0
        %1852 = vmatprep.subr.mxu0 0.0
        %1853 = vmatpush2.msra.mxu0 0.0
        %1854 = vmatprep.subr.mxu0 0.0
        %1855 = vmatpush2.msra.mxu0 0.0
        %1856 = vmatprep.subr.mxu0 0.0
        %1857 = vmatpush2.msra.mxu0 0.0
        %1858 = vmatprep.subr.mxu0 0.0
        %1859 = vmatpush2.msra.mxu0 0.0
        %1860 = vmatprep.subr.mxu0 0.0
        %1861 = vmatpush2.msra.mxu0 0.0
        %1862 = vmatprep.subr.mxu0 0.0
        %1863 = vmatpush2.msra.mxu0 0.0
        %1864 = vmatprep.subr.mxu0 0.0
        %1865 = vmatpush2.msra.mxu0 0.0
        %1866 = vmatprep.subr.mxu0 0.0
        %1867 = vmatpush2.msra.mxu0 0.0
        %1868 = vmatprep.subr.mxu0 0.0
        %1869 = vmatpush2.msra.mxu0 0.0
        %1870 = vmatprep.subr.mxu0 0.0
        %1871 = vmatpush2.msra.mxu0 0.0
        %1872 = vmatprep.mubr.f32.mxu0 0.0
        %1873 = vmatmul.mubr.f32.gmra.mxu0 %v1806
        %v1874 = vpop.f32.mrf.mxu0
        %v1875 = vadd.f32 0.0, %v1874
        %v1876 = vpop.f32.mrf.mxu0
        %1877 = vdwg.mxu0
        %v1879 = vsel %vm880, %v1652, 0
        %1881 = vmatprep.subr.mxu0 0.0
        %1882 = vmatpush1.msra.mxu0 0.0
        %1883 = vmatprep.subr.mxu0 0.0
        %1884 = vmatpush1.msra.mxu0 0.0
        %1885 = vmatprep.subr.mxu0 0.0
        %1886 = vmatpush1.msra.mxu0 0.0
        %1887 = vmatprep.subr.mxu0 0.0
        %1888 = vmatpush1.msra.mxu0 0.0
        %1889 = vmatprep.subr.mxu0 0.0
        %1890 = vmatpush1.msra.mxu0 0.0
        %1891 = vmatprep.subr.mxu0 0.0
        %1892 = vmatpush1.msra.mxu0 0.0
        %1893 = vmatprep.subr.mxu0 0.0
        %1894 = vmatpush1.msra.mxu0 0.0
        %1895 = vmatprep.subr.mxu0 0.0
        %1896 = vmatpush1.msra.mxu0 0.0
        %1897 = vmatprep.subr.mxu0 0.0
        %1898 = vmatpush1.msra.mxu0 0.0
        %1899 = vmatprep.subr.mxu0 0.0
        %1900 = vmatpush1.msra.mxu0 0.0
        %1901 = vmatprep.subr.mxu0 0.0
        %1902 = vmatpush1.msra.mxu0 0.0
        %1903 = vmatprep.subr.mxu0 0.0
        %1904 = vmatpush1.msra.mxu0 0.0
        %1905 = vmatprep.subr.mxu0 0.0
        %1906 = vmatpush1.msra.mxu0 0.0
        %1907 = vmatprep.subr.mxu0 0.0
        %1908 = vmatpush1.msra.mxu0 0.0
        %1909 = vmatprep.subr.mxu0 0.0
        %1910 = vmatpush1.msra.mxu0 0.0
        %1911 = vmatprep.subr.mxu0 0.0
        %1912 = vmatpush1.msra.mxu0 %v1802
        %1913 = vmatprep.subr.mxu0 0.0
        %1914 = vmatpush2.msra.mxu0 0.0
        %1915 = vmatprep.subr.mxu0 0.0
        %1916 = vmatpush2.msra.mxu0 0.0
        %1917 = vmatprep.subr.mxu0 0.0
        %1918 = vmatpush2.msra.mxu0 0.0
        %1919 = vmatprep.subr.mxu0 0.0
        %1920 = vmatpush2.msra.mxu0 0.0
        %1921 = vmatprep.subr.mxu0 0.0
        %1922 = vmatpush2.msra.mxu0 0.0
        %1923 = vmatprep.subr.mxu0 0.0
        %1924 = vmatpush2.msra.mxu0 0.0
        %1925 = vmatprep.subr.mxu0 0.0
        %1926 = vmatpush2.msra.mxu0 0.0
        %1927 = vmatprep.subr.mxu0 0.0
        %1928 = vmatpush2.msra.mxu0 0.0
        %1929 = vmatprep.subr.mxu0 0.0
        %1930 = vmatpush2.msra.mxu0 0.0
        %1931 = vmatprep.subr.mxu0 0.0
        %1932 = vmatpush2.msra.mxu0 0.0
        %1933 = vmatprep.subr.mxu0 0.0
        %1934 = vmatpush2.msra.mxu0 0.0
        %1935 = vmatprep.subr.mxu0 0.0
        %1936 = vmatpush2.msra.mxu0 0.0
        %1937 = vmatprep.subr.mxu0 0.0
        %1938 = vmatpush2.msra.mxu0 0.0
        %1939 = vmatprep.subr.mxu0 0.0
        %1940 = vmatpush2.msra.mxu0 0.0
        %1941 = vmatprep.subr.mxu0 0.0
        %1942 = vmatpush2.msra.mxu0 0.0
        %1943 = vmatprep.subr.mxu0 0.0
        %1944 = vmatpush2.msra.mxu0 0.0
        %1945 = vmatprep.mubr.f32.mxu0 0.0
        %1946 = vmatmul.mubr.f32.gmra.mxu0 %v1879
        %v1947 = vpop.f32.mrf.mxu0
        %v1948 = vadd.f32 0.0, %v1947
        %v1949 = vpop.f32.mrf.mxu0
        %1950 = vdwg.mxu0
        %v1952 = vsel %vm880, %v1725, 0
        %1954 = vmatprep.subr.mxu0 0.0
        %1955 = vmatpush1.msra.mxu0 0.0
        %1956 = vmatprep.subr.mxu0 0.0
        %1957 = vmatpush1.msra.mxu0 0.0
        %1958 = vmatprep.subr.mxu0 0.0
        %1959 = vmatpush1.msra.mxu0 0.0
        %1960 = vmatprep.subr.mxu0 0.0
        %1961 = vmatpush1.msra.mxu0 0.0
        %1962 = vmatprep.subr.mxu0 0.0
        %1963 = vmatpush1.msra.mxu0 0.0
        %1964 = vmatprep.subr.mxu0 0.0
        %1965 = vmatpush1.msra.mxu0 0.0
        %1966 = vmatprep.subr.mxu0 0.0
        %1967 = vmatpush1.msra.mxu0 0.0
        %1968 = vmatprep.subr.mxu0 0.0
        %1969 = vmatpush1.msra.mxu0 0.0
        %1970 = vmatprep.subr.mxu0 0.0
        %1971 = vmatpush1.msra.mxu0 0.0
        %1972 = vmatprep.subr.mxu0 0.0
        %1973 = vmatpush1.msra.mxu0 0.0
        %1974 = vmatprep.subr.mxu0 0.0
        %1975 = vmatpush1.msra.mxu0 0.0
        %1976 = vmatprep.subr.mxu0 0.0
        %1977 = vmatpush1.msra.mxu0 0.0
        %1978 = vmatprep.subr.mxu0 0.0
        %1979 = vmatpush1.msra.mxu0 0.0
        %1980 = vmatprep.subr.mxu0 0.0
        %1981 = vmatpush1.msra.mxu0 0.0
        %1982 = vmatprep.subr.mxu0 0.0
        %1983 = vmatpush1.msra.mxu0 0.0
        %1984 = vmatprep.subr.mxu0 0.0
        %1985 = vmatpush1.msra.mxu0 %v1803
        %1986 = vmatprep.subr.mxu0 0.0
        %1987 = vmatpush2.msra.mxu0 0.0
        %1988 = vmatprep.subr.mxu0 0.0
        %1989 = vmatpush2.msra.mxu0 0.0
        %1990 = vmatprep.subr.mxu0 0.0
        %1991 = vmatpush2.msra.mxu0 0.0
        %1992 = vmatprep.subr.mxu0 0.0
        %1993 = vmatpush2.msra.mxu0 0.0
        %1994 = vmatprep.subr.mxu0 0.0
        %1995 = vmatpush2.msra.mxu0 0.0
        %1996 = vmatprep.subr.mxu0 0.0
        %1997 = vmatpush2.msra.mxu0 0.0
        %1998 = vmatprep.subr.mxu0 0.0
        %1999 = vmatpush2.msra.mxu0 0.0
        %2000 = vmatprep.subr.mxu0 0.0
        %2001 = vmatpush2.msra.mxu0 0.0
        %2002 = vmatprep.subr.mxu0 0.0
        %2003 = vmatpush2.msra.mxu0 0.0
        %2004 = vmatprep.subr.mxu0 0.0
        %2005 = vmatpush2.msra.mxu0 0.0
        %2006 = vmatprep.subr.mxu0 0.0
        %2007 = vmatpush2.msra.mxu0 0.0
        %2008 = vmatprep.subr.mxu0 0.0
        %2009 = vmatpush2.msra.mxu0 0.0
        %2010 = vmatprep.subr.mxu0 0.0
        %2011 = vmatpush2.msra.mxu0 0.0
        %2012 = vmatprep.subr.mxu0 0.0
        %2013 = vmatpush2.msra.mxu0 0.0
        %2014 = vmatprep.subr.mxu0 0.0
        %2015 = vmatpush2.msra.mxu0 0.0
        %2016 = vmatprep.subr.mxu0 0.0
        %2017 = vmatpush2.msra.mxu0 0.0
        %2018 = vmatprep.mubr.f32.mxu0 0.0
        %2019 = vmatmul.mubr.f32.gmra.mxu0 %v1952
        %v2020 = vpop.f32.mrf.mxu0
        %v2021 = vadd.f32 0.0, %v2020
        %v2022 = vpop.f32.mrf.mxu0
        %2023 = vdwg.mxu0
        %v2025 = vsel %vm880, %v1798, 0
        %2027 = vmatprep.subr.mxu0 0.0
        %2028 = vmatpush1.msra.mxu0 0.0
        %2029 = vmatprep.subr.mxu0 0.0
        %2030 = vmatpush1.msra.mxu0 0.0
        %2031 = vmatprep.subr.mxu0 0.0
        %2032 = vmatpush1.msra.mxu0 0.0
        %2033 = vmatprep.subr.mxu0 0.0
        %2034 = vmatpush1.msra.mxu0 0.0
        %2035 = vmatprep.subr.mxu0 0.0
        %2036 = vmatpush1.msra.mxu0 0.0
        %2037 = vmatprep.subr.mxu0 0.0
        %2038 = vmatpush1.msra.mxu0 0.0
        %2039 = vmatprep.subr.mxu0 0.0
        %2040 = vmatpush1.msra.mxu0 0.0
        %2041 = vmatprep.subr.mxu0 0.0
        %2042 = vmatpush1.msra.mxu0 0.0
        %2043 = vmatprep.subr.mxu0 0.0
        %2044 = vmatpush1.msra.mxu0 0.0
        %2045 = vmatprep.subr.mxu0 0.0
        %2046 = vmatpush1.msra.mxu0 0.0
        %2047 = vmatprep.subr.mxu0 0.0
        %2048 = vmatpush1.msra.mxu0 0.0
        %2049 = vmatprep.subr.mxu0 0.0
        %2050 = vmatpush1.msra.mxu0 0.0
        %2051 = vmatprep.subr.mxu0 0.0
        %2052 = vmatpush1.msra.mxu0 0.0
        %2053 = vmatprep.subr.mxu0 0.0
        %2054 = vmatpush1.msra.mxu0 0.0
        %2055 = vmatprep.subr.mxu0 0.0
        %2056 = vmatpush1.msra.mxu0 0.0
        %2057 = vmatprep.subr.mxu0 0.0
        %2058 = vmatpush1.msra.mxu0 %v1804
        %2059 = vmatprep.subr.mxu0 0.0
        %2060 = vmatpush2.msra.mxu0 0.0
        %2061 = vmatprep.subr.mxu0 0.0
        %2062 = vmatpush2.msra.mxu0 0.0
        %2063 = vmatprep.subr.mxu0 0.0
        %2064 = vmatpush2.msra.mxu0 0.0
        %2065 = vmatprep.subr.mxu0 0.0
        %2066 = vmatpush2.msra.mxu0 0.0
        %2067 = vmatprep.subr.mxu0 0.0
        %2068 = vmatpush2.msra.mxu0 0.0
        %2069 = vmatprep.subr.mxu0 0.0
        %2070 = vmatpush2.msra.mxu0 0.0
        %2071 = vmatprep.subr.mxu0 0.0
        %2072 = vmatpush2.msra.mxu0 0.0
        %2073 = vmatprep.subr.mxu0 0.0
        %2074 = vmatpush2.msra.mxu0 0.0
        %2075 = vmatprep.subr.mxu0 0.0
        %2076 = vmatpush2.msra.mxu0 0.0
        %2077 = vmatprep.subr.mxu0 0.0
        %2078 = vmatpush2.msra.mxu0 0.0
        %2079 = vmatprep.subr.mxu0 0.0
        %2080 = vmatpush2.msra.mxu0 0.0
        %2081 = vmatprep.subr.mxu0 0.0
        %2082 = vmatpush2.msra.mxu0 0.0
        %2083 = vmatprep.subr.mxu0 0.0
        %2084 = vmatpush2.msra.mxu0 0.0
        %2085 = vmatprep.subr.mxu0 0.0
        %2086 = vmatpush2.msra.mxu0 0.0
        %2087 = vmatprep.subr.mxu0 0.0
        %2088 = vmatpush2.msra.mxu0 0.0
        %2089 = vmatprep.subr.mxu0 0.0
        %2090 = vmatpush2.msra.mxu0 0.0
        %2091 = vmatprep.mubr.f32.mxu0 0.0
        %2092 = vmatmul.mubr.f32.gmra.mxu0 %v2025
        %v2093 = vpop.f32.mrf.mxu0
        %v2094 = vadd.f32 0.0, %v2093
        %v2095 = vpop.f32.mrf.mxu0
        %2096 = vdwg.mxu0
        %v2097 = vsel %vm520, %v1875, 0.0
        %v2098 = vsel %vm520, %v1948, 0.0
        %v2099 = vadd.f32 %v2097, %v2098
        %v2100 = vsel %vm520, %v2021, 0.0
        %v2101 = vadd.f32 %v2099, %v2100
        %v2102 = vsel %vm520, %v2094, 0.0
        %v2103 = vadd.f32 %v2101, %v2102
        %v2104 = vld [vmem:[%s7] sm:$0x1]
        %v2106 = vlaneseq
        %v2107 = vshrl.u32 %v2106, 7
        %v2108 = vsub.s32 0, %v2107
        %v2109 = vrot.slane %v2104, %v2108
        %v2111 = vadd.f32 %v2103, %v2109
        %v2112 = vadd.f32 %v2111, %v517
        %v2113 = vld [vmem:[%s8] sm:$0x1]
        %v2114 = vld [vmem:[%s9] sm:$0x1]
        %v2115 = vsel %vm520, %v2112, 0.0
        %2116 = vadd.xlane.f32.xlu0 %v2115
        %v2117 = vpop.xlane.xlu0 %2116
        %v2118 = vmul.f32 %v2117, %v524
        %v2119 = vsub.f32 %v2112, %v2118
        %v2120 = vmul.f32 %v2119, %v2119
        %v2121 = vsel %vm520, %v2120, 0.0
        %2122 = vadd.xlane.f32.xlu0 %v2121
        %v2123 = vpop.xlane.xlu0 %2122
        %v2124 = vmul.f32 %v2123, %v524
        %v2125 = vadd.f32 %v2124, 1e-05
        %v2126 = vrsqrt.pop %v2125
        %v2127 = vmul.f32 %v2119, %v2126
        %v2129 = vlaneseq
        %v2130 = vshrl.u32 %v2129, 7
        %v2131 = vsub.s32 0, %v2130
        %v2132 = vrot.slane %v2113, %v2131
        %v2134 = vmul.f32 %v2127, %v2132
        %v2136 = vlaneseq
        %v2137 = vshrl.u32 %v2136, 7
        %v2138 = vsub.s32 0, %v2137
        %v2139 = vrot.slane %v2114, %v2138
        %v2141 = vadd.f32 %v2134, %v2139
        %v2142 = vld [vmem:[%s10] sm:$0xff]
        %v2143 = vld [vmem:[%s10 + $0x8] sm:$0xff]
        %v2144 = vld [vmem:[%s10 + $0x10] sm:$0xff]
        %v2145 = vld [vmem:[%s10 + $0x18] sm:$0xff]
        %v2146 = vld [vmem:[%s11] sm:$0x1]
        %v2148 = vlaneseq
        %v2149 = vshrl.u32 %v2148, 7
        %v2150 = vsub.s32 0, %v2149
        %v2151 = vrot.slane %v2146, %v2150
        %v2154 = vsel %vm520, %v2141, 0
        %2156 = vmatprep.subr.mxu0 0.0
        %2157 = vmatpush1.msra.mxu0 0.0
        %2158 = vmatprep.subr.mxu0 0.0
        %2159 = vmatpush1.msra.mxu0 0.0
        %2160 = vmatprep.subr.mxu0 0.0
        %2161 = vmatpush1.msra.mxu0 0.0
        %2162 = vmatprep.subr.mxu0 0.0
        %2163 = vmatpush1.msra.mxu0 0.0
        %2164 = vmatprep.subr.mxu0 0.0
        %2165 = vmatpush1.msra.mxu0 0.0
        %2166 = vmatprep.subr.mxu0 0.0
        %2167 = vmatpush1.msra.mxu0 0.0
        %2168 = vmatprep.subr.mxu0 0.0
        %2169 = vmatpush1.msra.mxu0 0.0
        %2170 = vmatprep.subr.mxu0 0.0
        %2171 = vmatpush1.msra.mxu0 0.0
        %2172 = vmatprep.subr.mxu0 0.0
        %2173 = vmatpush1.msra.mxu0 0.0
        %2174 = vmatprep.subr.mxu0 0.0
        %2175 = vmatpush1.msra.mxu0 0.0
        %2176 = vmatprep.subr.mxu0 0.0
        %2177 = vmatpush1.msra.mxu0 0.0
        %2178 = vmatprep.subr.mxu0 0.0
        %2179 = vmatpush1.msra.mxu0 0.0
        %2180 = vmatprep.subr.mxu0 0.0
        %2181 = vmatpush1.msra.mxu0 %v2145
        %2182 = vmatprep.subr.mxu0 0.0
        %2183 = vmatpush1.msra.mxu0 %v2144
        %2184 = vmatprep.subr.mxu0 0.0
        %2185 = vmatpush1.msra.mxu0 %v2143
        %2186 = vmatprep.subr.mxu0 0.0
        %2187 = vmatpush1.msra.mxu0 %v2142
        %2188 = vmatprep.subr.mxu0 0.0
        %2189 = vmatpush2.msra.mxu0 0.0
        %2190 = vmatprep.subr.mxu0 0.0
        %2191 = vmatpush2.msra.mxu0 0.0
        %2192 = vmatprep.subr.mxu0 0.0
        %2193 = vmatpush2.msra.mxu0 0.0
        %2194 = vmatprep.subr.mxu0 0.0
        %2195 = vmatpush2.msra.mxu0 0.0
        %2196 = vmatprep.subr.mxu0 0.0
        %2197 = vmatpush2.msra.mxu0 0.0
        %2198 = vmatprep.subr.mxu0 0.0
        %2199 = vmatpush2.msra.mxu0 0.0
        %2200 = vmatprep.subr.mxu0 0.0
        %2201 = vmatpush2.msra.mxu0 0.0
        %2202 = vmatprep.subr.mxu0 0.0
        %2203 = vmatpush2.msra.mxu0 0.0
        %2204 = vmatprep.subr.mxu0 0.0
        %2205 = vmatpush2.msra.mxu0 0.0
        %2206 = vmatprep.subr.mxu0 0.0
        %2207 = vmatpush2.msra.mxu0 0.0
        %2208 = vmatprep.subr.mxu0 0.0
        %2209 = vmatpush2.msra.mxu0 0.0
        %2210 = vmatprep.subr.mxu0 0.0
        %2211 = vmatpush2.msra.mxu0 0.0
        %2212 = vmatprep.subr.mxu0 0.0
        %2213 = vmatpush2.msra.mxu0 0.0
        %2214 = vmatprep.subr.mxu0 0.0
        %2215 = vmatpush2.msra.mxu0 0.0
        %2216 = vmatprep.subr.mxu0 0.0
        %2217 = vmatpush2.msra.mxu0 0.0
        %2218 = vmatprep.subr.mxu0 0.0
        %2219 = vmatpush2.msra.mxu0 0.0
        %2220 = vmatprep.mubr.f32.mxu0 0.0
        %2221 = vmatmul.mubr.f32.gmra.mxu0 %v2154
        %v2222 = vpop.f32.mrf.mxu0
        %v2223 = vadd.f32 %v2151, %v2222
        %v2224 = vpop.f32.mrf.mxu0
        %2225 = vdwg.mxu0
        %v2226 = vmul.f32 %v2223, 0.5
        %v2227 = vmul.f32 %v2223, 0.70710677
        %v2228 = verf.f32.pop %v2227
        %v2229 = vadd.f32 %v2228, 1.0
        %v2230 = vmul.f32 %v2226, %v2229
        %v2231 = vld [vmem:[%s12] sm:$0xff]
        %v2232 = vld [vmem:[%s12 + $0x8] sm:$0xff]
        %v2233 = vld [vmem:[%s12 + $0x10] sm:$0xff]
        %v2234 = vld [vmem:[%s12 + $0x18] sm:$0xff]
        %v2235 = vld [vmem:[%s12 + $0x20] sm:$0xff]
        %v2236 = vld [vmem:[%s12 + $0x28] sm:$0xff]
        %v2237 = vld [vmem:[%s12 + $0x30] sm:$0xff]
        %v2238 = vld [vmem:[%s12 + $0x38] sm:$0xff]
        %v2239 = vld [vmem:[%s13] sm:$0x1]
        %v2241 = vlaneseq
        %v2242 = vshrl.u32 %v2241, 7
        %v2243 = vsub.s32 0, %v2242
        %v2244 = vrot.slane %v2239, %v2243
        %vm2246 = vcmask 523264
        %v2248 = vsel %vm2246, %v2230, 0
        %2250 = vmatprep.subr.mxu0 0.0
        %2251 = vmatpush1.msra.mxu0 0.0
        %2252 = vmatprep.subr.mxu0 0.0
        %2253 = vmatpush1.msra.mxu0 0.0
        %2254 = vmatprep.subr.mxu0 0.0
        %2255 = vmatpush1.msra.mxu0 0.0
        %2256 = vmatprep.subr.mxu0 0.0
        %2257 = vmatpush1.msra.mxu0 0.0
        %2258 = vmatprep.subr.mxu0 0.0
        %2259 = vmatpush1.msra.mxu0 0.0
        %2260 = vmatprep.subr.mxu0 0.0
        %2261 = vmatpush1.msra.mxu0 0.0
        %2262 = vmatprep.subr.mxu0 0.0
        %2263 = vmatpush1.msra.mxu0 0.0
        %2264 = vmatprep.subr.mxu0 0.0
        %2265 = vmatpush1.msra.mxu0 0.0
        %2266 = vmatprep.subr.mxu0 0.0
        %2267 = vmatpush1.msra.mxu0 %v2238
        %2268 = vmatprep.subr.mxu0 0.0
        %2269 = vmatpush1.msra.mxu0 %v2237
        %2270 = vmatprep.subr.mxu0 0.0
        %2271 = vmatpush1.msra.mxu0 %v2236
        %2272 = vmatprep.subr.mxu0 0.0
        %2273 = vmatpush1.msra.mxu0 %v2235
        %2274 = vmatprep.subr.mxu0 0.0
        %2275 = vmatpush1.msra.mxu0 %v2234
        %2276 = vmatprep.subr.mxu0 0.0
        %2277 = vmatpush1.msra.mxu0 %v2233
        %2278 = vmatprep.subr.mxu0 0.0
        %2279 = vmatpush1.msra.mxu0 %v2232
        %2280 = vmatprep.subr.mxu0 0.0
        %2281 = vmatpush1.msra.mxu0 %v2231
        %2282 = vmatprep.subr.mxu0 0.0
        %2283 = vmatpush2.msra.mxu0 0.0
        %2284 = vmatprep.subr.mxu0 0.0
        %2285 = vmatpush2.msra.mxu0 0.0
        %2286 = vmatprep.subr.mxu0 0.0
        %2287 = vmatpush2.msra.mxu0 0.0
        %2288 = vmatprep.subr.mxu0 0.0
        %2289 = vmatpush2.msra.mxu0 0.0
        %2290 = vmatprep.subr.mxu0 0.0
        %2291 = vmatpush2.msra.mxu0 0.0
        %2292 = vmatprep.subr.mxu0 0.0
        %2293 = vmatpush2.msra.mxu0 0.0
        %2294 = vmatprep.subr.mxu0 0.0
        %2295 = vmatpush2.msra.mxu0 0.0
        %2296 = vmatprep.subr.mxu0 0.0
        %2297 = vmatpush2.msra.mxu0 0.0
        %2298 = vmatprep.subr.mxu0 0.0
        %2299 = vmatpush2.msra.mxu0 0.0
        %2300 = vmatprep.subr.mxu0 0.0
        %2301 = vmatpush2.msra.mxu0 0.0
        %2302 = vmatprep.subr.mxu0 0.0
        %2303 = vmatpush2.msra.mxu0 0.0
        %2304 = vmatprep.subr.mxu0 0.0
        %2305 = vmatpush2.msra.mxu0 0.0
        %2306 = vmatprep.subr.mxu0 0.0
        %2307 = vmatpush2.msra.mxu0 0.0
        %2308 = vmatprep.subr.mxu0 0.0
        %2309 = vmatpush2.msra.mxu0 0.0
        %2310 = vmatprep.subr.mxu0 0.0
        %2311 = vmatpush2.msra.mxu0 0.0
        %2312 = vmatprep.subr.mxu0 0.0
        %2313 = vmatpush2.msra.mxu0 0.0
        %2314 = vmatprep.mubr.f32.mxu0 0.0
        %2315 = vmatmul.mubr.f32.gmra.mxu0 %v2248
        %v2316 = vpop.f32.mrf.mxu0
        %v2317 = vadd.f32 %v2244, %v2316
        %v2318 = vpop.f32.mrf.mxu0
        %2319 = vdwg.mxu0
        %v2320 = vadd.f32 %v2112, %v2317
        %s2321 = scalar_lea.vmem %s1, 1
        %v2322 = vld [vmem:[%s2321] sm:$0x1]
        %s2323 = scalar_lea.vmem %s2, 1
        %v2324 = vld [vmem:[%s2323] sm:$0x1]
        %v2325 = vsel %vm520, %v2320, 0.0
        %2326 = vadd.xlane.f32.xlu0 %v2325
        %v2327 = vpop.xlane.xlu0 %2326
        %v2328 = vmul.f32 %v2327, %v524
        %v2329 = vsub.f32 %v2320, %v2328
        %v2330 = vmul.f32 %v2329, %v2329
        %v2331 = vsel %vm520, %v2330, 0.0
        %2332 = vadd.xlane.f32.xlu0 %v2331
        %v2333 = vpop.xlane.xlu0 %2332
        %v2334 = vmul.f32 %v2333, %v524
        %v2335 = vadd.f32 %v2334, 1e-05
        %v2336 = vrsqrt.pop %v2335
        %v2337 = vmul.f32 %v2329, %v2336
        %v2339 = vlaneseq
        %v2340 = vshrl.u32 %v2339, 7
        %v2341 = vsub.s32 0, %v2340
        %v2342 = vrot.slane %v2322, %v2341
        %v2344 = vmul.f32 %v2337, %v2342
        %v2346 = vlaneseq
        %v2347 = vshrl.u32 %v2346, 7
        %v2348 = vsub.s32 0, %v2347
        %v2349 = vrot.slane %v2324, %v2348
        %v2351 = vadd.f32 %v2344, %v2349
        %s2352 = scalar_lea.vmem %s3, 128
        %v2353 = vld [vmem:[%s2352] sm:$0xff]
        %v2354 = vld [vmem:[%s2352 + $0x8] sm:$0xff]
        %v2355 = vld [vmem:[%s2352 + $0x10] sm:$0xff]
        %v2356 = vld [vmem:[%s2352 + $0x18] sm:$0xff]
        %v2357 = vld [vmem:[%s2352 + $0x20] sm:$0xff]
        %v2358 = vld [vmem:[%s2352 + $0x28] sm:$0xff]
        %v2359 = vld [vmem:[%s2352 + $0x30] sm:$0xff]
        %v2360 = vld [vmem:[%s2352 + $0x38] sm:$0xff]
        %v2361 = vld [vmem:[%s2352 + $0x40] sm:$0xff]
        %v2362 = vld [vmem:[%s2352 + $0x48] sm:$0xff]
        %v2363 = vld [vmem:[%s2352 + $0x50] sm:$0xff]
        %v2364 = vld [vmem:[%s2352 + $0x58] sm:$0xff]
        %v2365 = vld [vmem:[%s2352 + $0x60] sm:$0xff]
        %v2366 = vld [vmem:[%s2352 + $0x68] sm:$0xff]
        %v2367 = vld [vmem:[%s2352 + $0x70] sm:$0xff]
        %v2368 = vld [vmem:[%s2352 + $0x78] sm:$0xff]
        %s2369 = scalar_lea.vmem %s4, 4
        %v2370 = vld [vmem:[%s2369] sm:$0x1]
        %v2371 = vld [vmem:[%s2369 + $0x1] sm:$0x1]
        %v2372 = vld [vmem:[%s2369 + $0x2] sm:$0x1]
        %v2373 = vld [vmem:[%s2369 + $0x3] sm:$0x1]
        %v2378 = vlaneseq
        %v2379 = vshrl.u32 %v2378, 7
        %v2380 = vsub.s32 0, %v2379
        %v2381 = vrot.slane %v2370, %v2380
        %v2382 = vlaneseq
        %v2383 = vshrl.u32 %v2382, 7
        %v2384 = vsub.s32 0, %v2383
        %v2385 = vrot.slane %v2371, %v2384
        %v2386 = vlaneseq
        %v2387 = vshrl.u32 %v2386, 7
        %v2388 = vsub.s32 0, %v2387
        %v2389 = vrot.slane %v2372, %v2388
        %v2390 = vlaneseq
        %v2391 = vshrl.u32 %v2390, 7
        %v2392 = vsub.s32 0, %v2391
        %v2393 = vrot.slane %v2373, %v2392
        %v2399 = vsel %vm520, %v2351, 0
        %2401 = vmatprep.subr.mxu0 0.0
        %2402 = vmatpush1.msra.mxu0 0.0
        %2403 = vmatprep.subr.mxu0 0.0
        %2404 = vmatpush1.msra.mxu0 0.0
        %2405 = vmatprep.subr.mxu0 0.0
        %2406 = vmatpush1.msra.mxu0 0.0
        %2407 = vmatprep.subr.mxu0 0.0
        %2408 = vmatpush1.msra.mxu0 0.0
        %2409 = vmatprep.subr.mxu0 0.0
        %2410 = vmatpush1.msra.mxu0 0.0
        %2411 = vmatprep.subr.mxu0 0.0
        %2412 = vmatpush1.msra.mxu0 0.0
        %2413 = vmatprep.subr.mxu0 0.0
        %2414 = vmatpush1.msra.mxu0 0.0
        %2415 = vmatprep.subr.mxu0 0.0
        %2416 = vmatpush1.msra.mxu0 0.0
        %2417 = vmatprep.subr.mxu0 0.0
        %2418 = vmatpush1.msra.mxu0 0.0
        %2419 = vmatprep.subr.mxu0 0.0
        %2420 = vmatpush1.msra.mxu0 0.0
        %2421 = vmatprep.subr.mxu0 0.0
        %2422 = vmatpush1.msra.mxu0 0.0
        %2423 = vmatprep.subr.mxu0 0.0
        %2424 = vmatpush1.msra.mxu0 0.0
        %2425 = vmatprep.subr.mxu0 0.0
        %2426 = vmatpush1.msra.mxu0 %v2356
        %2427 = vmatprep.subr.mxu0 0.0
        %2428 = vmatpush1.msra.mxu0 %v2355
        %2429 = vmatprep.subr.mxu0 0.0
        %2430 = vmatpush1.msra.mxu0 %v2354
        %2431 = vmatprep.subr.mxu0 0.0
        %2432 = vmatpush1.msra.mxu0 %v2353
        %2433 = vmatprep.subr.mxu0 0.0
        %2434 = vmatpush2.msra.mxu0 0.0
        %2435 = vmatprep.subr.mxu0 0.0
        %2436 = vmatpush2.msra.mxu0 0.0
        %2437 = vmatprep.subr.mxu0 0.0
        %2438 = vmatpush2.msra.mxu0 0.0
        %2439 = vmatprep.subr.mxu0 0.0
        %2440 = vmatpush2.msra.mxu0 0.0
        %2441 = vmatprep.subr.mxu0 0.0
        %2442 = vmatpush2.msra.mxu0 0.0
        %2443 = vmatprep.subr.mxu0 0.0
        %2444 = vmatpush2.msra.mxu0 0.0
        %2445 = vmatprep.subr.mxu0 0.0
        %2446 = vmatpush2.msra.mxu0 0.0
        %2447 = vmatprep.subr.mxu0 0.0
        %2448 = vmatpush2.msra.mxu0 0.0
        %2449 = vmatprep.subr.mxu0 0.0
        %2450 = vmatpush2.msra.mxu0 0.0
        %2451 = vmatprep.subr.mxu0 0.0
        %2452 = vmatpush2.msra.mxu0 0.0
        %2453 = vmatprep.subr.mxu0 0.0
        %2454 = vmatpush2.msra.mxu0 0.0
        %2455 = vmatprep.subr.mxu0 0.0
        %2456 = vmatpush2.msra.mxu0 0.0
        %2457 = vmatprep.subr.mxu0 0.0
        %2458 = vmatpush2.msra.mxu0 0.0
        %2459 = vmatprep.subr.mxu0 0.0
        %2460 = vmatpush2.msra.mxu0 0.0
        %2461 = vmatprep.subr.mxu0 0.0
        %2462 = vmatpush2.msra.mxu0 0.0
        %2463 = vmatprep.subr.mxu0 0.0
        %2464 = vmatpush2.msra.mxu0 0.0
        %2465 = vmatprep.mubr.f32.mxu0 0.0
        %2466 = vmatmul.mubr.f32.gmra.mxu0 %v2399
        %v2467 = vpop.f32.mrf.mxu0
        %v2468 = vadd.f32 %v2381, %v2467
        %v2469 = vpop.f32.mrf.mxu0
        %2470 = vdwg.mxu0
        %2471 = vmatprep.subr.mxu0 0.0
        %2472 = vmatpush1.msra.mxu0 0.0
        %2473 = vmatprep.subr.mxu0 0.0
        %2474 = vmatpush1.msra.mxu0 0.0
        %2475 = vmatprep.subr.mxu0 0.0
        %2476 = vmatpush1.msra.mxu0 0.0
        %2477 = vmatprep.subr.mxu0 0.0
        %2478 = vmatpush1.msra.mxu0 0.0
        %2479 = vmatprep.subr.mxu0 0.0
        %2480 = vmatpush1.msra.mxu0 0.0
        %2481 = vmatprep.subr.mxu0 0.0
        %2482 = vmatpush1.msra.mxu0 0.0
        %2483 = vmatprep.subr.mxu0 0.0
        %2484 = vmatpush1.msra.mxu0 0.0
        %2485 = vmatprep.subr.mxu0 0.0
        %2486 = vmatpush1.msra.mxu0 0.0
        %2487 = vmatprep.subr.mxu0 0.0
        %2488 = vmatpush1.msra.mxu0 0.0
        %2489 = vmatprep.subr.mxu0 0.0
        %2490 = vmatpush1.msra.mxu0 0.0
        %2491 = vmatprep.subr.mxu0 0.0
        %2492 = vmatpush1.msra.mxu0 0.0
        %2493 = vmatprep.subr.mxu0 0.0
        %2494 = vmatpush1.msra.mxu0 0.0
        %2495 = vmatprep.subr.mxu0 0.0
        %2496 = vmatpush1.msra.mxu0 %v2360
        %2497 = vmatprep.subr.mxu0 0.0
        %2498 = vmatpush1.msra.mxu0 %v2359
        %2499 = vmatprep.subr.mxu0 0.0
        %2500 = vmatpush1.msra.mxu0 %v2358
        %2501 = vmatprep.subr.mxu0 0.0
        %2502 = vmatpush1.msra.mxu0 %v2357
        %2503 = vmatprep.subr.mxu0 0.0
        %2504 = vmatpush2.msra.mxu0 0.0
        %2505 = vmatprep.subr.mxu0 0.0
        %2506 = vmatpush2.msra.mxu0 0.0
        %2507 = vmatprep.subr.mxu0 0.0
        %2508 = vmatpush2.msra.mxu0 0.0
        %2509 = vmatprep.subr.mxu0 0.0
        %2510 = vmatpush2.msra.mxu0 0.0
        %2511 = vmatprep.subr.mxu0 0.0
        %2512 = vmatpush2.msra.mxu0 0.0
        %2513 = vmatprep.subr.mxu0 0.0
        %2514 = vmatpush2.msra.mxu0 0.0
        %2515 = vmatprep.subr.mxu0 0.0
        %2516 = vmatpush2.msra.mxu0 0.0
        %2517 = vmatprep.subr.mxu0 0.0
        %2518 = vmatpush2.msra.mxu0 0.0
        %2519 = vmatprep.subr.mxu0 0.0
        %2520 = vmatpush2.msra.mxu0 0.0
        %2521 = vmatprep.subr.mxu0 0.0
        %2522 = vmatpush2.msra.mxu0 0.0
        %2523 = vmatprep.subr.mxu0 0.0
        %2524 = vmatpush2.msra.mxu0 0.0
        %2525 = vmatprep.subr.mxu0 0.0
        %2526 = vmatpush2.msra.mxu0 0.0
        %2527 = vmatprep.subr.mxu0 0.0
        %2528 = vmatpush2.msra.mxu0 0.0
        %2529 = vmatprep.subr.mxu0 0.0
        %2530 = vmatpush2.msra.mxu0 0.0
        %2531 = vmatprep.subr.mxu0 0.0
        %2532 = vmatpush2.msra.mxu0 0.0
        %2533 = vmatprep.subr.mxu0 0.0
        %2534 = vmatpush2.msra.mxu0 0.0
        %2535 = vmatprep.mubr.f32.mxu0 0.0
        %2536 = vmatmul.mubr.f32.gmra.mxu0 %v2399
        %v2537 = vpop.f32.mrf.mxu0
        %v2538 = vadd.f32 %v2385, %v2537
        %v2539 = vpop.f32.mrf.mxu0
        %2540 = vdwg.mxu0
        %2541 = vmatprep.subr.mxu0 0.0
        %2542 = vmatpush1.msra.mxu0 0.0
        %2543 = vmatprep.subr.mxu0 0.0
        %2544 = vmatpush1.msra.mxu0 0.0
        %2545 = vmatprep.subr.mxu0 0.0
        %2546 = vmatpush1.msra.mxu0 0.0
        %2547 = vmatprep.subr.mxu0 0.0
        %2548 = vmatpush1.msra.mxu0 0.0
        %2549 = vmatprep.subr.mxu0 0.0
        %2550 = vmatpush1.msra.mxu0 0.0
        %2551 = vmatprep.subr.mxu0 0.0
        %2552 = vmatpush1.msra.mxu0 0.0
        %2553 = vmatprep.subr.mxu0 0.0
        %2554 = vmatpush1.msra.mxu0 0.0
        %2555 = vmatprep.subr.mxu0 0.0
        %2556 = vmatpush1.msra.mxu0 0.0
        %2557 = vmatprep.subr.mxu0 0.0
        %2558 = vmatpush1.msra.mxu0 0.0
        %2559 = vmatprep.subr.mxu0 0.0
        %2560 = vmatpush1.msra.mxu0 0.0
        %2561 = vmatprep.subr.mxu0 0.0
        %2562 = vmatpush1.msra.mxu0 0.0
        %2563 = vmatprep.subr.mxu0 0.0
        %2564 = vmatpush1.msra.mxu0 0.0
        %2565 = vmatprep.subr.mxu0 0.0
        %2566 = vmatpush1.msra.mxu0 %v2364
        %2567 = vmatprep.subr.mxu0 0.0
        %2568 = vmatpush1.msra.mxu0 %v2363
        %2569 = vmatprep.subr.mxu0 0.0
        %2570 = vmatpush1.msra.mxu0 %v2362
        %2571 = vmatprep.subr.mxu0 0.0
        %2572 = vmatpush1.msra.mxu0 %v2361
        %2573 = vmatprep.subr.mxu0 0.0
        %2574 = vmatpush2.msra.mxu0 0.0
        %2575 = vmatprep.subr.mxu0 0.0
        %2576 = vmatpush2.msra.mxu0 0.0
        %2577 = vmatprep.subr.mxu0 0.0
        %2578 = vmatpush2.msra.mxu0 0.0
        %2579 = vmatprep.subr.mxu0 0.0
        %2580 = vmatpush2.msra.mxu0 0.0
        %2581 = vmatprep.subr.mxu0 0.0
        %2582 = vmatpush2.msra.mxu0 0.0
        %2583 = vmatprep.subr.mxu0 0.0
        %2584 = vmatpush2.msra.mxu0 0.0
        %2585 = vmatprep.subr.mxu0 0.0
        %2586 = vmatpush2.msra.mxu0 0.0
        %2587 = vmatprep.subr.mxu0 0.0
        %2588 = vmatpush2.msra.mxu0 0.0
        %2589 = vmatprep.subr.mxu0 0.0
        %2590 = vmatpush2.msra.mxu0 0.0
        %2591 = vmatprep.subr.mxu0 0.0
        %2592 = vmatpush2.msra.mxu0 0.0
        %2593 = vmatprep.subr.mxu0 0.0
        %2594 = vmatpush2.msra.mxu0 0.0
        %2595 = vmatprep.subr.mxu0 0.0
        %2596 = vmatpush2.msra.mxu0 0.0
        %2597 = vmatprep.subr.mxu0 0.0
        %2598 = vmatpush2.msra.mxu0 0.0
        %2599 = vmatprep.subr.mxu0 0.0
        %2600 = vmatpush2.msra.mxu0 0.0
        %2601 = vmatprep.subr.mxu0 0.0
        %2602 = vmatpush2.msra.mxu0 0.0
        %2603 = vmatprep.subr.mxu0 0.0
        %2604 = vmatpush2.msra.mxu0 0.0
        %2605 = vmatprep.mubr.f32.mxu0 0.0
        %2606 = vmatmul.mubr.f32.gmra.mxu0 %v2399
        %v2607 = vpop.f32.mrf.mxu0
        %v2608 = vadd.f32 %v2389, %v2607
        %v2609 = vpop.f32.mrf.mxu0
        %2610 = vdwg.mxu0
        %2611 = vmatprep.subr.mxu0 0.0
        %2612 = vmatpush1.msra.mxu0 0.0
        %2613 = vmatprep.subr.mxu0 0.0
        %2614 = vmatpush1.msra.mxu0 0.0
        %2615 = vmatprep.subr.mxu0 0.0
        %2616 = vmatpush1.msra.mxu0 0.0
        %2617 = vmatprep.subr.mxu0 0.0
        %2618 = vmatpush1.msra.mxu0 0.0
        %2619 = vmatprep.subr.mxu0 0.0
        %2620 = vmatpush1.msra.mxu0 0.0
        %2621 = vmatprep.subr.mxu0 0.0
        %2622 = vmatpush1.msra.mxu0 0.0
        %2623 = vmatprep.subr.mxu0 0.0
        %2624 = vmatpush1.msra.mxu0 0.0
        %2625 = vmatprep.subr.mxu0 0.0
        %2626 = vmatpush1.msra.mxu0 0.0
        %2627 = vmatprep.subr.mxu0 0.0
        %2628 = vmatpush1.msra.mxu0 0.0
        %2629 = vmatprep.subr.mxu0 0.0
        %2630 = vmatpush1.msra.mxu0 0.0
        %2631 = vmatprep.subr.mxu0 0.0
        %2632 = vmatpush1.msra.mxu0 0.0
        %2633 = vmatprep.subr.mxu0 0.0
        %2634 = vmatpush1.msra.mxu0 0.0
        %2635 = vmatprep.subr.mxu0 0.0
        %2636 = vmatpush1.msra.mxu0 %v2368
        %2637 = vmatprep.subr.mxu0 0.0
        %2638 = vmatpush1.msra.mxu0 %v2367
        %2639 = vmatprep.subr.mxu0 0.0
        %2640 = vmatpush1.msra.mxu0 %v2366
        %2641 = vmatprep.subr.mxu0 0.0
        %2642 = vmatpush1.msra.mxu0 %v2365
        %2643 = vmatprep.subr.mxu0 0.0
        %2644 = vmatpush2.msra.mxu0 0.0
        %2645 = vmatprep.subr.mxu0 0.0
        %2646 = vmatpush2.msra.mxu0 0.0
        %2647 = vmatprep.subr.mxu0 0.0
        %2648 = vmatpush2.msra.mxu0 0.0
        %2649 = vmatprep.subr.mxu0 0.0
        %2650 = vmatpush2.msra.mxu0 0.0
        %2651 = vmatprep.subr.mxu0 0.0
        %2652 = vmatpush2.msra.mxu0 0.0
        %2653 = vmatprep.subr.mxu0 0.0
        %2654 = vmatpush2.msra.mxu0 0.0
        %2655 = vmatprep.subr.mxu0 0.0
        %2656 = vmatpush2.msra.mxu0 0.0
        %2657 = vmatprep.subr.mxu0 0.0
        %2658 = vmatpush2.msra.mxu0 0.0
        %2659 = vmatprep.subr.mxu0 0.0
        %2660 = vmatpush2.msra.mxu0 0.0
        %2661 = vmatprep.subr.mxu0 0.0
        %2662 = vmatpush2.msra.mxu0 0.0
        %2663 = vmatprep.subr.mxu0 0.0
        %2664 = vmatpush2.msra.mxu0 0.0
        %2665 = vmatprep.subr.mxu0 0.0
        %2666 = vmatpush2.msra.mxu0 0.0
        %2667 = vmatprep.subr.mxu0 0.0
        %2668 = vmatpush2.msra.mxu0 0.0
        %2669 = vmatprep.subr.mxu0 0.0
        %2670 = vmatpush2.msra.mxu0 0.0
        %2671 = vmatprep.subr.mxu0 0.0
        %2672 = vmatpush2.msra.mxu0 0.0
        %2673 = vmatprep.subr.mxu0 0.0
        %2674 = vmatpush2.msra.mxu0 0.0
        %2675 = vmatprep.mubr.f32.mxu0 0.0
        %2676 = vmatmul.mubr.f32.gmra.mxu0 %v2399
        %v2677 = vpop.f32.mrf.mxu0
        %v2678 = vadd.f32 %v2393, %v2677
        %v2679 = vpop.f32.mrf.mxu0
        %2680 = vdwg.mxu0
        %s2681 = scalar_lea.vmem %s5, 32
        %v2682 = vld [vmem:[%s2681] sm:$0xff]
        %v2683 = vld [vmem:[%s2681 + $0x8] sm:$0xff]
        %v2684 = vld [vmem:[%s2681 + $0x10] sm:$0xff]
        %v2685 = vld [vmem:[%s2681 + $0x18] sm:$0xff]
        %v2687 = vsel %vm880, %v2468, 0
        %2689 = vmatprep.subr.mxu0 0.0
        %2690 = vmatpush1.msra.mxu0 0.0
        %2691 = vmatprep.subr.mxu0 0.0
        %2692 = vmatpush1.msra.mxu0 0.0
        %2693 = vmatprep.subr.mxu0 0.0
        %2694 = vmatpush1.msra.mxu0 0.0
        %2695 = vmatprep.subr.mxu0 0.0
        %2696 = vmatpush1.msra.mxu0 0.0
        %2697 = vmatprep.subr.mxu0 0.0
        %2698 = vmatpush1.msra.mxu0 0.0
        %2699 = vmatprep.subr.mxu0 0.0
        %2700 = vmatpush1.msra.mxu0 0.0
        %2701 = vmatprep.subr.mxu0 0.0
        %2702 = vmatpush1.msra.mxu0 0.0
        %2703 = vmatprep.subr.mxu0 0.0
        %2704 = vmatpush1.msra.mxu0 0.0
        %2705 = vmatprep.subr.mxu0 0.0
        %2706 = vmatpush1.msra.mxu0 0.0
        %2707 = vmatprep.subr.mxu0 0.0
        %2708 = vmatpush1.msra.mxu0 0.0
        %2709 = vmatprep.subr.mxu0 0.0
        %2710 = vmatpush1.msra.mxu0 0.0
        %2711 = vmatprep.subr.mxu0 0.0
        %2712 = vmatpush1.msra.mxu0 0.0
        %2713 = vmatprep.subr.mxu0 0.0
        %2714 = vmatpush1.msra.mxu0 0.0
        %2715 = vmatprep.subr.mxu0 0.0
        %2716 = vmatpush1.msra.mxu0 0.0
        %2717 = vmatprep.subr.mxu0 0.0
        %2718 = vmatpush1.msra.mxu0 0.0
        %2719 = vmatprep.subr.mxu0 0.0
        %2720 = vmatpush1.msra.mxu0 %v2682
        %2721 = vmatprep.subr.mxu0 0.0
        %2722 = vmatpush2.msra.mxu0 0.0
        %2723 = vmatprep.subr.mxu0 0.0
        %2724 = vmatpush2.msra.mxu0 0.0
        %2725 = vmatprep.subr.mxu0 0.0
        %2726 = vmatpush2.msra.mxu0 0.0
        %2727 = vmatprep.subr.mxu0 0.0
        %2728 = vmatpush2.msra.mxu0 0.0
        %2729 = vmatprep.subr.mxu0 0.0
        %2730 = vmatpush2.msra.mxu0 0.0
        %2731 = vmatprep.subr.mxu0 0.0
        %2732 = vmatpush2.msra.mxu0 0.0
        %2733 = vmatprep.subr.mxu0 0.0
        %2734 = vmatpush2.msra.mxu0 0.0
        %2735 = vmatprep.subr.mxu0 0.0
        %2736 = vmatpush2.msra.mxu0 0.0
        %2737 = vmatprep.subr.mxu0 0.0
        %2738 = vmatpush2.msra.mxu0 0.0
        %2739 = vmatprep.subr.mxu0 0.0
        %2740 = vmatpush2.msra.mxu0 0.0
        %2741 = vmatprep.subr.mxu0 0.0
        %2742 = vmatpush2.msra.mxu0 0.0
        %2743 = vmatprep.subr.mxu0 0.0
        %2744 = vmatpush2.msra.mxu0 0.0
        %2745 = vmatprep.subr.mxu0 0.0
        %2746 = vmatpush2.msra.mxu0 0.0
        %2747 = vmatprep.subr.mxu0 0.0
        %2748 = vmatpush2.msra.mxu0 0.0
        %2749 = vmatprep.subr.mxu0 0.0
        %2750 = vmatpush2.msra.mxu0 0.0
        %2751 = vmatprep.subr.mxu0 0.0
        %2752 = vmatpush2.msra.mxu0 0.0
        %2753 = vmatprep.mubr.f32.mxu0 0.0
        %2754 = vmatmul.mubr.f32.gmra.mxu0 %v2687
        %v2755 = vpop.f32.mrf.mxu0
        %v2756 = vadd.f32 0.0, %v2755
        %v2757 = vpop.f32.mrf.mxu0
        %2758 = vdwg.mxu0
        %v2760 = vsel %vm880, %v2538, 0
        %2762 = vmatprep.subr.mxu0 0.0
        %2763 = vmatpush1.msra.mxu0 0.0
        %2764 = vmatprep.subr.mxu0 0.0
        %2765 = vmatpush1.msra.mxu0 0.0
        %2766 = vmatprep.subr.mxu0 0.0
        %2767 = vmatpush1.msra.mxu0 0.0
        %2768 = vmatprep.subr.mxu0 0.0
        %2769 = vmatpush1.msra.mxu0 0.0
        %2770 = vmatprep.subr.mxu0 0.0
        %2771 = vmatpush1.msra.mxu0 0.0
        %2772 = vmatprep.subr.mxu0 0.0
        %2773 = vmatpush1.msra.mxu0 0.0
        %2774 = vmatprep.subr.mxu0 0.0
        %2775 = vmatpush1.msra.mxu0 0.0
        %2776 = vmatprep.subr.mxu0 0.0
        %2777 = vmatpush1.msra.mxu0 0.0
        %2778 = vmatprep.subr.mxu0 0.0
        %2779 = vmatpush1.msra.mxu0 0.0
        %2780 = vmatprep.subr.mxu0 0.0
        %2781 = vmatpush1.msra.mxu0 0.0
        %2782 = vmatprep.subr.mxu0 0.0
        %2783 = vmatpush1.msra.mxu0 0.0
        %2784 = vmatprep.subr.mxu0 0.0
        %2785 = vmatpush1.msra.mxu0 0.0
        %2786 = vmatprep.subr.mxu0 0.0
        %2787 = vmatpush1.msra.mxu0 0.0
        %2788 = vmatprep.subr.mxu0 0.0
        %2789 = vmatpush1.msra.mxu0 0.0
        %2790 = vmatprep.subr.mxu0 0.0
        %2791 = vmatpush1.msra.mxu0 0.0
        %2792 = vmatprep.subr.mxu0 0.0
        %2793 = vmatpush1.msra.mxu0 %v2683
        %2794 = vmatprep.subr.mxu0 0.0
        %2795 = vmatpush2.msra.mxu0 0.0
        %2796 = vmatprep.subr.mxu0 0.0
        %2797 = vmatpush2.msra.mxu0 0.0
        %2798 = vmatprep.subr.mxu0 0.0
        %2799 = vmatpush2.msra.mxu0 0.0
        %2800 = vmatprep.subr.mxu0 0.0
        %2801 = vmatpush2.msra.mxu0 0.0
        %2802 = vmatprep.subr.mxu0 0.0
        %2803 = vmatpush2.msra.mxu0 0.0
        %2804 = vmatprep.subr.mxu0 0.0
        %2805 = vmatpush2.msra.mxu0 0.0
        %2806 = vmatprep.subr.mxu0 0.0
        %2807 = vmatpush2.msra.mxu0 0.0
        %2808 = vmatprep.subr.mxu0 0.0
        %2809 = vmatpush2.msra.mxu0 0.0
        %2810 = vmatprep.subr.mxu0 0.0
        %2811 = vmatpush2.msra.mxu0 0.0
        %2812 = vmatprep.subr.mxu0 0.0
        %2813 = vmatpush2.msra.mxu0 0.0
        %2814 = vmatprep.subr.mxu0 0.0
        %2815 = vmatpush2.msra.mxu0 0.0
        %2816 = vmatprep.subr.mxu0 0.0
        %2817 = vmatpush2.msra.mxu0 0.0
        %2818 = vmatprep.subr.mxu0 0.0
        %2819 = vmatpush2.msra.mxu0 0.0
        %2820 = vmatprep.subr.mxu0 0.0
        %2821 = vmatpush2.msra.mxu0 0.0
        %2822 = vmatprep.subr.mxu0 0.0
        %2823 = vmatpush2.msra.mxu0 0.0
        %2824 = vmatprep.subr.mxu0 0.0
        %2825 = vmatpush2.msra.mxu0 0.0
        %2826 = vmatprep.mubr.f32.mxu0 0.0
        %2827 = vmatmul.mubr.f32.gmra.mxu0 %v2760
        %v2828 = vpop.f32.mrf.mxu0
        %v2829 = vadd.f32 0.0, %v2828
        %v2830 = vpop.f32.mrf.mxu0
        %2831 = vdwg.mxu0
        %v2833 = vsel %vm880, %v2608, 0
        %2835 = vmatprep.subr.mxu0 0.0
        %2836 = vmatpush1.msra.mxu0 0.0
        %2837 = vmatprep.subr.mxu0 0.0
        %2838 = vmatpush1.msra.mxu0 0.0
        %2839 = vmatprep.subr.mxu0 0.0
        %2840 = vmatpush1.msra.mxu0 0.0
        %2841 = vmatprep.subr.mxu0 0.0
        %2842 = vmatpush1.msra.mxu0 0.0
        %2843 = vmatprep.subr.mxu0 0.0
        %2844 = vmatpush1.msra.mxu0 0.0
        %2845 = vmatprep.subr.mxu0 0.0
        %2846 = vmatpush1.msra.mxu0 0.0
        %2847 = vmatprep.subr.mxu0 0.0
        %2848 = vmatpush1.msra.mxu0 0.0
        %2849 = vmatprep.subr.mxu0 0.0
        %2850 = vmatpush1.msra.mxu0 0.0
        %2851 = vmatprep.subr.mxu0 0.0
        %2852 = vmatpush1.msra.mxu0 0.0
        %2853 = vmatprep.subr.mxu0 0.0
        %2854 = vmatpush1.msra.mxu0 0.0
        %2855 = vmatprep.subr.mxu0 0.0
        %2856 = vmatpush1.msra.mxu0 0.0
        %2857 = vmatprep.subr.mxu0 0.0
        %2858 = vmatpush1.msra.mxu0 0.0
        %2859 = vmatprep.subr.mxu0 0.0
        %2860 = vmatpush1.msra.mxu0 0.0
        %2861 = vmatprep.subr.mxu0 0.0
        %2862 = vmatpush1.msra.mxu0 0.0
        %2863 = vmatprep.subr.mxu0 0.0
        %2864 = vmatpush1.msra.mxu0 0.0
        %2865 = vmatprep.subr.mxu0 0.0
        %2866 = vmatpush1.msra.mxu0 %v2684
        %2867 = vmatprep.subr.mxu0 0.0
        %2868 = vmatpush2.msra.mxu0 0.0
        %2869 = vmatprep.subr.mxu0 0.0
        %2870 = vmatpush2.msra.mxu0 0.0
        %2871 = vmatprep.subr.mxu0 0.0
        %2872 = vmatpush2.msra.mxu0 0.0
        %2873 = vmatprep.subr.mxu0 0.0
        %2874 = vmatpush2.msra.mxu0 0.0
        %2875 = vmatprep.subr.mxu0 0.0
        %2876 = vmatpush2.msra.mxu0 0.0
        %2877 = vmatprep.subr.mxu0 0.0
        %2878 = vmatpush2.msra.mxu0 0.0
        %2879 = vmatprep.subr.mxu0 0.0
        %2880 = vmatpush2.msra.mxu0 0.0
        %2881 = vmatprep.subr.mxu0 0.0
        %2882 = vmatpush2.msra.mxu0 0.0
        %2883 = vmatprep.subr.mxu0 0.0
        %2884 = vmatpush2.msra.mxu0 0.0
        %2885 = vmatprep.subr.mxu0 0.0
        %2886 = vmatpush2.msra.mxu0 0.0
        %2887 = vmatprep.subr.mxu0 0.0
        %2888 = vmatpush2.msra.mxu0 0.0
        %2889 = vmatprep.subr.mxu0 0.0
        %2890 = vmatpush2.msra.mxu0 0.0
        %2891 = vmatprep.subr.mxu0 0.0
        %2892 = vmatpush2.msra.mxu0 0.0
        %2893 = vmatprep.subr.mxu0 0.0
        %2894 = vmatpush2.msra.mxu0 0.0
        %2895 = vmatprep.subr.mxu0 0.0
        %2896 = vmatpush2.msra.mxu0 0.0
        %2897 = vmatprep.subr.mxu0 0.0
        %2898 = vmatpush2.msra.mxu0 0.0
        %2899 = vmatprep.mubr.f32.mxu0 0.0
        %2900 = vmatmul.mubr.f32.gmra.mxu0 %v2833
        %v2901 = vpop.f32.mrf.mxu0
        %v2902 = vadd.f32 0.0, %v2901
        %v2903 = vpop.f32.mrf.mxu0
        %2904 = vdwg.mxu0
        %v2906 = vsel %vm880, %v2678, 0
        %2908 = vmatprep.subr.mxu0 0.0
        %2909 = vmatpush1.msra.mxu0 0.0
        %2910 = vmatprep.subr.mxu0 0.0
        %2911 = vmatpush1.msra.mxu0 0.0
        %2912 = vmatprep.subr.mxu0 0.0
        %2913 = vmatpush1.msra.mxu0 0.0
        %2914 = vmatprep.subr.mxu0 0.0
        %2915 = vmatpush1.msra.mxu0 0.0
        %2916 = vmatprep.subr.mxu0 0.0
        %2917 = vmatpush1.msra.mxu0 0.0
        %2918 = vmatprep.subr.mxu0 0.0
        %2919 = vmatpush1.msra.mxu0 0.0
        %2920 = vmatprep.subr.mxu0 0.0
        %2921 = vmatpush1.msra.mxu0 0.0
        %2922 = vmatprep.subr.mxu0 0.0
        %2923 = vmatpush1.msra.mxu0 0.0
        %2924 = vmatprep.subr.mxu0 0.0
        %2925 = vmatpush1.msra.mxu0 0.0
        %2926 = vmatprep.subr.mxu0 0.0
        %2927 = vmatpush1.msra.mxu0 0.0
        %2928 = vmatprep.subr.mxu0 0.0
        %2929 = vmatpush1.msra.mxu0 0.0
        %2930 = vmatprep.subr.mxu0 0.0
        %2931 = vmatpush1.msra.mxu0 0.0
        %2932 = vmatprep.subr.mxu0 0.0
        %2933 = vmatpush1.msra.mxu0 0.0
        %2934 = vmatprep.subr.mxu0 0.0
        %2935 = vmatpush1.msra.mxu0 0.0
        %2936 = vmatprep.subr.mxu0 0.0
        %2937 = vmatpush1.msra.mxu0 0.0
        %2938 = vmatprep.subr.mxu0 0.0
        %2939 = vmatpush1.msra.mxu0 %v2685
        %2940 = vmatprep.subr.mxu0 0.0
        %2941 = vmatpush2.msra.mxu0 0.0
        %2942 = vmatprep.subr.mxu0 0.0
        %2943 = vmatpush2.msra.mxu0 0.0
        %2944 = vmatprep.subr.mxu0 0.0
        %2945 = vmatpush2.msra.mxu0 0.0
        %2946 = vmatprep.subr.mxu0 0.0
        %2947 = vmatpush2.msra.mxu0 0.0
        %2948 = vmatprep.subr.mxu0 0.0
        %2949 = vmatpush2.msra.mxu0 0.0
        %2950 = vmatprep.subr.mxu0 0.0
        %2951 = vmatpush2.msra.mxu0 0.0
        %2952 = vmatprep.subr.mxu0 0.0
        %2953 = vmatpush2.msra.mxu0 0.0
        %2954 = vmatprep.subr.mxu0 0.0
        %2955 = vmatpush2.msra.mxu0 0.0
        %2956 = vmatprep.subr.mxu0 0.0
        %2957 = vmatpush2.msra.mxu0 0.0
        %2958 = vmatprep.subr.mxu0 0.0
        %2959 = vmatpush2.msra.mxu0 0.0
        %2960 = vmatprep.subr.mxu0 0.0
        %2961 = vmatpush2.msra.mxu0 0.0
        %2962 = vmatprep.subr.mxu0 0.0
        %2963 = vmatpush2.msra.mxu0 0.0
        %2964 = vmatprep.subr.mxu0 0.0
        %2965 = vmatpush2.msra.mxu0 0.0
        %2966 = vmatprep.subr.mxu0 0.0
        %2967 = vmatpush2.msra.mxu0 0.0
        %2968 = vmatprep.subr.mxu0 0.0
        %2969 = vmatpush2.msra.mxu0 0.0
        %2970 = vmatprep.subr.mxu0 0.0
        %2971 = vmatpush2.msra.mxu0 0.0
        %2972 = vmatprep.mubr.f32.mxu0 0.0
        %2973 = vmatmul.mubr.f32.gmra.mxu0 %v2906
        %v2974 = vpop.f32.mrf.mxu0
        %v2975 = vadd.f32 0.0, %v2974
        %v2976 = vpop.f32.mrf.mxu0
        %2977 = vdwg.mxu0
        %v2979 = vsel %vm880, %v2756, 0
        %2981 = vmatprep.subr.mxu0 0.0
        %2982 = vmatpush1.xpose.msra.mxu0 0.0
        %2983 = vmatprep.subr.mxu0 0.0
        %2984 = vmatpush1.xpose.msra.mxu0 0.0
        %2985 = vmatprep.subr.mxu0 0.0
        %2986 = vmatpush1.xpose.msra.mxu0 0.0
        %2987 = vmatprep.subr.mxu0 0.0
        %2988 = vmatpush1.xpose.msra.mxu0 0.0
        %2989 = vmatprep.subr.mxu0 0.0
        %2990 = vmatpush1.xpose.msra.mxu0 0.0
        %2991 = vmatprep.subr.mxu0 0.0
        %2992 = vmatpush1.xpose.msra.mxu0 0.0
        %2993 = vmatprep.subr.mxu0 0.0
        %2994 = vmatpush1.xpose.msra.mxu0 0.0
        %2995 = vmatprep.subr.mxu0 0.0
        %2996 = vmatpush1.xpose.msra.mxu0 0.0
        %2997 = vmatprep.subr.mxu0 0.0
        %2998 = vmatpush1.xpose.msra.mxu0 0.0
        %2999 = vmatprep.subr.mxu0 0.0
        %3000 = vmatpush1.xpose.msra.mxu0 0.0
        %3001 = vmatprep.subr.mxu0 0.0
        %3002 = vmatpush1.xpose.msra.mxu0 0.0
        %3003 = vmatprep.subr.mxu0 0.0
        %3004 = vmatpush1.xpose.msra.mxu0 0.0
        %3005 = vmatprep.subr.mxu0 0.0
        %3006 = vmatpush1.xpose.msra.mxu0 0.0
        %3007 = vmatprep.subr.mxu0 0.0
        %3008 = vmatpush1.xpose.msra.mxu0 0.0
        %3009 = vmatprep.subr.mxu0 0.0
        %3010 = vmatpush1.xpose.msra.mxu0 0.0
        %3011 = vmatprep.subr.mxu0 0.0
        %3012 = vmatpush1.xpose.msra.mxu0 %v2687
        %3013 = vmatprep.subr.mxu0 0.0
        %3014 = vmatpush2.xpose.msra.mxu0 0.0
        %3015 = vmatprep.subr.mxu0 0.0
        %3016 = vmatpush2.xpose.msra.mxu0 0.0
        %3017 = vmatprep.subr.mxu0 0.0
        %3018 = vmatpush2.xpose.msra.mxu0 0.0
        %3019 = vmatprep.subr.mxu0 0.0
        %3020 = vmatpush2.xpose.msra.mxu0 0.0
        %3021 = vmatprep.subr.mxu0 0.0
        %3022 = vmatpush2.xpose.msra.mxu0 0.0
        %3023 = vmatprep.subr.mxu0 0.0
        %3024 = vmatpush2.xpose.msra.mxu0 0.0
        %3025 = vmatprep.subr.mxu0 0.0
        %3026 = vmatpush2.xpose.msra.mxu0 0.0
        %3027 = vmatprep.subr.mxu0 0.0
        %3028 = vmatpush2.xpose.msra.mxu0 0.0
        %3029 = vmatprep.subr.mxu0 0.0
        %3030 = vmatpush2.xpose.msra.mxu0 0.0
        %3031 = vmatprep.subr.mxu0 0.0
        %3032 = vmatpush2.xpose.msra.mxu0 0.0
        %3033 = vmatprep.subr.mxu0 0.0
        %3034 = vmatpush2.xpose.msra.mxu0 0.0
        %3035 = vmatprep.subr.mxu0 0.0
        %3036 = vmatpush2.xpose.msra.mxu0 0.0
        %3037 = vmatprep.subr.mxu0 0.0
        %3038 = vmatpush2.xpose.msra.mxu0 0.0
        %3039 = vmatprep.subr.mxu0 0.0
        %3040 = vmatpush2.xpose.msra.mxu0 0.0
        %3041 = vmatprep.subr.mxu0 0.0
        %3042 = vmatpush2.xpose.msra.mxu0 0.0
        %3043 = vmatprep.subr.mxu0 0.0
        %3044 = vmatpush2.xpose.msra.mxu0 0.0
        %3045 = vmatprep.mubr.f32.mxu0 0.0
        %3046 = vmatmul.mubr.f32.gmra.mxu0 %v2979
        %v3047 = vpop.f32.mrf.mxu0
        %v3048 = vadd.f32 0.0, %v3047
        %v3049 = vpop.f32.mrf.mxu0
        %3050 = vdwg.mxu0
        %v3052 = vsel %vm880, %v2829, 0
        %3054 = vmatprep.subr.mxu0 0.0
        %3055 = vmatpush1.xpose.msra.mxu0 0.0
        %3056 = vmatprep.subr.mxu0 0.0
        %3057 = vmatpush1.xpose.msra.mxu0 0.0
        %3058 = vmatprep.subr.mxu0 0.0
        %3059 = vmatpush1.xpose.msra.mxu0 0.0
        %3060 = vmatprep.subr.mxu0 0.0
        %3061 = vmatpush1.xpose.msra.mxu0 0.0
        %3062 = vmatprep.subr.mxu0 0.0
        %3063 = vmatpush1.xpose.msra.mxu0 0.0
        %3064 = vmatprep.subr.mxu0 0.0
        %3065 = vmatpush1.xpose.msra.mxu0 0.0
        %3066 = vmatprep.subr.mxu0 0.0
        %3067 = vmatpush1.xpose.msra.mxu0 0.0
        %3068 = vmatprep.subr.mxu0 0.0
        %3069 = vmatpush1.xpose.msra.mxu0 0.0
        %3070 = vmatprep.subr.mxu0 0.0
        %3071 = vmatpush1.xpose.msra.mxu0 0.0
        %3072 = vmatprep.subr.mxu0 0.0
        %3073 = vmatpush1.xpose.msra.mxu0 0.0
        %3074 = vmatprep.subr.mxu0 0.0
        %3075 = vmatpush1.xpose.msra.mxu0 0.0
        %3076 = vmatprep.subr.mxu0 0.0
        %3077 = vmatpush1.xpose.msra.mxu0 0.0
        %3078 = vmatprep.subr.mxu0 0.0
        %3079 = vmatpush1.xpose.msra.mxu0 0.0
        %3080 = vmatprep.subr.mxu0 0.0
        %3081 = vmatpush1.xpose.msra.mxu0 0.0
        %3082 = vmatprep.subr.mxu0 0.0
        %3083 = vmatpush1.xpose.msra.mxu0 0.0
        %3084 = vmatprep.subr.mxu0 0.0
        %3085 = vmatpush1.xpose.msra.mxu0 %v2760
        %3086 = vmatprep.subr.mxu0 0.0
        %3087 = vmatpush2.xpose.msra.mxu0 0.0
        %3088 = vmatprep.subr.mxu0 0.0
        %3089 = vmatpush2.xpose.msra.mxu0 0.0
        %3090 = vmatprep.subr.mxu0 0.0
        %3091 = vmatpush2.xpose.msra.mxu0 0.0
        %3092 = vmatprep.subr.mxu0 0.0
        %3093 = vmatpush2.xpose.msra.mxu0 0.0
        %3094 = vmatprep.subr.mxu0 0.0
        %3095 = vmatpush2.xpose.msra.mxu0 0.0
        %3096 = vmatprep.subr.mxu0 0.0
        %3097 = vmatpush2.xpose.msra.mxu0 0.0
        %3098 = vmatprep.subr.mxu0 0.0
        %3099 = vmatpush2.xpose.msra.mxu0 0.0
        %3100 = vmatprep.subr.mxu0 0.0
        %3101 = vmatpush2.xpose.msra.mxu0 0.0
        %3102 = vmatprep.subr.mxu0 0.0
        %3103 = vmatpush2.xpose.msra.mxu0 0.0
        %3104 = vmatprep.subr.mxu0 0.0
        %3105 = vmatpush2.xpose.msra.mxu0 0.0
        %3106 = vmatprep.subr.mxu0 0.0
        %3107 = vmatpush2.xpose.msra.mxu0 0.0
        %3108 = vmatprep.subr.mxu0 0.0
        %3109 = vmatpush2.xpose.msra.mxu0 0.0
        %3110 = vmatprep.subr.mxu0 0.0
        %3111 = vmatpush2.xpose.msra.mxu0 0.0
        %3112 = vmatprep.subr.mxu0 0.0
        %3113 = vmatpush2.xpose.msra.mxu0 0.0
        %3114 = vmatprep.subr.mxu0 0.0
        %3115 = vmatpush2.xpose.msra.mxu0 0.0
        %3116 = vmatprep.subr.mxu0 0.0
        %3117 = vmatpush2.xpose.msra.mxu0 0.0
        %3118 = vmatprep.mubr.f32.mxu0 0.0
        %3119 = vmatmul.mubr.f32.gmra.mxu0 %v3052
        %v3120 = vpop.f32.mrf.mxu0
        %v3121 = vadd.f32 0.0, %v3120
        %v3122 = vpop.f32.mrf.mxu0
        %3123 = vdwg.mxu0
        %v3125 = vsel %vm880, %v2902, 0
        %3127 = vmatprep.subr.mxu0 0.0
        %3128 = vmatpush1.xpose.msra.mxu0 0.0
        %3129 = vmatprep.subr.mxu0 0.0
        %3130 = vmatpush1.xpose.msra.mxu0 0.0
        %3131 = vmatprep.subr.mxu0 0.0
        %3132 = vmatpush1.xpose.msra.mxu0 0.0
        %3133 = vmatprep.subr.mxu0 0.0
        %3134 = vmatpush1.xpose.msra.mxu0 0.0
        %3135 = vmatprep.subr.mxu0 0.0
        %3136 = vmatpush1.xpose.msra.mxu0 0.0
        %3137 = vmatprep.subr.mxu0 0.0
        %3138 = vmatpush1.xpose.msra.mxu0 0.0
        %3139 = vmatprep.subr.mxu0 0.0
        %3140 = vmatpush1.xpose.msra.mxu0 0.0
        %3141 = vmatprep.subr.mxu0 0.0
        %3142 = vmatpush1.xpose.msra.mxu0 0.0
        %3143 = vmatprep.subr.mxu0 0.0
        %3144 = vmatpush1.xpose.msra.mxu0 0.0
        %3145 = vmatprep.subr.mxu0 0.0
        %3146 = vmatpush1.xpose.msra.mxu0 0.0
        %3147 = vmatprep.subr.mxu0 0.0
        %3148 = vmatpush1.xpose.msra.mxu0 0.0
        %3149 = vmatprep.subr.mxu0 0.0
        %3150 = vmatpush1.xpose.msra.mxu0 0.0
        %3151 = vmatprep.subr.mxu0 0.0
        %3152 = vmatpush1.xpose.msra.mxu0 0.0
        %3153 = vmatprep.subr.mxu0 0.0
        %3154 = vmatpush1.xpose.msra.mxu0 0.0
        %3155 = vmatprep.subr.mxu0 0.0
        %3156 = vmatpush1.xpose.msra.mxu0 0.0
        %3157 = vmatprep.subr.mxu0 0.0
        %3158 = vmatpush1.xpose.msra.mxu0 %v2833
        %3159 = vmatprep.subr.mxu0 0.0
        %3160 = vmatpush2.xpose.msra.mxu0 0.0
        %3161 = vmatprep.subr.mxu0 0.0
        %3162 = vmatpush2.xpose.msra.mxu0 0.0
        %3163 = vmatprep.subr.mxu0 0.0
        %3164 = vmatpush2.xpose.msra.mxu0 0.0
        %3165 = vmatprep.subr.mxu0 0.0
        %3166 = vmatpush2.xpose.msra.mxu0 0.0
        %3167 = vmatprep.subr.mxu0 0.0
        %3168 = vmatpush2.xpose.msra.mxu0 0.0
        %3169 = vmatprep.subr.mxu0 0.0
        %3170 = vmatpush2.xpose.msra.mxu0 0.0
        %3171 = vmatprep.subr.mxu0 0.0
        %3172 = vmatpush2.xpose.msra.mxu0 0.0
        %3173 = vmatprep.subr.mxu0 0.0
        %3174 = vmatpush2.xpose.msra.mxu0 0.0
        %3175 = vmatprep.subr.mxu0 0.0
        %3176 = vmatpush2.xpose.msra.mxu0 0.0
        %3177 = vmatprep.subr.mxu0 0.0
        %3178 = vmatpush2.xpose.msra.mxu0 0.0
        %3179 = vmatprep.subr.mxu0 0.0
        %3180 = vmatpush2.xpose.msra.mxu0 0.0
        %3181 = vmatprep.subr.mxu0 0.0
        %3182 = vmatpush2.xpose.msra.mxu0 0.0
        %3183 = vmatprep.subr.mxu0 0.0
        %3184 = vmatpush2.xpose.msra.mxu0 0.0
        %3185 = vmatprep.subr.mxu0 0.0
        %3186 = vmatpush2.xpose.msra.mxu0 0.0
        %3187 = vmatprep.subr.mxu0 0.0
        %3188 = vmatpush2.xpose.msra.mxu0 0.0
        %3189 = vmatprep.subr.mxu0 0.0
        %3190 = vmatpush2.xpose.msra.mxu0 0.0
        %3191 = vmatprep.mubr.f32.mxu0 0.0
        %3192 = vmatmul.mubr.f32.gmra.mxu0 %v3125
        %v3193 = vpop.f32.mrf.mxu0
        %v3194 = vadd.f32 0.0, %v3193
        %v3195 = vpop.f32.mrf.mxu0
        %3196 = vdwg.mxu0
        %v3198 = vsel %vm880, %v2975, 0
        %3200 = vmatprep.subr.mxu0 0.0
        %3201 = vmatpush1.xpose.msra.mxu0 0.0
        %3202 = vmatprep.subr.mxu0 0.0
        %3203 = vmatpush1.xpose.msra.mxu0 0.0
        %3204 = vmatprep.subr.mxu0 0.0
        %3205 = vmatpush1.xpose.msra.mxu0 0.0
        %3206 = vmatprep.subr.mxu0 0.0
        %3207 = vmatpush1.xpose.msra.mxu0 0.0
        %3208 = vmatprep.subr.mxu0 0.0
        %3209 = vmatpush1.xpose.msra.mxu0 0.0
        %3210 = vmatprep.subr.mxu0 0.0
        %3211 = vmatpush1.xpose.msra.mxu0 0.0
        %3212 = vmatprep.subr.mxu0 0.0
        %3213 = vmatpush1.xpose.msra.mxu0 0.0
        %3214 = vmatprep.subr.mxu0 0.0
        %3215 = vmatpush1.xpose.msra.mxu0 0.0
        %3216 = vmatprep.subr.mxu0 0.0
        %3217 = vmatpush1.xpose.msra.mxu0 0.0
        %3218 = vmatprep.subr.mxu0 0.0
        %3219 = vmatpush1.xpose.msra.mxu0 0.0
        %3220 = vmatprep.subr.mxu0 0.0
        %3221 = vmatpush1.xpose.msra.mxu0 0.0
        %3222 = vmatprep.subr.mxu0 0.0
        %3223 = vmatpush1.xpose.msra.mxu0 0.0
        %3224 = vmatprep.subr.mxu0 0.0
        %3225 = vmatpush1.xpose.msra.mxu0 0.0
        %3226 = vmatprep.subr.mxu0 0.0
        %3227 = vmatpush1.xpose.msra.mxu0 0.0
        %3228 = vmatprep.subr.mxu0 0.0
        %3229 = vmatpush1.xpose.msra.mxu0 0.0
        %3230 = vmatprep.subr.mxu0 0.0
        %3231 = vmatpush1.xpose.msra.mxu0 %v2906
        %3232 = vmatprep.subr.mxu0 0.0
        %3233 = vmatpush2.xpose.msra.mxu0 0.0
        %3234 = vmatprep.subr.mxu0 0.0
        %3235 = vmatpush2.xpose.msra.mxu0 0.0
        %3236 = vmatprep.subr.mxu0 0.0
        %3237 = vmatpush2.xpose.msra.mxu0 0.0
        %3238 = vmatprep.subr.mxu0 0.0
        %3239 = vmatpush2.xpose.msra.mxu0 0.0
        %3240 = vmatprep.subr.mxu0 0.0
        %3241 = vmatpush2.xpose.msra.mxu0 0.0
        %3242 = vmatprep.subr.mxu0 0.0
        %3243 = vmatpush2.xpose.msra.mxu0 0.0
        %3244 = vmatprep.subr.mxu0 0.0
        %3245 = vmatpush2.xpose.msra.mxu0 0.0
        %3246 = vmatprep.subr.mxu0 0.0
        %3247 = vmatpush2.xpose.msra.mxu0 0.0
        %3248 = vmatprep.subr.mxu0 0.0
        %3249 = vmatpush2.xpose.msra.mxu0 0.0
        %3250 = vmatprep.subr.mxu0 0.0
        %3251 = vmatpush2.xpose.msra.mxu0 0.0
        %3252 = vmatprep.subr.mxu0 0.0
        %3253 = vmatpush2.xpose.msra.mxu0 0.0
        %3254 = vmatprep.subr.mxu0 0.0
        %3255 = vmatpush2.xpose.msra.mxu0 0.0
        %3256 = vmatprep.subr.mxu0 0.0
        %3257 = vmatpush2.xpose.msra.mxu0 0.0
        %3258 = vmatprep.subr.mxu0 0.0
        %3259 = vmatpush2.xpose.msra.mxu0 0.0
        %3260 = vmatprep.subr.mxu0 0.0
        %3261 = vmatpush2.xpose.msra.mxu0 0.0
        %3262 = vmatprep.subr.mxu0 0.0
        %3263 = vmatpush2.xpose.msra.mxu0 0.0
        %3264 = vmatprep.mubr.f32.mxu0 0.0
        %3265 = vmatmul.mubr.f32.gmra.mxu0 %v3198
        %v3266 = vpop.f32.mrf.mxu0
        %v3267 = vadd.f32 0.0, %v3266
        %v3268 = vpop.f32.mrf.mxu0
        %3269 = vdwg.mxu0
        %v3270 = vsel %vm880, %v3048, -inf
        %3271 = vmax.xlane.f32.xlu0 %v3270
        %v3272 = vpop.xlane.xlu0 %3271
        %v3273 = vsel %vm880, %v3121, -inf
        %3274 = vmax.xlane.f32.xlu0 %v3273
        %v3275 = vpop.xlane.xlu0 %3274
        %v3276 = vsel %vm880, %v3194, -inf
        %3277 = vmax.xlane.f32.xlu0 %v3276
        %v3278 = vpop.xlane.xlu0 %3277
        %v3279 = vsel %vm880, %v3267, -inf
        %3280 = vmax.xlane.f32.xlu0 %v3279
        %v3281 = vpop.xlane.xlu0 %3280
        %v3282 = vsub.f32 %v3048, %v3272
        %v3283 = vsub.f32 %v3121, %v3275
        %v3284 = vsub.f32 %v3194, %v3278
        %v3285 = vsub.f32 %v3267, %v3281
        %v3286 = vmul.f32 %v3282, 1.442695
        %v3287 = vpow.pop %v3286
        %v3288 = vmul.f32 %v3283, 1.442695
        %v3289 = vpow.pop %v3288
        %v3290 = vmul.f32 %v3284, 1.442695
        %v3291 = vpow.pop %v3290
        %v3292 = vmul.f32 %v3285, 1.442695
        %v3293 = vpow.pop %v3292
        %v3294 = vsel %vm880, %v3287, 0.0
        %3295 = vadd.xlane.f32.xlu0 %v3294
        %v3296 = vpop.xlane.xlu0 %3295
        %v3297 = vsel %vm880, %v3289, 0.0
        %3298 = vadd.xlane.f32.xlu0 %v3297
        %v3299 = vpop.xlane.xlu0 %3298
        %v3300 = vsel %vm880, %v3291, 0.0
        %3301 = vadd.xlane.f32.xlu0 %v3300
        %v3302 = vpop.xlane.xlu0 %3301
        %v3303 = vsel %vm880, %v3293, 0.0
        %3304 = vadd.xlane.f32.xlu0 %v3303
        %v3305 = vpop.xlane.xlu0 %3304
        %v3306 = vrcp.pop %v3296
        %v3307 = vrcp.pop %v3299
        %v3308 = vrcp.pop %v3302
        %v3309 = vrcp.pop %v3305
        %v3310 = vmul.f32 %v3287, %v3306
        %v3311 = vmul.f32 %v3289, %v3307
        %v3312 = vmul.f32 %v3291, %v3308
        %v3313 = vmul.f32 %v3293, %v3309
        %v3315 = vsel %vm880, %v3310, 0
        %3317 = vmatprep.subr.mxu0 0.0
        %3318 = vmatpush1.msra.mxu0 0.0
        %3319 = vmatprep.subr.mxu0 0.0
        %3320 = vmatpush1.msra.mxu0 0.0
        %3321 = vmatprep.subr.mxu0 0.0
        %3322 = vmatpush1.msra.mxu0 0.0
        %3323 = vmatprep.subr.mxu0 0.0
        %3324 = vmatpush1.msra.mxu0 0.0
        %3325 = vmatprep.subr.mxu0 0.0
        %3326 = vmatpush1.msra.mxu0 0.0
        %3327 = vmatprep.subr.mxu0 0.0
        %3328 = vmatpush1.msra.mxu0 0.0
        %3329 = vmatprep.subr.mxu0 0.0
        %3330 = vmatpush1.msra.mxu0 0.0
        %3331 = vmatprep.subr.mxu0 0.0
        %3332 = vmatpush1.msra.mxu0 0.0
        %3333 = vmatprep.subr.mxu0 0.0
        %3334 = vmatpush1.msra.mxu0 0.0
        %3335 = vmatprep.subr.mxu0 0.0
        %3336 = vmatpush1.msra.mxu0 0.0
        %3337 = vmatprep.subr.mxu0 0.0
        %3338 = vmatpush1.msra.mxu0 0.0
        %3339 = vmatprep.subr.mxu0 0.0
        %3340 = vmatpush1.msra.mxu0 0.0
        %3341 = vmatprep.subr.mxu0 0.0
        %3342 = vmatpush1.msra.mxu0 0.0
        %3343 = vmatprep.subr.mxu0 0.0
        %3344 = vmatpush1.msra.mxu0 0.0
        %3345 = vmatprep.subr.mxu0 0.0
        %3346 = vmatpush1.msra.mxu0 0.0
        %3347 = vmatprep.subr.mxu0 0.0
        %3348 = vmatpush1.msra.mxu0 %v2468
        %3349 = vmatprep.subr.mxu0 0.0
        %3350 = vmatpush2.msra.mxu0 0.0
        %3351 = vmatprep.subr.mxu0 0.0
        %3352 = vmatpush2.msra.mxu0 0.0
        %3353 = vmatprep.subr.mxu0 0.0
        %3354 = vmatpush2.msra.mxu0 0.0
        %3355 = vmatprep.subr.mxu0 0.0
        %3356 = vmatpush2.msra.mxu0 0.0
        %3357 = vmatprep.subr.mxu0 0.0
        %3358 = vmatpush2.msra.mxu0 0.0
        %3359 = vmatprep.subr.mxu0 0.0
        %3360 = vmatpush2.msra.mxu0 0.0
        %3361 = vmatprep.subr.mxu0 0.0
        %3362 = vmatpush2.msra.mxu0 0.0
        %3363 = vmatprep.subr.mxu0 0.0
        %3364 = vmatpush2.msra.mxu0 0.0
        %3365 = vmatprep.subr.mxu0 0.0
        %3366 = vmatpush2.msra.mxu0 0.0
        %3367 = vmatprep.subr.mxu0 0.0
        %3368 = vmatpush2.msra.mxu0 0.0
        %3369 = vmatprep.subr.mxu0 0.0
        %3370 = vmatpush2.msra.mxu0 0.0
        %3371 = vmatprep.subr.mxu0 0.0
        %3372 = vmatpush2.msra.mxu0 0.0
        %3373 = vmatprep.subr.mxu0 0.0
        %3374 = vmatpush2.msra.mxu0 0.0
        %3375 = vmatprep.subr.mxu0 0.0
        %3376 = vmatpush2.msra.mxu0 0.0
        %3377 = vmatprep.subr.mxu0 0.0
        %3378 = vmatpush2.msra.mxu0 0.0
        %3379 = vmatprep.subr.mxu0 0.0
        %3380 = vmatpush2.msra.mxu0 0.0
        %3381 = vmatprep.mubr.f32.mxu0 0.0
        %3382 = vmatmul.mubr.f32.gmra.mxu0 %v3315
        %v3383 = vpop.f32.mrf.mxu0
        %v3384 = vadd.f32 0.0, %v3383
        %v3385 = vpop.f32.mrf.mxu0
        %3386 = vdwg.mxu0
        %v3388 = vsel %vm880, %v3311, 0
        %3390 = vmatprep.subr.mxu0 0.0
        %3391 = vmatpush1.msra.mxu0 0.0
        %3392 = vmatprep.subr.mxu0 0.0
        %3393 = vmatpush1.msra.mxu0 0.0
        %3394 = vmatprep.subr.mxu0 0.0
        %3395 = vmatpush1.msra.mxu0 0.0
        %3396 = vmatprep.subr.mxu0 0.0
        %3397 = vmatpush1.msra.mxu0 0.0
        %3398 = vmatprep.subr.mxu0 0.0
        %3399 = vmatpush1.msra.mxu0 0.0
        %3400 = vmatprep.subr.mxu0 0.0
        %3401 = vmatpush1.msra.mxu0 0.0
        %3402 = vmatprep.subr.mxu0 0.0
        %3403 = vmatpush1.msra.mxu0 0.0
        %3404 = vmatprep.subr.mxu0 0.0
        %3405 = vmatpush1.msra.mxu0 0.0
        %3406 = vmatprep.subr.mxu0 0.0
        %3407 = vmatpush1.msra.mxu0 0.0
        %3408 = vmatprep.subr.mxu0 0.0
        %3409 = vmatpush1.msra.mxu0 0.0
        %3410 = vmatprep.subr.mxu0 0.0
        %3411 = vmatpush1.msra.mxu0 0.0
        %3412 = vmatprep.subr.mxu0 0.0
        %3413 = vmatpush1.msra.mxu0 0.0
        %3414 = vmatprep.subr.mxu0 0.0
        %3415 = vmatpush1.msra.mxu0 0.0
        %3416 = vmatprep.subr.mxu0 0.0
        %3417 = vmatpush1.msra.mxu0 0.0
        %3418 = vmatprep.subr.mxu0 0.0
        %3419 = vmatpush1.msra.mxu0 0.0
        %3420 = vmatprep.subr.mxu0 0.0
        %3421 = vmatpush1.msra.mxu0 %v2538
        %3422 = vmatprep.subr.mxu0 0.0
        %3423 = vmatpush2.msra.mxu0 0.0
        %3424 = vmatprep.subr.mxu0 0.0
        %3425 = vmatpush2.msra.mxu0 0.0
        %3426 = vmatprep.subr.mxu0 0.0
        %3427 = vmatpush2.msra.mxu0 0.0
        %3428 = vmatprep.subr.mxu0 0.0
        %3429 = vmatpush2.msra.mxu0 0.0
        %3430 = vmatprep.subr.mxu0 0.0
        %3431 = vmatpush2.msra.mxu0 0.0
        %3432 = vmatprep.subr.mxu0 0.0
        %3433 = vmatpush2.msra.mxu0 0.0
        %3434 = vmatprep.subr.mxu0 0.0
        %3435 = vmatpush2.msra.mxu0 0.0
        %3436 = vmatprep.subr.mxu0 0.0
        %3437 = vmatpush2.msra.mxu0 0.0
        %3438 = vmatprep.subr.mxu0 0.0
        %3439 = vmatpush2.msra.mxu0 0.0
        %3440 = vmatprep.subr.mxu0 0.0
        %3441 = vmatpush2.msra.mxu0 0.0
        %3442 = vmatprep.subr.mxu0 0.0
        %3443 = vmatpush2.msra.mxu0 0.0
        %3444 = vmatprep.subr.mxu0 0.0
        %3445 = vmatpush2.msra.mxu0 0.0
        %3446 = vmatprep.subr.mxu0 0.0
        %3447 = vmatpush2.msra.mxu0 0.0
        %3448 = vmatprep.subr.mxu0 0.0
        %3449 = vmatpush2.msra.mxu0 0.0
        %3450 = vmatprep.subr.mxu0 0.0
        %3451 = vmatpush2.msra.mxu0 0.0
        %3452 = vmatprep.subr.mxu0 0.0
        %3453 = vmatpush2.msra.mxu0 0.0
        %3454 = vmatprep.mubr.f32.mxu0 0.0
        %3455 = vmatmul.mubr.f32.gmra.mxu0 %v3388
        %v3456 = vpop.f32.mrf.mxu0
        %v3457 = vadd.f32 0.0, %v3456
        %v3458 = vpop.f32.mrf.mxu0
        %3459 = vdwg.mxu0
        %v3461 = vsel %vm880, %v3312, 0
        %3463 = vmatprep.subr.mxu0 0.0
        %3464 = vmatpush1.msra.mxu0 0.0
        %3465 = vmatprep.subr.mxu0 0.0
        %3466 = vmatpush1.msra.mxu0 0.0
        %3467 = vmatprep.subr.mxu0 0.0
        %3468 = vmatpush1.msra.mxu0 0.0
        %3469 = vmatprep.subr.mxu0 0.0
        %3470 = vmatpush1.msra.mxu0 0.0
        %3471 = vmatprep.subr.mxu0 0.0
        %3472 = vmatpush1.msra.mxu0 0.0
        %3473 = vmatprep.subr.mxu0 0.0
        %3474 = vmatpush1.msra.mxu0 0.0
        %3475 = vmatprep.subr.mxu0 0.0
        %3476 = vmatpush1.msra.mxu0 0.0
        %3477 = vmatprep.subr.mxu0 0.0
        %3478 = vmatpush1.msra.mxu0 0.0
        %3479 = vmatprep.subr.mxu0 0.0
        %3480 = vmatpush1.msra.mxu0 0.0
        %3481 = vmatprep.subr.mxu0 0.0
        %3482 = vmatpush1.msra.mxu0 0.0
        %3483 = vmatprep.subr.mxu0 0.0
        %3484 = vmatpush1.msra.mxu0 0.0
        %3485 = vmatprep.subr.mxu0 0.0
        %3486 = vmatpush1.msra.mxu0 0.0
        %3487 = vmatprep.subr.mxu0 0.0
        %3488 = vmatpush1.msra.mxu0 0.0
        %3489 = vmatprep.subr.mxu0 0.0
        %3490 = vmatpush1.msra.mxu0 0.0
        %3491 = vmatprep.subr.mxu0 0.0
        %3492 = vmatpush1.msra.mxu0 0.0
        %3493 = vmatprep.subr.mxu0 0.0
        %3494 = vmatpush1.msra.mxu0 %v2608
        %3495 = vmatprep.subr.mxu0 0.0
        %3496 = vmatpush2.msra.mxu0 0.0
        %3497 = vmatprep.subr.mxu0 0.0
        %3498 = vmatpush2.msra.mxu0 0.0
        %3499 = vmatprep.subr.mxu0 0.0
        %3500 = vmatpush2.msra.mxu0 0.0
        %3501 = vmatprep.subr.mxu0 0.0
        %3502 = vmatpush2.msra.mxu0 0.0
        %3503 = vmatprep.subr.mxu0 0.0
        %3504 = vmatpush2.msra.mxu0 0.0
        %3505 = vmatprep.subr.mxu0 0.0
        %3506 = vmatpush2.msra.mxu0 0.0
        %3507 = vmatprep.subr.mxu0 0.0
        %3508 = vmatpush2.msra.mxu0 0.0
        %3509 = vmatprep.subr.mxu0 0.0
        %3510 = vmatpush2.msra.mxu0 0.0
        %3511 = vmatprep.subr.mxu0 0.0
        %3512 = vmatpush2.msra.mxu0 0.0
        %3513 = vmatprep.subr.mxu0 0.0
        %3514 = vmatpush2.msra.mxu0 0.0
        %3515 = vmatprep.subr.mxu0 0.0
        %3516 = vmatpush2.msra.mxu0 0.0
        %3517 = vmatprep.subr.mxu0 0.0
        %3518 = vmatpush2.msra.mxu0 0.0
        %3519 = vmatprep.subr.mxu0 0.0
        %3520 = vmatpush2.msra.mxu0 0.0
        %3521 = vmatprep.subr.mxu0 0.0
        %3522 = vmatpush2.msra.mxu0 0.0
        %3523 = vmatprep.subr.mxu0 0.0
        %3524 = vmatpush2.msra.mxu0 0.0
        %3525 = vmatprep.subr.mxu0 0.0
        %3526 = vmatpush2.msra.mxu0 0.0
        %3527 = vmatprep.mubr.f32.mxu0 0.0
        %3528 = vmatmul.mubr.f32.gmra.mxu0 %v3461
        %v3529 = vpop.f32.mrf.mxu0
        %v3530 = vadd.f32 0.0, %v3529
        %v3531 = vpop.f32.mrf.mxu0
        %3532 = vdwg.mxu0
        %v3534 = vsel %vm880, %v3313, 0
        %3536 = vmatprep.subr.mxu0 0.0
        %3537 = vmatpush1.msra.mxu0 0.0
        %3538 = vmatprep.subr.mxu0 0.0
        %3539 = vmatpush1.msra.mxu0 0.0
        %3540 = vmatprep.subr.mxu0 0.0
        %3541 = vmatpush1.msra.mxu0 0.0
        %3542 = vmatprep.subr.mxu0 0.0
        %3543 = vmatpush1.msra.mxu0 0.0
        %3544 = vmatprep.subr.mxu0 0.0
        %3545 = vmatpush1.msra.mxu0 0.0
        %3546 = vmatprep.subr.mxu0 0.0
        %3547 = vmatpush1.msra.mxu0 0.0
        %3548 = vmatprep.subr.mxu0 0.0
        %3549 = vmatpush1.msra.mxu0 0.0
        %3550 = vmatprep.subr.mxu0 0.0
        %3551 = vmatpush1.msra.mxu0 0.0
        %3552 = vmatprep.subr.mxu0 0.0
        %3553 = vmatpush1.msra.mxu0 0.0
        %3554 = vmatprep.subr.mxu0 0.0
        %3555 = vmatpush1.msra.mxu0 0.0
        %3556 = vmatprep.subr.mxu0 0.0
        %3557 = vmatpush1.msra.mxu0 0.0
        %3558 = vmatprep.subr.mxu0 0.0
        %3559 = vmatpush1.msra.mxu0 0.0
        %3560 = vmatprep.subr.mxu0 0.0
        %3561 = vmatpush1.msra.mxu0 0.0
        %3562 = vmatprep.subr.mxu0 0.0
        %3563 = vmatpush1.msra.mxu0 0.0
        %3564 = vmatprep.subr.mxu0 0.0
        %3565 = vmatpush1.msra.mxu0 0.0
        %3566 = vmatprep.subr.mxu0 0.0
        %3567 = vmatpush1.msra.mxu0 %v2678
        %3568 = vmatprep.subr.mxu0 0.0
        %3569 = vmatpush2.msra.mxu0 0.0
        %3570 = vmatprep.subr.mxu0 0.0
        %3571 = vmatpush2.msra.mxu0 0.0
        %3572 = vmatprep.subr.mxu0 0.0
        %3573 = vmatpush2.msra.mxu0 0.0
        %3574 = vmatprep.subr.mxu0 0.0
        %3575 = vmatpush2.msra.mxu0 0.0
        %3576 = vmatprep.subr.mxu0 0.0
        %3577 = vmatpush2.msra.mxu0 0.0
        %3578 = vmatprep.subr.mxu0 0.0
        %3579 = vmatpush2.msra.mxu0 0.0
        %3580 = vmatprep.subr.mxu0 0.0
        %3581 = vmatpush2.msra.mxu0 0.0
        %3582 = vmatprep.subr.mxu0 0.0
        %3583 = vmatpush2.msra.mxu0 0.0
        %3584 = vmatprep.subr.mxu0 0.0
        %3585 = vmatpush2.msra.mxu0 0.0
        %3586 = vmatprep.subr.mxu0 0.0
        %3587 = vmatpush2.msra.mxu0 0.0
        %3588 = vmatprep.subr.mxu0 0.0
        %3589 = vmatpush2.msra.mxu0 0.0
        %3590 = vmatprep.subr.mxu0 0.0
        %3591 = vmatpush2.msra.mxu0 0.0
        %3592 = vmatprep.subr.mxu0 0.0
        %3593 = vmatpush2.msra.mxu0 0.0
        %3594 = vmatprep.subr.mxu0 0.0
        %3595 = vmatpush2.msra.mxu0 0.0
        %3596 = vmatprep.subr.mxu0 0.0
        %3597 = vmatpush2.msra.mxu0 0.0
        %3598 = vmatprep.subr.mxu0 0.0
        %3599 = vmatpush2.msra.mxu0 0.0
        %3600 = vmatprep.mubr.f32.mxu0 0.0
        %3601 = vmatmul.mubr.f32.gmra.mxu0 %v3534
        %v3602 = vpop.f32.mrf.mxu0
        %v3603 = vadd.f32 0.0, %v3602
        %v3604 = vpop.f32.mrf.mxu0
        %3605 = vdwg.mxu0
        %s3606 = scalar_lea.vmem %s6, 32
        %v3607 = vld [vmem:[%s3606] sm:$0xff]
        %v3608 = vld [vmem:[%s3606 + $0x8] sm:$0xff]
        %v3609 = vld [vmem:[%s3606 + $0x10] sm:$0xff]
        %v3610 = vld [vmem:[%s3606 + $0x18] sm:$0xff]
        %v3612 = vsel %vm880, %v3384, 0
        %3614 = vmatprep.subr.mxu0 0.0
        %3615 = vmatpush1.msra.mxu0 0.0
        %3616 = vmatprep.subr.mxu0 0.0
        %3617 = vmatpush1.msra.mxu0 0.0
        %3618 = vmatprep.subr.mxu0 0.0
        %3619 = vmatpush1.msra.mxu0 0.0
        %3620 = vmatprep.subr.mxu0 0.0
        %3621 = vmatpush1.msra.mxu0 0.0
        %3622 = vmatprep.subr.mxu0 0.0
        %3623 = vmatpush1.msra.mxu0 0.0
        %3624 = vmatprep.subr.mxu0 0.0
        %3625 = vmatpush1.msra.mxu0 0.0
        %3626 = vmatprep.subr.mxu0 0.0
        %3627 = vmatpush1.msra.mxu0 0.0
        %3628 = vmatprep.subr.mxu0 0.0
        %3629 = vmatpush1.msra.mxu0 0.0
        %3630 = vmatprep.subr.mxu0 0.0
        %3631 = vmatpush1.msra.mxu0 0.0
        %3632 = vmatprep.subr.mxu0 0.0
        %3633 = vmatpush1.msra.mxu0 0.0
        %3634 = vmatprep.subr.mxu0 0.0
        %3635 = vmatpush1.msra.mxu0 0.0
        %3636 = vmatprep.subr.mxu0 0.0
        %3637 = vmatpush1.msra.mxu0 0.0
        %3638 = vmatprep.subr.mxu0 0.0
        %3639 = vmatpush1.msra.mxu0 0.0
        %3640 = vmatprep.subr.mxu0 0.0
        %3641 = vmatpush1.msra.mxu0 0.0
        %3642 = vmatprep.subr.mxu0 0.0
        %3643 = vmatpush1.msra.mxu0 0.0
        %3644 = vmatprep.subr.mxu0 0.0
        %3645 = vmatpush1.msra.mxu0 %v3607
        %3646 = vmatprep.subr.mxu0 0.0
        %3647 = vmatpush2.msra.mxu0 0.0
        %3648 = vmatprep.subr.mxu0 0.0
        %3649 = vmatpush2.msra.mxu0 0.0
        %3650 = vmatprep.subr.mxu0 0.0
        %3651 = vmatpush2.msra.mxu0 0.0
        %3652 = vmatprep.subr.mxu0 0.0
        %3653 = vmatpush2.msra.mxu0 0.0
        %3654 = vmatprep.subr.mxu0 0.0
        %3655 = vmatpush2.msra.mxu0 0.0
        %3656 = vmatprep.subr.mxu0 0.0
        %3657 = vmatpush2.msra.mxu0 0.0
        %3658 = vmatprep.subr.mxu0 0.0
        %3659 = vmatpush2.msra.mxu0 0.0
        %3660 = vmatprep.subr.mxu0 0.0
        %3661 = vmatpush2.msra.mxu0 0.0
        %3662 = vmatprep.subr.mxu0 0.0
        %3663 = vmatpush2.msra.mxu0 0.0
        %3664 = vmatprep.subr.mxu0 0.0
        %3665 = vmatpush2.msra.mxu0 0.0
        %3666 = vmatprep.subr.mxu0 0.0
        %3667 = vmatpush2.msra.mxu0 0.0
        %3668 = vmatprep.subr.mxu0 0.0
        %3669 = vmatpush2.msra.mxu0 0.0
        %3670 = vmatprep.subr.mxu0 0.0
        %3671 = vmatpush2.msra.mxu0 0.0
        %3672 = vmatprep.subr.mxu0 0.0
        %3673 = vmatpush2.msra.mxu0 0.0
        %3674 = vmatprep.subr.mxu0 0.0
        %3675 = vmatpush2.msra.mxu0 0.0
        %3676 = vmatprep.subr.mxu0 0.0
        %3677 = vmatpush2.msra.mxu0 0.0
        %3678 = vmatprep.mubr.f32.mxu0 0.0
        %3679 = vmatmul.mubr.f32.gmra.mxu0 %v3612
        %v3680 = vpop.f32.mrf.mxu0
        %v3681 = vadd.f32 0.0, %v3680
        %v3682 = vpop.f32.mrf.mxu0
        %3683 = vdwg.mxu0
        %v3685 = vsel %vm880, %v3457, 0
        %3687 = vmatprep.subr.mxu0 0.0
        %3688 = vmatpush1.msra.mxu0 0.0
        %3689 = vmatprep.subr.mxu0 0.0
        %3690 = vmatpush1.msra.mxu0 0.0
        %3691 = vmatprep.subr.mxu0 0.0
        %3692 = vmatpush1.msra.mxu0 0.0
        %3693 = vmatprep.subr.mxu0 0.0
        %3694 = vmatpush1.msra.mxu0 0.0
        %3695 = vmatprep.subr.mxu0 0.0
        %3696 = vmatpush1.msra.mxu0 0.0
        %3697 = vmatprep.subr.mxu0 0.0
        %3698 = vmatpush1.msra.mxu0 0.0
        %3699 = vmatprep.subr.mxu0 0.0
        %3700 = vmatpush1.msra.mxu0 0.0
        %3701 = vmatprep.subr.mxu0 0.0
        %3702 = vmatpush1.msra.mxu0 0.0
        %3703 = vmatprep.subr.mxu0 0.0
        %3704 = vmatpush1.msra.mxu0 0.0
        %3705 = vmatprep.subr.mxu0 0.0
        %3706 = vmatpush1.msra.mxu0 0.0
        %3707 = vmatprep.subr.mxu0 0.0
        %3708 = vmatpush1.msra.mxu0 0.0
        %3709 = vmatprep.subr.mxu0 0.0
        %3710 = vmatpush1.msra.mxu0 0.0
        %3711 = vmatprep.subr.mxu0 0.0
        %3712 = vmatpush1.msra.mxu0 0.0
        %3713 = vmatprep.subr.mxu0 0.0
        %3714 = vmatpush1.msra.mxu0 0.0
        %3715 = vmatprep.subr.mxu0 0.0
        %3716 = vmatpush1.msra.mxu0 0.0
        %3717 = vmatprep.subr.mxu0 0.0
        %3718 = vmatpush1.msra.mxu0 %v3608
        %3719 = vmatprep.subr.mxu0 0.0
        %3720 = vmatpush2.msra.mxu0 0.0
        %3721 = vmatprep.subr.mxu0 0.0
        %3722 = vmatpush2.msra.mxu0 0.0
        %3723 = vmatprep.subr.mxu0 0.0
        %3724 = vmatpush2.msra.mxu0 0.0
        %3725 = vmatprep.subr.mxu0 0.0
        %3726 = vmatpush2.msra.mxu0 0.0
        %3727 = vmatprep.subr.mxu0 0.0
        %3728 = vmatpush2.msra.mxu0 0.0
        %3729 = vmatprep.subr.mxu0 0.0
        %3730 = vmatpush2.msra.mxu0 0.0
        %3731 = vmatprep.subr.mxu0 0.0
        %3732 = vmatpush2.msra.mxu0 0.0
        %3733 = vmatprep.subr.mxu0 0.0
        %3734 = vmatpush2.msra.mxu0 0.0
        %3735 = vmatprep.subr.mxu0 0.0
        %3736 = vmatpush2.msra.mxu0 0.0
        %3737 = vmatprep.subr.mxu0 0.0
        %3738 = vmatpush2.msra.mxu0 0.0
        %3739 = vmatprep.subr.mxu0 0.0
        %3740 = vmatpush2.msra.mxu0 0.0
        %3741 = vmatprep.subr.mxu0 0.0
        %3742 = vmatpush2.msra.mxu0 0.0
        %3743 = vmatprep.subr.mxu0 0.0
        %3744 = vmatpush2.msra.mxu0 0.0
        %3745 = vmatprep.subr.mxu0 0.0
        %3746 = vmatpush2.msra.mxu0 0.0
        %3747 = vmatprep.subr.mxu0 0.0
        %3748 = vmatpush2.msra.mxu0 0.0
        %3749 = vmatprep.subr.mxu0 0.0
        %3750 = vmatpush2.msra.mxu0 0.0
        %3751 = vmatprep.mubr.f32.mxu0 0.0
        %3752 = vmatmul.mubr.f32.gmra.mxu0 %v3685
        %v3753 = vpop.f32.mrf.mxu0
        %v3754 = vadd.f32 0.0, %v3753
        %v3755 = vpop.f32.mrf.mxu0
        %3756 = vdwg.mxu0
        %v3758 = vsel %vm880, %v3530, 0
        %3760 = vmatprep.subr.mxu0 0.0
        %3761 = vmatpush1.msra.mxu0 0.0
        %3762 = vmatprep.subr.mxu0 0.0
        %3763 = vmatpush1.msra.mxu0 0.0
        %3764 = vmatprep.subr.mxu0 0.0
        %3765 = vmatpush1.msra.mxu0 0.0
        %3766 = vmatprep.subr.mxu0 0.0
        %3767 = vmatpush1.msra.mxu0 0.0
        %3768 = vmatprep.subr.mxu0 0.0
        %3769 = vmatpush1.msra.mxu0 0.0
        %3770 = vmatprep.subr.mxu0 0.0
        %3771 = vmatpush1.msra.mxu0 0.0
        %3772 = vmatprep.subr.mxu0 0.0
        %3773 = vmatpush1.msra.mxu0 0.0
        %3774 = vmatprep.subr.mxu0 0.0
        %3775 = vmatpush1.msra.mxu0 0.0
        %3776 = vmatprep.subr.mxu0 0.0
        %3777 = vmatpush1.msra.mxu0 0.0
        %3778 = vmatprep.subr.mxu0 0.0
        %3779 = vmatpush1.msra.mxu0 0.0
        %3780 = vmatprep.subr.mxu0 0.0
        %3781 = vmatpush1.msra.mxu0 0.0
        %3782 = vmatprep.subr.mxu0 0.0
        %3783 = vmatpush1.msra.mxu0 0.0
        %3784 = vmatprep.subr.mxu0 0.0
        %3785 = vmatpush1.msra.mxu0 0.0
        %3786 = vmatprep.subr.mxu0 0.0
        %3787 = vmatpush1.msra.mxu0 0.0
        %3788 = vmatprep.subr.mxu0 0.0
        %3789 = vmatpush1.msra.mxu0 0.0
        %3790 = vmatprep.subr.mxu0 0.0
        %3791 = vmatpush1.msra.mxu0 %v3609
        %3792 = vmatprep.subr.mxu0 0.0
        %3793 = vmatpush2.msra.mxu0 0.0
        %3794 = vmatprep.subr.mxu0 0.0
        %3795 = vmatpush2.msra.mxu0 0.0
        %3796 = vmatprep.subr.mxu0 0.0
        %3797 = vmatpush2.msra.mxu0 0.0
        %3798 = vmatprep.subr.mxu0 0.0
        %3799 = vmatpush2.msra.mxu0 0.0
        %3800 = vmatprep.subr.mxu0 0.0
        %3801 = vmatpush2.msra.mxu0 0.0
        %3802 = vmatprep.subr.mxu0 0.0
        %3803 = vmatpush2.msra.mxu0 0.0
        %3804 = vmatprep.subr.mxu0 0.0
        %3805 = vmatpush2.msra.mxu0 0.0
        %3806 = vmatprep.subr.mxu0 0.0
        %3807 = vmatpush2.msra.mxu0 0.0
        %3808 = vmatprep.subr.mxu0 0.0
        %3809 = vmatpush2.msra.mxu0 0.0
        %3810 = vmatprep.subr.mxu0 0.0
        %3811 = vmatpush2.msra.mxu0 0.0
        %3812 = vmatprep.subr.mxu0 0.0
        %3813 = vmatpush2.msra.mxu0 0.0
        %3814 = vmatprep.subr.mxu0 0.0
        %3815 = vmatpush2.msra.mxu0 0.0
        %3816 = vmatprep.subr.mxu0 0.0
        %3817 = vmatpush2.msra.mxu0 0.0
        %3818 = vmatprep.subr.mxu0 0.0
        %3819 = vmatpush2.msra.mxu0 0.0
        %3820 = vmatprep.subr.mxu0 0.0
        %3821 = vmatpush2.msra.mxu0 0.0
        %3822 = vmatprep.subr.mxu0 0.0
        %3823 = vmatpush2.msra.mxu0 0.0
        %3824 = vmatprep.mubr.f32.mxu0 0.0
        %3825 = vmatmul.mubr.f32.gmra.mxu0 %v3758
        %v3826 = vpop.f32.mrf.mxu0
        %v3827 = vadd.f32 0.0, %v3826
        %v3828 = vpop.f32.mrf.mxu0
        %3829 = vdwg.mxu0
        %v3831 = vsel %vm880, %v3603, 0
        %3833 = vmatprep.subr.mxu0 0.0
        %3834 = vmatpush1.msra.mxu0 0.0
        %3835 = vmatprep.subr.mxu0 0.0
        %3836 = vmatpush1.msra.mxu0 0.0
        %3837 = vmatprep.subr.mxu0 0.0
        %3838 = vmatpush1.msra.mxu0 0.0
        %3839 = vmatprep.subr.mxu0 0.0
        %3840 = vmatpush1.msra.mxu0 0.0
        %3841 = vmatprep.subr.mxu0 0.0
        %3842 = vmatpush1.msra.mxu0 0.0
        %3843 = vmatprep.subr.mxu0 0.0
        %3844 = vmatpush1.msra.mxu0 0.0
        %3845 = vmatprep.subr.mxu0 0.0
        %3846 = vmatpush1.msra.mxu0 0.0
        %3847 = vmatprep.subr.mxu0 0.0
        %3848 = vmatpush1.msra.mxu0 0.0
        %3849 = vmatprep.subr.mxu0 0.0
        %3850 = vmatpush1.msra.mxu0 0.0
        %3851 = vmatprep.subr.mxu0 0.0
        %3852 = vmatpush1.msra.mxu0 0.0
        %3853 = vmatprep.subr.mxu0 0.0
        %3854 = vmatpush1.msra.mxu0 0.0
        %3855 = vmatprep.subr.mxu0 0.0
        %3856 = vmatpush1.msra.mxu0 0.0
        %3857 = vmatprep.subr.mxu0 0.0
        %3858 = vmatpush1.msra.mxu0 0.0
        %3859 = vmatprep.subr.mxu0 0.0
        %3860 = vmatpush1.msra.mxu0 0.0
        %3861 = vmatprep.subr.mxu0 0.0
        %3862 = vmatpush1.msra.mxu0 0.0
        %3863 = vmatprep.subr.mxu0 0.0
        %3864 = vmatpush1.msra.mxu0 %v3610
        %3865 = vmatprep.subr.mxu0 0.0
        %3866 = vmatpush2.msra.mxu0 0.0
        %3867 = vmatprep.subr.mxu0 0.0
        %3868 = vmatpush2.msra.mxu0 0.0
        %3869 = vmatprep.subr.mxu0 0.0
        %3870 = vmatpush2.msra.mxu0 0.0
        %3871 = vmatprep.subr.mxu0 0.0
        %3872 = vmatpush2.msra.mxu0 0.0
        %3873 = vmatprep.subr.mxu0 0.0
        %3874 = vmatpush2.msra.mxu0 0.0
        %3875 = vmatprep.subr.mxu0 0.0
        %3876 = vmatpush2.msra.mxu0 0.0
        %3877 = vmatprep.subr.mxu0 0.0
        %3878 = vmatpush2.msra.mxu0 0.0
        %3879 = vmatprep.subr.mxu0 0.0
        %3880 = vmatpush2.msra.mxu0 0.0
        %3881 = vmatprep.subr.mxu0 0.0
        %3882 = vmatpush2.msra.mxu0 0.0
        %3883 = vmatprep.subr.mxu0 0.0
        %3884 = vmatpush2.msra.mxu0 0.0
        %3885 = vmatprep.subr.mxu0 0.0
        %3886 = vmatpush2.msra.mxu0 0.0
        %3887 = vmatprep.subr.mxu0 0.0
        %3888 = vmatpush2.msra.mxu0 0.0
        %3889 = vmatprep.subr.mxu0 0.0
        %3890 = vmatpush2.msra.mxu0 0.0
        %3891 = vmatprep.subr.mxu0 0.0
        %3892 = vmatpush2.msra.mxu0 0.0
        %3893 = vmatprep.subr.mxu0 0.0
        %3894 = vmatpush2.msra.mxu0 0.0
        %3895 = vmatprep.subr.mxu0 0.0
        %3896 = vmatpush2.msra.mxu0 0.0
        %3897 = vmatprep.mubr.f32.mxu0 0.0
        %3898 = vmatmul.mubr.f32.gmra.mxu0 %v3831
        %v3899 = vpop.f32.mrf.mxu0
        %v3900 = vadd.f32 0.0, %v3899
        %v3901 = vpop.f32.mrf.mxu0
        %3902 = vdwg.mxu0
        %v3903 = vsel %vm520, %v3681, 0.0
        %v3904 = vsel %vm520, %v3754, 0.0
        %v3905 = vadd.f32 %v3903, %v3904
        %v3906 = vsel %vm520, %v3827, 0.0
        %v3907 = vadd.f32 %v3905, %v3906
        %v3908 = vsel %vm520, %v3900, 0.0
        %v3909 = vadd.f32 %v3907, %v3908
        %s3910 = scalar_lea.vmem %s7, 1
        %v3911 = vld [vmem:[%s3910] sm:$0x1]
        %v3913 = vlaneseq
        %v3914 = vshrl.u32 %v3913, 7
        %v3915 = vsub.s32 0, %v3914
        %v3916 = vrot.slane %v3911, %v3915
        %v3918 = vadd.f32 %v3909, %v3916
        %v3919 = vadd.f32 %v3918, %v2320
        %s3920 = scalar_lea.vmem %s8, 1
        %v3921 = vld [vmem:[%s3920] sm:$0x1]
        %s3922 = scalar_lea.vmem %s9, 1
        %v3923 = vld [vmem:[%s3922] sm:$0x1]
        %v3924 = vsel %vm520, %v3919, 0.0
        %3925 = vadd.xlane.f32.xlu0 %v3924
        %v3926 = vpop.xlane.xlu0 %3925
        %v3927 = vmul.f32 %v3926, %v524
        %v3928 = vsub.f32 %v3919, %v3927
        %v3929 = vmul.f32 %v3928, %v3928
        %v3930 = vsel %vm520, %v3929, 0.0
        %3931 = vadd.xlane.f32.xlu0 %v3930
        %v3932 = vpop.xlane.xlu0 %3931
        %v3933 = vmul.f32 %v3932, %v524
        %v3934 = vadd.f32 %v3933, 1e-05
        %v3935 = vrsqrt.pop %v3934
        %v3936 = vmul.f32 %v3928, %v3935
        %v3938 = vlaneseq
        %v3939 = vshrl.u32 %v3938, 7
        %v3940 = vsub.s32 0, %v3939
        %v3941 = vrot.slane %v3921, %v3940
        %v3943 = vmul.f32 %v3936, %v3941
        %v3945 = vlaneseq
        %v3946 = vshrl.u32 %v3945, 7
        %v3947 = vsub.s32 0, %v3946
        %v3948 = vrot.slane %v3923, %v3947
        %v3950 = vadd.f32 %v3943, %v3948
        %s3951 = scalar_lea.vmem %s10, 32
        %v3952 = vld [vmem:[%s3951] sm:$0xff]
        %v3953 = vld [vmem:[%s3951 + $0x8] sm:$0xff]
        %v3954 = vld [vmem:[%s3951 + $0x10] sm:$0xff]
        %v3955 = vld [vmem:[%s3951 + $0x18] sm:$0xff]
        %s3956 = scalar_lea.vmem %s11, 1
        %v3957 = vld [vmem:[%s3956] sm:$0x1]
        %v3959 = vlaneseq
        %v3960 = vshrl.u32 %v3959, 7
        %v3961 = vsub.s32 0, %v3960
        %v3962 = vrot.slane %v3957, %v3961
        %v3965 = vsel %vm520, %v3950, 0
        %3967 = vmatprep.subr.mxu0 0.0
        %3968 = vmatpush1.msra.mxu0 0.0
        %3969 = vmatprep.subr.mxu0 0.0
        %3970 = vmatpush1.msra.mxu0 0.0
        %3971 = vmatprep.subr.mxu0 0.0
        %3972 = vmatpush1.msra.mxu0 0.0
        %3973 = vmatprep.subr.mxu0 0.0
        %3974 = vmatpush1.msra.mxu0 0.0
        %3975 = vmatprep.subr.mxu0 0.0
        %3976 = vmatpush1.msra.mxu0 0.0
        %3977 = vmatprep.subr.mxu0 0.0
        %3978 = vmatpush1.msra.mxu0 0.0
        %3979 = vmatprep.subr.mxu0 0.0
        %3980 = vmatpush1.msra.mxu0 0.0
        %3981 = vmatprep.subr.mxu0 0.0
        %3982 = vmatpush1.msra.mxu0 0.0
        %3983 = vmatprep.subr.mxu0 0.0
        %3984 = vmatpush1.msra.mxu0 0.0
        %3985 = vmatprep.subr.mxu0 0.0
        %3986 = vmatpush1.msra.mxu0 0.0
        %3987 = vmatprep.subr.mxu0 0.0
        %3988 = vmatpush1.msra.mxu0 0.0
        %3989 = vmatprep.subr.mxu0 0.0
        %3990 = vmatpush1.msra.mxu0 0.0
        %3991 = vmatprep.subr.mxu0 0.0
        %3992 = vmatpush1.msra.mxu0 %v3955
        %3993 = vmatprep.subr.mxu0 0.0
        %3994 = vmatpush1.msra.mxu0 %v3954
        %3995 = vmatprep.subr.mxu0 0.0
        %3996 = vmatpush1.msra.mxu0 %v3953
        %3997 = vmatprep.subr.mxu0 0.0
        %3998 = vmatpush1.msra.mxu0 %v3952
        %3999 = vmatprep.subr.mxu0 0.0
        %4000 = vmatpush2.msra.mxu0 0.0
        %4001 = vmatprep.subr.mxu0 0.0
        %4002 = vmatpush2.msra.mxu0 0.0
        %4003 = vmatprep.subr.mxu0 0.0
        %4004 = vmatpush2.msra.mxu0 0.0
        %4005 = vmatprep.subr.mxu0 0.0
        %4006 = vmatpush2.msra.mxu0 0.0
        %4007 = vmatprep.subr.mxu0 0.0
        %4008 = vmatpush2.msra.mxu0 0.0
        %4009 = vmatprep.subr.mxu0 0.0
        %4010 = vmatpush2.msra.mxu0 0.0
        %4011 = vmatprep.subr.mxu0 0.0
        %4012 = vmatpush2.msra.mxu0 0.0
        %4013 = vmatprep.subr.mxu0 0.0
        %4014 = vmatpush2.msra.mxu0 0.0
        %4015 = vmatprep.subr.mxu0 0.0
        %4016 = vmatpush2.msra.mxu0 0.0
        %4017 = vmatprep.subr.mxu0 0.0
        %4018 = vmatpush2.msra.mxu0 0.0
        %4019 = vmatprep.subr.mxu0 0.0
        %4020 = vmatpush2.msra.mxu0 0.0
        %4021 = vmatprep.subr.mxu0 0.0
        %4022 = vmatpush2.msra.mxu0 0.0
        %4023 = vmatprep.subr.mxu0 0.0
        %4024 = vmatpush2.msra.mxu0 0.0
        %4025 = vmatprep.subr.mxu0 0.0
        %4026 = vmatpush2.msra.mxu0 0.0
        %4027 = vmatprep.subr.mxu0 0.0
        %4028 = vmatpush2.msra.mxu0 0.0
        %4029 = vmatprep.subr.mxu0 0.0
        %4030 = vmatpush2.msra.mxu0 0.0
        %4031 = vmatprep.mubr.f32.mxu0 0.0
        %4032 = vmatmul.mubr.f32.gmra.mxu0 %v3965
        %v4033 = vpop.f32.mrf.mxu0
        %v4034 = vadd.f32 %v3962, %v4033
        %v4035 = vpop.f32.mrf.mxu0
        %4036 = vdwg.mxu0
        %v4037 = vmul.f32 %v4034, 0.5
        %v4038 = vmul.f32 %v4034, 0.70710677
        %v4039 = verf.f32.pop %v4038
        %v4040 = vadd.f32 %v4039, 1.0
        %v4041 = vmul.f32 %v4037, %v4040
        %s4042 = scalar_lea.vmem %s12, 64
        %v4043 = vld [vmem:[%s4042] sm:$0xff]
        %v4044 = vld [vmem:[%s4042 + $0x8] sm:$0xff]
        %v4045 = vld [vmem:[%s4042 + $0x10] sm:$0xff]
        %v4046 = vld [vmem:[%s4042 + $0x18] sm:$0xff]
        %v4047 = vld [vmem:[%s4042 + $0x20] sm:$0xff]
        %v4048 = vld [vmem:[%s4042 + $0x28] sm:$0xff]
        %v4049 = vld [vmem:[%s4042 + $0x30] sm:$0xff]
        %v4050 = vld [vmem:[%s4042 + $0x38] sm:$0xff]
        %s4051 = scalar_lea.vmem %s13, 1
        %v4052 = vld [vmem:[%s4051] sm:$0x1]
        %v4054 = vlaneseq
        %v4055 = vshrl.u32 %v4054, 7
        %v4056 = vsub.s32 0, %v4055
        %v4057 = vrot.slane %v4052, %v4056
        %v4060 = vsel %vm2246, %v4041, 0
        %4062 = vmatprep.subr.mxu0 0.0
        %4063 = vmatpush1.msra.mxu0 0.0
        %4064 = vmatprep.subr.mxu0 0.0
        %4065 = vmatpush1.msra.mxu0 0.0
        %4066 = vmatprep.subr.mxu0 0.0
        %4067 = vmatpush1.msra.mxu0 0.0
        %4068 = vmatprep.subr.mxu0 0.0
        %4069 = vmatpush1.msra.mxu0 0.0
        %4070 = vmatprep.subr.mxu0 0.0
        %4071 = vmatpush1.msra.mxu0 0.0
        %4072 = vmatprep.subr.mxu0 0.0
        %4073 = vmatpush1.msra.mxu0 0.0
        %4074 = vmatprep.subr.mxu0 0.0
        %4075 = vmatpush1.msra.mxu0 0.0
        %4076 = vmatprep.subr.mxu0 0.0
        %4077 = vmatpush1.msra.mxu0 0.0
        %4078 = vmatprep.subr.mxu0 0.0
        %4079 = vmatpush1.msra.mxu0 %v4050
        %4080 = vmatprep.subr.mxu0 0.0
        %4081 = vmatpush1.msra.mxu0 %v4049
        %4082 = vmatprep.subr.mxu0 0.0
        %4083 = vmatpush1.msra.mxu0 %v4048
        %4084 = vmatprep.subr.mxu0 0.0
        %4085 = vmatpush1.msra.mxu0 %v4047
        %4086 = vmatprep.subr.mxu0 0.0
        %4087 = vmatpush1.msra.mxu0 %v4046
        %4088 = vmatprep.subr.mxu0 0.0
        %4089 = vmatpush1.msra.mxu0 %v4045
        %4090 = vmatprep.subr.mxu0 0.0
        %4091 = vmatpush1.msra.mxu0 %v4044
        %4092 = vmatprep.subr.mxu0 0.0
        %4093 = vmatpush1.msra.mxu0 %v4043
        %4094 = vmatprep.subr.mxu0 0.0
        %4095 = vmatpush2.msra.mxu0 0.0
        %4096 = vmatprep.subr.mxu0 0.0
        %4097 = vmatpush2.msra.mxu0 0.0
        %4098 = vmatprep.subr.mxu0 0.0
        %4099 = vmatpush2.msra.mxu0 0.0
        %4100 = vmatprep.subr.mxu0 0.0
        %4101 = vmatpush2.msra.mxu0 0.0
        %4102 = vmatprep.subr.mxu0 0.0
        %4103 = vmatpush2.msra.mxu0 0.0
        %4104 = vmatprep.subr.mxu0 0.0
        %4105 = vmatpush2.msra.mxu0 0.0
        %4106 = vmatprep.subr.mxu0 0.0
        %4107 = vmatpush2.msra.mxu0 0.0
        %4108 = vmatprep.subr.mxu0 0.0
        %4109 = vmatpush2.msra.mxu0 0.0
        %4110 = vmatprep.subr.mxu0 0.0
        %4111 = vmatpush2.msra.mxu0 0.0
        %4112 = vmatprep.subr.mxu0 0.0
        %4113 = vmatpush2.msra.mxu0 0.0
        %4114 = vmatprep.subr.mxu0 0.0
        %4115 = vmatpush2.msra.mxu0 0.0
        %4116 = vmatprep.subr.mxu0 0.0
        %4117 = vmatpush2.msra.mxu0 0.0
        %4118 = vmatprep.subr.mxu0 0.0
        %4119 = vmatpush2.msra.mxu0 0.0
        %4120 = vmatprep.subr.mxu0 0.0
        %4121 = vmatpush2.msra.mxu0 0.0
        %4122 = vmatprep.subr.mxu0 0.0
        %4123 = vmatpush2.msra.mxu0 0.0
        %4124 = vmatprep.subr.mxu0 0.0
        %4125 = vmatpush2.msra.mxu0 0.0
        %4126 = vmatprep.mubr.f32.mxu0 0.0
        %4127 = vmatmul.mubr.f32.gmra.mxu0 %v4060
        %v4128 = vpop.f32.mrf.mxu0
        %v4129 = vadd.f32 %v4057, %v4128
        %v4130 = vpop.f32.mrf.mxu0
        %4131 = vdwg.mxu0
        %v4132 = vadd.f32 %v3919, %v4129
        %v4133 = vld [vmem:[%s14] sm:$0x1]
        %v4134 = vld [vmem:[%s15] sm:$0x1]
        %v4135 = vsel %vm520, %v4132, 0.0
        %4136 = vadd.xlane.f32.xlu0 %v4135
        %v4137 = vpop.xlane.xlu0 %4136
        %v4138 = vmul.f32 %v4137, %v524
        %v4139 = vsub.f32 %v4132, %v4138
        %v4140 = vmul.f32 %v4139, %v4139
        %v4141 = vsel %vm520, %v4140, 0.0
        %4142 = vadd.xlane.f32.xlu0 %v4141
        %v4143 = vpop.xlane.xlu0 %4142
        %v4144 = vmul.f32 %v4143, %v524
        %v4145 = vadd.f32 %v4144, 1e-05
        %v4146 = vrsqrt.pop %v4145
        %v4147 = vmul.f32 %v4139, %v4146
        %v4149 = vlaneseq
        %v4150 = vshrl.u32 %v4149, 7
        %v4151 = vsub.s32 0, %v4150
        %v4152 = vrot.slane %v4133, %v4151
        %v4154 = vmul.f32 %v4147, %v4152
        %v4156 = vlaneseq
        %v4157 = vshrl.u32 %v4156, 7
        %v4158 = vsub.s32 0, %v4157
        %v4159 = vrot.slane %v4134, %v4158
        %v4161 = vadd.f32 %v4154, %v4159
        %4162 = vst.msk [vmem:[%s512] sm:$0xff] %vm520, %v4161
        %s4163 = sand.u32 %s379, 1
        %s4164 = scalar_lea.sflag [#allocation3], %s4163
        %s4165 = sand.u32 %s379, 1
        %s4166 = smul.addr %s4165, 8
        %s4167 = scalar_lea.vmem [#allocation2], %s4166
        // Predicated region
        $region85: #{tpu_custom_call.1} parent=83 // pred_check
          %p4168 = pneg %p389
        $region86: #{tpu_custom_call.1} parent=83 // pred_check_branch
          %4170 = sbr.rel (%p4168) target = $region88
        $region87: #{tpu_custom_call.1} parent=83 // pred_region
          %s4172 = ssub.s32 128, 128
          %4173 = vsyncadd %s4164, %s4172
          %s4174 = smul.addr %s30, 128
          %s4175 = scalar_lea.hbm %s16, %s4174
          %s4177 = sshll.u32 %s4167, 4
          %s4178 = int_to_ptr.vmem [resolvable:$true] %s4177
          %4180 = dma.vmem_to_hbm [thread:$0]  %s4178, 128, %s4175, %s4164
        $region88: #{tpu_custom_call.1} parent=83 // pred_fallthru
          _
      $region84: #{tpu_custom_call.1} parent=5 // pred_fallthru
        _
      %p4181 = scmp.le.s32.totalorder 2, %s25
      // Predicated region
      $region89: #{tpu_custom_call.1} parent=5 // pred_check
        %p4182 = pneg %p4181
      $region90: #{tpu_custom_call.1} parent=5 // pred_check_branch
        %4184 = sbr.rel (%p4182) target = $region92
      $region91: #{tpu_custom_call.1} parent=5 // pred_region
        %s4185 = ssub.s32 %s25, 2
        // Predicated region
        $region93: #{tpu_custom_call.1} parent=91 // pred_check
          %p4186 = pneg %p395
        $region94: #{tpu_custom_call.1} parent=91 // pred_check_branch
          %4188 = sbr.rel (%p4186) target = $region96
        $region95: #{tpu_custom_call.1} parent=91 // pred_region
          %s4189 = sand.u32 %s380, 1
          %s4190 = scalar_lea.sflag [#allocation3], %s4189
          %s4191 = sand.u32 %s380, 1
          %s4192 = smul.addr %s4191, 8
          %s4193 = scalar_lea.vmem [#allocation2], %s4192
          %4194 = dma.done %s4190, 128
        $region96: #{tpu_custom_call.1} parent=91 // pred_fallthru
          _
      $region92: #{tpu_custom_call.1} parent=5 // pred_fallthru
        _
    $region6: #{tpu_custom_call.1} parent=1 // loop_footer
      %s29 = sadd.s32 1, %s25
    $region7: #{tpu_custom_call.1} parent=1 // loop_footer_branch
      %24 = sbr.rel target = $region3
    $region8: #{tpu_custom_call.1} parent=1 // loop_exit
      _
    %4195 = vsyncpa [#allocation3], 1
    %s4196 = scalar_lea.sflag [#allocation3], 1
    %4197 = vsyncpa %s4196, 1

</llo_original>
